<compile_context>
chip_gen: v6e
topology: v6e:2x2x1
jax: 0.10.0
libtpu: 0.0.40
codegen_flags: <defaults>
</compile_context>

<pallas_src>
import functools
import math

import jax
import jax.numpy as jnp
from jax.experimental import pallas as pl
from jax.experimental.pallas import tpu as pltpu


def _layernorm(v, g, b, eps=1e-5):
    mu = jnp.mean(v, axis=-1, keepdims=True)
    c = v - mu
    var = jnp.mean(c * c, axis=-1, keepdims=True)
    return c * jax.lax.rsqrt(var + eps) * g + b


def encoder_block_kernel(
    x_ref,       # (TR, D)   f32    row block (TR = tb * S rows, whole batch elements)
    vec_ref,     # (8, D)    f32    packed [ln1_g, ln1_b, ln2_g, ln2_b, bo, b2, 0, 0]
    wqkv_ref,    # (D, 3D)   cdtype fused QKV projection (1/sqrt(hd) folded into Wq)
    wo_ref,      # (D, D)    cdtype attention output projection
    w1_ref,      # (D, dff)  cdtype
    b1_ref,      # (1, dff)  f32
    w2_ref,      # (dff, D)  cdtype
    o_ref,       # (TR, D)
    *, n_heads: int, seq_len: int, approx_recip: bool,
):
    f32 = jnp.float32
    x = x_ref[...].astype(f32)                       # (TR, D) f32
    TR, D = x.shape
    S = seq_len
    tb = TR // S                                     # batch elements in this block
    H = n_heads
    hd = D // H
    G = tb * H
    cdtype = wqkv_ref.dtype                          # MXU operand dtype (bf16 or f32)

    vecs = vec_ref[...]
    ln1_g, ln1_b = vecs[0:1, :], vecs[1:2, :]
    ln2_g, ln2_b = vecs[2:3, :], vecs[3:4, :]
    bo, b2 = vecs[4:5, :], vecs[5:6, :]

    # ---- LayerNorm 1 (pre-norm), f32 statistics ----
    h1 = _layernorm(x, ln1_g, ln1_b)                 # (TR, D) f32

    # ---- fused QKV projection: one wide matmul, result kept in compute dtype ----
    qkv = jnp.dot(h1.astype(cdtype), wqkv_ref[...],
                  preferred_element_type=cdtype)     # (TR, 3D)

    def to_heads(t):                                 # (TR, D) -> (G, S, hd)
        return (t.reshape(tb, S, H, hd)
                 .transpose(0, 2, 1, 3)
                 .reshape(G, S, hd))

    qh = to_heads(qkv[:, 0 * D:1 * D])
    kh = to_heads(qkv[:, 1 * D:2 * D])
    vh = to_heads(qkv[:, 2 * D:3 * D])

    # ---- batched attention over (batch-in-block, head): no cross-batch scores, no mask ----
    scores = jnp.einsum('gqe,gke->gqk', qh, kh,
                        preferred_element_type=f32)  # (G, S, S) f32 (scale already in Wq)
    m = jnp.max(scores, axis=-1, keepdims=True)
    p = jnp.exp(scores - m)                          # (G, S, S) f32
    denom = jnp.sum(p, axis=-1, keepdims=True)       # (G, S, 1) f32

    ctx = jnp.einsum('gqk,gke->gqe', p.astype(cdtype), vh,
                     preferred_element_type=f32)     # (G, S, hd) f32
    # normalize AFTER the PV matmul: hd-wide multiply instead of S-wide
    if approx_recip:
        ctx = ctx * pl.reciprocal(denom, approx=True)   # EUP reciprocal (bf16 fast path)
    else:
        ctx = ctx / denom                               # exact divide (f32 verification path)

    ctx2d = (ctx.reshape(tb, H, S, hd)
                .transpose(0, 2, 1, 3)
                .reshape(TR, D))                     # heads back into d_model layout
    attn = jnp.dot(ctx2d.astype(cdtype), wo_ref[...],
                   preferred_element_type=f32) + bo  # (TR, D) f32

    # residual 1
    x1 = x + attn

    # ---- LayerNorm 2 + FeedForward (relu), f32 stats / residuals ----
    h2 = _layernorm(x1, ln2_g, ln2_b)
    f = jnp.dot(h2.astype(cdtype), w1_ref[...], preferred_element_type=f32) + b1_ref[...]
    f = jnp.maximum(f, 0.0)
    f = jnp.dot(f.astype(cdtype), w2_ref[...], preferred_element_type=f32) + b2

    # residual 2
    o_ref[...] = (x1 + f).astype(o_ref.dtype)


def encoder_block(x, params, n_heads, *, compute_dtype=jnp.bfloat16, rows_target=512):
    B, S, D = x.shape
    H = n_heads
    hd = D // H
    dff = params["w1"].shape[1]
    scale = 1.0 / math.sqrt(hd)

    # ---- rows per grid step: whole batch elements; keep >=2 "parallel" blocks whenever
    #      B >= 2 so both v7x TensorCores get work (one extra ~0.35us step on v5e/v6e) ----
    tb = max(1, min(B, rows_target // max(S, 1)))
    if B >= 2:
        tb = max(1, min(tb, B // 2))
    while B % tb:
        tb -= 1
    TR = tb * S
    n_blocks = B // tb

    # ---- wrapper-side (trace-time, free) layout plumbing ----
    x2 = x.reshape(B * S, D)

    vecs = jnp.concatenate(
        [params["ln1_g"].reshape(1, D), params["ln1_b"].reshape(1, D),
         params["ln2_g"].reshape(1, D), params["ln2_b"].reshape(1, D),
         params["bo"].reshape(1, D), params["b2"].reshape(1, D),
         jnp.zeros((2, D), jnp.float32)], axis=0).astype(jnp.float32)

    # fused QKV weight; fold the 1/sqrt(hd) attention scale into Wq here (free)
    wqkv = jnp.concatenate([params["wq"] * scale, params["wk"], params["wv"]],
                           axis=1).astype(compute_dtype)          # (D, 3D)
    wo = params["wo"].astype(compute_dtype)                       # (D, D)
    w1 = params["w1"].astype(compute_dtype)                       # (D, dff)
    w2 = params["w2"].astype(compute_dtype)                       # (dff, D)
    b1 = params["b1"].reshape(1, dff).astype(jnp.float32)

    # ---- cost estimate / VMEM budget ----
    rows = B * S
    itemsize = jnp.dtype(compute_dtype).itemsize
    weight_bytes = (4 * D * D + 2 * D * dff) * itemsize
    flops = int(rows * (8 * D * D + 4 * D * dff + 4 * S * D))
    transcendentals = int(B * H * S * S + 2 * rows)
    bytes_accessed = int(2 * rows * D * 4 + weight_bytes + (8 * D + dff) * 4)

    try:
        vmem_cap = int(pltpu.get_tpu_info().vmem_capacity_bytes)
    except Exception:
        vmem_cap = 64 * 1024 * 1024            # assume v7x: most restrictive per-TC VMEM
    per_step = (4 * TR * D * 4                             # x + out, double-buffered, f32
                + 2 * weight_bytes + (8 * D + dff) * 8     # operands (worst case x2 buffers)
                + (tb * H * S * S + 4 * TR * D + TR * dff) * 4)   # in-kernel intermediates
    vmem_limit = int(min(int(0.75 * vmem_cap),             # leave headroom below physical
                         max(4 * 1024 * 1024, 4 * per_step)))

    kernel = functools.partial(
        encoder_block_kernel, n_heads=H, seq_len=S,
        approx_recip=(jnp.dtype(compute_dtype) != jnp.dtype(jnp.float32)))

    row_spec = pl.BlockSpec((TR, D), lambda i: (i, 0))

    def make_in_specs(single_buffer_consts):
        def const(shape):
            if single_buffer_consts:
                # grid-invariant operand: a single resident VMEM buffer is enough
                return pl.BlockSpec(shape, lambda i: (0, 0),
                                    pipeline_mode=pl.Buffered(1))
            return pl.BlockSpec(shape, lambda i: (0, 0))
        return [
            row_spec,                 # x rows
            const((8, D)),            # packed LN gains/biases + attn/ff output biases
            const((D, 3 * D)),        # fused Wqkv
            const((D, D)),            # Wo
            const((D, dff)),          # W1
            const((1, dff)),          # b1
            const((dff, D)),          # W2
        ]

    def run(single_buffer_consts):
        out = pl.pallas_call(
            kernel,
            out_shape=jax.ShapeDtypeStruct((B * S, D), x.dtype),
            grid_spec=pltpu.PrefetchScalarGridSpec(
                num_scalar_prefetch=0,
                grid=(n_blocks,),
                in_specs=make_in_specs(single_buffer_consts),
                out_specs=row_spec),
            compiler_params=pltpu.CompilerParams(
                dimension_semantics=("parallel",),
                vmem_limit_bytes=vmem_limit),
            cost_estimate=pl.CostEstimate(flops=flops,
                                          transcendentals=transcendentals,
                                          bytes_accessed=bytes_accessed),
        )(x2, vecs, wqkv, wo, w1, b1, w2)
        return jax.block_until_ready(out)

    try:
        out2 = run(single_buffer_consts=True)
    except Exception:
        # TODO(synk): pipeline_mode=pl.Buffered(1) not accepted by this jax/Mosaic build;
        # fall back to the default double-buffered pipeline for the constant operands.
        out2 = run(single_buffer_consts=False)

    return out2.reshape(B, S, D)


def reference_encoder_block(x, params, n_heads):
    """Pure-JAX reference for verification (matches the PyTorch EncoderBlock, norm_first)."""
    B, S, D = x.shape
    hd = D // n_heads
    scale = 1.0 / math.sqrt(hd)

    def ln(v, g, b):
        mu = jnp.mean(v, -1, keepdims=True)
        var = jnp.mean((v - mu) ** 2, -1, keepdims=True)
        return (v - mu) * jax.lax.rsqrt(var + 1e-5) * g[0] + b[0]

    h = ln(x, params["ln1_g"], params["ln1_b"])
    q = h @ params["wq"]
    k = h @ params["wk"]
    v = h @ params["wv"]
    q = q.reshape(B, S, n_heads, hd).transpose(0, 2, 1, 3)
    k = k.reshape(B, S, n_heads, hd).transpose(0, 2, 1, 3)
    v = v.reshape(B, S, n_heads, hd).transpose(0, 2, 1, 3)
    scores = jnp.einsum("bhqd,bhkd->bhqk", q, k) * scale
    p = jax.nn.softmax(scores, axis=-1)
    attn = jnp.einsum("bhqk,bhkd->bhqd", p, v).transpose(0, 2, 1, 3).reshape(B, S, D)
    attn = attn @ params["wo"] + params["bo"][0]
    x1 = x + attn
    h2 = ln(x1, params["ln2_g"], params["ln2_b"])
    f = jnp.maximum(h2 @ params["w1"] + params["b1"][0], 0.0)
    f = f @ params["w2"] + params["b2"][0]
    return x1 + f


def init_params(key, d_model, dff):
    ks = jax.random.split(key, 8)
    s = 0.05
    return {
        "ln1_g": jnp.ones((1, d_model), jnp.float32),
        "ln1_b": jnp.zeros((1, d_model), jnp.float32),
        "wq": s * jax.random.normal(ks[0], (d_model, d_model), jnp.float32),
        "wk": s * jax.random.normal(ks[1], (d_model, d_model), jnp.float32),
        "wv": s * jax.random.normal(ks[2], (d_model, d_model), jnp.float32),
        "wo": s * jax.random.normal(ks[3], (d_model, d_model), jnp.float32),
        "bo": s * jax.random.normal(ks[4], (1, d_model), jnp.float32),
        "ln2_g": jnp.ones((1, d_model), jnp.float32),
        "ln2_b": jnp.zeros((1, d_model), jnp.float32),
        "w1": s * jax.random.normal(ks[5], (d_model, dff), jnp.float32),
        "b1": s * jax.random.normal(ks[6], (1, dff), jnp.float32),
        "w2": s * jax.random.normal(ks[7], (dff, d_model), jnp.float32),
        "b2": jnp.zeros((1, d_model), jnp.float32),
    }


if __name__ == "__main__":
    B, S, D, H, DFF = 2, 8, 32, 4, 64

    key = jax.random.PRNGKey(0)
    kx, kp = jax.random.split(key)
    x = jax.random.normal(kx, (B, S, D), jnp.float32)
    params = init_params(kp, D, DFF)

    ref = reference_encoder_block(x, params, n_heads=H)

    # f32 MXU operands + exact softmax divide: tight correctness check
    out_f32 = jax.block_until_ready(encoder_block(x, params, H, compute_dtype=jnp.float32))
    assert out_f32.shape == (B, S, D)
    assert jnp.allclose(out_f32, ref, atol=2e-3, rtol=2e-3), "f32 mismatch vs reference"

    # bf16 MXU operands (default fast path on v6e/v7x): looser check
    out_bf16 = jax.block_until_ready(encoder_block(x, params, H))
    assert out_bf16.shape == (B, S, D)
    assert jnp.allclose(out_bf16, ref, atol=3e-2, rtol=3e-2), "bf16 mismatch vs reference"

    print("KERNEL_OK")
</pallas_src>

<mosaic_0001>
module attributes {stable_mosaic.version = 11 : i64} {
  func.func @encoder_block_kernel(%arg0: i32, %arg1: memref<8x32xf32, #tpu.memory_space<vmem>>, %arg2: memref<8x32xf32, #tpu.memory_space<vmem>>, %arg3: memref<32x96xf32, #tpu.memory_space<vmem>>, %arg4: memref<32x32xf32, #tpu.memory_space<vmem>>, %arg5: memref<32x64xf32, #tpu.memory_space<vmem>>, %arg6: memref<1x64xf32, #tpu.memory_space<vmem>>, %arg7: memref<64x32xf32, #tpu.memory_space<vmem>>, %arg8: memref<8x32xf32, #tpu.memory_space<vmem>>) attributes {dimension_semantics = [#tpu.dimension_semantics<parallel>], iteration_bounds = array<i64: 2>, scalar_prefetch = 0 : i64, scratch_operands = 0 : i64, tpu.core_type = #tpu.core_type<tc>, window_params = [{transform_indices = @transform_0, window_bounds = array<i64: 8, 32>}, {pipeline_mode = #tpu.pipeline_mode<synchronous>, transform_indices = @transform_1, window_bounds = array<i64: 8, 32>}, {pipeline_mode = #tpu.pipeline_mode<synchronous>, transform_indices = @transform_2, window_bounds = array<i64: 32, 96>}, {pipeline_mode = #tpu.pipeline_mode<synchronous>, transform_indices = @transform_3, window_bounds = array<i64: 32, 32>}, {pipeline_mode = #tpu.pipeline_mode<synchronous>, transform_indices = @transform_4, window_bounds = array<i64: 32, 64>}, {pipeline_mode = #tpu.pipeline_mode<synchronous>, transform_indices = @transform_5, window_bounds = array<i64: 1, 64>}, {pipeline_mode = #tpu.pipeline_mode<synchronous>, transform_indices = @transform_6, window_bounds = array<i64: 64, 32>}, {transform_indices = @transform_7, window_bounds = array<i64: 8, 32>}]} {
    %c0 = arith.constant 0 : index
    %c0_0 = arith.constant 0 : index
    %0 = vector.load %arg1[%c0, %c0_0] : memref<8x32xf32, #tpu.memory_space<vmem>>, vector<8x32xf32>
    %c0_1 = arith.constant 0 : index
    %c0_2 = arith.constant 0 : index
    %1 = vector.load %arg2[%c0_1, %c0_2] : memref<8x32xf32, #tpu.memory_space<vmem>>, vector<8x32xf32>
    %2 = vector.extract_strided_slice %1 {offsets = [0, 0], sizes = [1, 32], strides = [1, 1]} : vector<8x32xf32> to vector<1x32xf32>
    %3 = vector.extract_strided_slice %1 {offsets = [1, 0], sizes = [1, 32], strides = [1, 1]} : vector<8x32xf32> to vector<1x32xf32>
    %4 = vector.extract_strided_slice %1 {offsets = [2, 0], sizes = [1, 32], strides = [1, 1]} : vector<8x32xf32> to vector<1x32xf32>
    %5 = vector.extract_strided_slice %1 {offsets = [3, 0], sizes = [1, 32], strides = [1, 1]} : vector<8x32xf32> to vector<1x32xf32>
    %6 = vector.extract_strided_slice %1 {offsets = [4, 0], sizes = [1, 32], strides = [1, 1]} : vector<8x32xf32> to vector<1x32xf32>
    %7 = vector.extract_strided_slice %1 {offsets = [5, 0], sizes = [1, 32], strides = [1, 1]} : vector<8x32xf32> to vector<1x32xf32>
    %cst = arith.constant dense<0.000000e+00> : vector<8xf32>
    %8 = vector.multi_reduction <add>, %0, %cst [1] : vector<8x32xf32> to vector<8xf32>
    %9 = vector.shape_cast %8 : vector<8xf32> to vector<8x1xf32>
    %cst_3 = arith.constant 3.200000e+01 : f32
    %10 = vector.broadcast %cst_3 : f32 to vector<8x1xf32>
    %11 = arith.divf %9, %10 : vector<8x1xf32>
    %12 = vector.broadcast %11 : vector<8x1xf32> to vector<8x32xf32>
    %13 = arith.subf %0, %12 : vector<8x32xf32>
    %14 = arith.mulf %13, %13 : vector<8x32xf32>
    %cst_4 = arith.constant dense<0.000000e+00> : vector<8xf32>
    %15 = vector.multi_reduction <add>, %14, %cst_4 [1] : vector<8x32xf32> to vector<8xf32>
    %16 = vector.shape_cast %15 : vector<8xf32> to vector<8x1xf32>
    %cst_5 = arith.constant 3.200000e+01 : f32
    %17 = vector.broadcast %cst_5 : f32 to vector<8x1xf32>
    %18 = arith.divf %16, %17 : vector<8x1xf32>
    %cst_6 = arith.constant 9.99999974E-6 : f32
    %19 = vector.broadcast %cst_6 : f32 to vector<8x1xf32>
    %20 = arith.addf %18, %19 : vector<8x1xf32>
    %21 = math.rsqrt %20 : vector<8x1xf32>
    %22 = vector.broadcast %21 : vector<8x1xf32> to vector<8x32xf32>
    %23 = arith.mulf %13, %22 : vector<8x32xf32>
    %24 = vector.broadcast %2 : vector<1x32xf32> to vector<8x32xf32>
    %25 = arith.mulf %23, %24 : vector<8x32xf32>
    %26 = vector.broadcast %3 : vector<1x32xf32> to vector<8x32xf32>
    %27 = arith.addf %25, %26 : vector<8x32xf32>
    %c0_7 = arith.constant 0 : index
    %c0_8 = arith.constant 0 : index
    %28 = vector.load %arg3[%c0_7, %c0_8] : memref<32x96xf32, #tpu.memory_space<vmem>>, vector<32x96xf32>
    %cst_9 = arith.constant dense<0.000000e+00> : vector<8x96xf32>
    %29 = tpu.matmul %27, %28, %cst_9 {dimension_numbers = #tpu.dot_dimension_numbers<[1], [0], [0], [1], [0, 0, 1, 1], [], []>} : vector<8x32xf32>, vector<32x96xf32>, vector<8x96xf32> -> vector<8x96xf32>
    %30 = vector.extract_strided_slice %29 {offsets = [0, 0], sizes = [8, 32], strides = [1, 1]} : vector<8x96xf32> to vector<8x32xf32>
    %31 = vector.shape_cast %30 : vector<8x32xf32> to vector<1x8x4x8xf32>
    %32 = tpu.transpose %31, [0, 2, 1, 3] : vector<1x8x4x8xf32> -> vector<1x4x8x8xf32>
    %33 = vector.shape_cast %32 : vector<1x4x8x8xf32> to vector<4x8x8xf32>
    %34 = vector.extract_strided_slice %29 {offsets = [0, 32], sizes = [8, 32], strides = [1, 1]} : vector<8x96xf32> to vector<8x32xf32>
    %35 = vector.shape_cast %34 : vector<8x32xf32> to vector<1x8x4x8xf32>
    %36 = tpu.transpose %35, [0, 2, 1, 3] : vector<1x8x4x8xf32> -> vector<1x4x8x8xf32>
    %37 = vector.shape_cast %36 : vector<1x4x8x8xf32> to vector<4x8x8xf32>
    %38 = vector.extract_strided_slice %29 {offsets = [0, 64], sizes = [8, 32], strides = [1, 1]} : vector<8x96xf32> to vector<8x32xf32>
    %39 = vector.shape_cast %38 : vector<8x32xf32> to vector<1x8x4x8xf32>
    %40 = tpu.transpose %39, [0, 2, 1, 3] : vector<1x8x4x8xf32> -> vector<1x4x8x8xf32>
    %41 = vector.shape_cast %40 : vector<1x4x8x8xf32> to vector<4x8x8xf32>
    "tpu.trace_start"() <{level = 10 : i32, message = "gqe,gke->gqk"}> : () -> ()
    %cst_10 = arith.constant dense<0.000000e+00> : vector<4x8x8xf32>
    %42 = tpu.matmul %33, %37, %cst_10 {dimension_numbers = #tpu.dot_dimension_numbers<[2], [2], [1], [1], [0, 0, 0, 1, 1, 1], [0], [0]>} : vector<4x8x8xf32>, vector<4x8x8xf32>, vector<4x8x8xf32> -> vector<4x8x8xf32>
    "tpu.trace_stop"() : () -> ()
    %cst_11 = arith.constant dense<0xFF800000> : vector<4x8xf32>
    %43 = vector.multi_reduction <maximumf>, %42, %cst_11 [2] : vector<4x8x8xf32> to vector<4x8xf32>
    %44 = vector.shape_cast %43 : vector<4x8xf32> to vector<4x8x1xf32>
    %45 = vector.broadcast %44 : vector<4x8x1xf32> to vector<4x8x8xf32>
    %46 = arith.subf %42, %45 : vector<4x8x8xf32>
    %47 = math.exp %46 : vector<4x8x8xf32>
    %cst_12 = arith.constant dense<0.000000e+00> : vector<4x8xf32>
    %48 = vector.multi_reduction <add>, %47, %cst_12 [2] : vector<4x8x8xf32> to vector<4x8xf32>
    %49 = vector.shape_cast %48 : vector<4x8xf32> to vector<4x8x1xf32>
    "tpu.trace_start"() <{level = 10 : i32, message = "gqk,gke->gqe"}> : () -> ()
    %cst_13 = arith.constant dense<0.000000e+00> : vector<4x8x8xf32>
    %50 = tpu.matmul %47, %41, %cst_13 {dimension_numbers = #tpu.dot_dimension_numbers<[2], [1], [1], [2], [0, 0, 0, 1, 1, 2], [0], [0]>} : vector<4x8x8xf32>, vector<4x8x8xf32>, vector<4x8x8xf32> -> vector<4x8x8xf32>
    "tpu.trace_stop"() : () -> ()
    %51 = vector.broadcast %49 : vector<4x8x1xf32> to vector<4x8x8xf32>
    %52 = arith.divf %50, %51 : vector<4x8x8xf32>
    %53 = vector.shape_cast %52 : vector<4x8x8xf32> to vector<1x4x8x8xf32>
    %54 = tpu.transpose %53, [0, 2, 1, 3] : vector<1x4x8x8xf32> -> vector<1x8x4x8xf32>
    %55 = vector.shape_cast %54 : vector<1x8x4x8xf32> to vector<8x32xf32>
    %c0_14 = arith.constant 0 : index
    %c0_15 = arith.constant 0 : index
    %56 = vector.load %arg4[%c0_14, %c0_15] : memref<32x32xf32, #tpu.memory_space<vmem>>, vector<32x32xf32>
    %cst_16 = arith.constant dense<0.000000e+00> : vector<8x32xf32>
    %57 = tpu.matmul %55, %56, %cst_16 {dimension_numbers = #tpu.dot_dimension_numbers<[1], [0], [0], [1], [0, 0, 1, 1], [], []>} : vector<8x32xf32>, vector<32x32xf32>, vector<8x32xf32> -> vector<8x32xf32>
    %58 = vector.broadcast %6 : vector<1x32xf32> to vector<8x32xf32>
    %59 = arith.addf %57, %58 : vector<8x32xf32>
    %60 = arith.addf %0, %59 : vector<8x32xf32>
    %cst_17 = arith.constant dense<0.000000e+00> : vector<8xf32>
    %61 = vector.multi_reduction <add>, %60, %cst_17 [1] : vector<8x32xf32> to vector<8xf32>
    %62 = vector.shape_cast %61 : vector<8xf32> to vector<8x1xf32>
    %cst_18 = arith.constant 3.200000e+01 : f32
    %63 = vector.broadcast %cst_18 : f32 to vector<8x1xf32>
    %64 = arith.divf %62, %63 : vector<8x1xf32>
    %65 = vector.broadcast %64 : vector<8x1xf32> to vector<8x32xf32>
    %66 = arith.subf %60, %65 : vector<8x32xf32>
    %67 = arith.mulf %66, %66 : vector<8x32xf32>
    %cst_19 = arith.constant dense<0.000000e+00> : vector<8xf32>
    %68 = vector.multi_reduction <add>, %67, %cst_19 [1] : vector<8x32xf32> to vector<8xf32>
    %69 = vector.shape_cast %68 : vector<8xf32> to vector<8x1xf32>
    %cst_20 = arith.constant 3.200000e+01 : f32
    %70 = vector.broadcast %cst_20 : f32 to vector<8x1xf32>
    %71 = arith.divf %69, %70 : vector<8x1xf32>
    %cst_21 = arith.constant 9.99999974E-6 : f32
    %72 = vector.broadcast %cst_21 : f32 to vector<8x1xf32>
    %73 = arith.addf %71, %72 : vector<8x1xf32>
    %74 = math.rsqrt %73 : vector<8x1xf32>
    %75 = vector.broadcast %74 : vector<8x1xf32> to vector<8x32xf32>
    %76 = arith.mulf %66, %75 : vector<8x32xf32>
    %77 = vector.broadcast %4 : vector<1x32xf32> to vector<8x32xf32>
    %78 = arith.mulf %76, %77 : vector<8x32xf32>
    %79 = vector.broadcast %5 : vector<1x32xf32> to vector<8x32xf32>
    %80 = arith.addf %78, %79 : vector<8x32xf32>
    %c0_22 = arith.constant 0 : index
    %c0_23 = arith.constant 0 : index
    %81 = vector.load %arg5[%c0_22, %c0_23] : memref<32x64xf32, #tpu.memory_space<vmem>>, vector<32x64xf32>
    %cst_24 = arith.constant dense<0.000000e+00> : vector<8x64xf32>
    %82 = tpu.matmul %80, %81, %cst_24 {dimension_numbers = #tpu.dot_dimension_numbers<[1], [0], [0], [1], [0, 0, 1, 1], [], []>} : vector<8x32xf32>, vector<32x64xf32>, vector<8x64xf32> -> vector<8x64xf32>
    %c0_25 = arith.constant 0 : index
    %c0_26 = arith.constant 0 : index
    %83 = vector.load %arg6[%c0_25, %c0_26] : memref<1x64xf32, #tpu.memory_space<vmem>>, vector<1x64xf32>
    %84 = vector.broadcast %83 : vector<1x64xf32> to vector<8x64xf32>
    %85 = arith.addf %82, %84 : vector<8x64xf32>
    %cst_27 = arith.constant 0.000000e+00 : f32
    %86 = vector.broadcast %cst_27 : f32 to vector<8x64xf32>
    %87 = arith.maximumf %85, %86 : vector<8x64xf32>
    %c0_28 = arith.constant 0 : index
    %c0_29 = arith.constant 0 : index
    %88 = vector.load %arg7[%c0_28, %c0_29] : memref<64x32xf32, #tpu.memory_space<vmem>>, vector<64x32xf32>
    %cst_30 = arith.constant dense<0.000000e+00> : vector<8x32xf32>
    %89 = tpu.matmul %87, %88, %cst_30 {dimension_numbers = #tpu.dot_dimension_numbers<[1], [0], [0], [1], [0, 0, 1, 1], [], []>} : vector<8x64xf32>, vector<64x32xf32>, vector<8x32xf32> -> vector<8x32xf32>
    %90 = vector.broadcast %7 : vector<1x32xf32> to vector<8x32xf32>
    %91 = arith.addf %89, %90 : vector<8x32xf32>
    %92 = arith.addf %60, %91 : vector<8x32xf32>
    %c0_31 = arith.constant 0 : index
    %c0_32 = arith.constant 0 : index
    %93 = vector.load %arg8[%c0_31, %c0_32] : memref<8x32xf32, #tpu.memory_space<vmem>>, vector<8x32xf32>
    tpu.vector_store %arg8[%c0_31, %c0_32], %92 {strides = array<i32>} : memref<8x32xf32, #tpu.memory_space<vmem>>, vector<8x32xf32>,
    return
  }
  func.func @transform_0(%arg0: i32) -> (i32, i32) {
    %c0_i32 = arith.constant 0 : i32
    %c0_i32_0 = arith.constant 0 : i32
    return %arg0, %c0_i32 : i32, i32
  }
  func.func @transform_1(%arg0: i32) -> (i32, i32) {
    %c0_i32 = arith.constant 0 : i32
    %c0_i32_0 = arith.constant 0 : i32
    %c0_i32_1 = arith.constant 0 : i32
    return %c0_i32, %c0_i32_0 : i32, i32
  }
  func.func @transform_2(%arg0: i32) -> (i32, i32) {
    %c0_i32 = arith.constant 0 : i32
    %c0_i32_0 = arith.constant 0 : i32
    %c0_i32_1 = arith.constant 0 : i32
    return %c0_i32, %c0_i32_0 : i32, i32
  }
  func.func @transform_3(%arg0: i32) -> (i32, i32) {
    %c0_i32 = arith.constant 0 : i32
    %c0_i32_0 = arith.constant 0 : i32
    %c0_i32_1 = arith.constant 0 : i32
    return %c0_i32, %c0_i32_0 : i32, i32
  }
  func.func @transform_4(%arg0: i32) -> (i32, i32) {
    %c0_i32 = arith.constant 0 : i32
    %c0_i32_0 = arith.constant 0 : i32
    %c0_i32_1 = arith.constant 0 : i32
    return %c0_i32, %c0_i32_0 : i32, i32
  }
  func.func @transform_5(%arg0: i32) -> (i32, i32) {
    %c0_i32 = arith.constant 0 : i32
    %c0_i32_0 = arith.constant 0 : i32
    %c0_i32_1 = arith.constant 0 : i32
    return %c0_i32, %c0_i32_0 : i32, i32
  }
  func.func @transform_6(%arg0: i32) -> (i32, i32) {
    %c0_i32 = arith.constant 0 : i32
    %c0_i32_0 = arith.constant 0 : i32
    %c0_i32_1 = arith.constant 0 : i32
    return %c0_i32, %c0_i32_0 : i32, i32
  }
  func.func @transform_7(%arg0: i32) -> (i32, i32) {
    %c0_i32 = arith.constant 0 : i32
    %c0_i32_0 = arith.constant 0 : i32
    return %arg0, %c0_i32 : i32, i32
  }
}

module attributes {stable_mosaic.version = 11 : i64} {
  func.func @encoder_block_kernel(%arg0: i32, %arg1: memref<8x32xf32, #tpu.memory_space<vmem>>, %arg2: memref<8x32xf32, #tpu.memory_space<vmem>>, %arg3: memref<32x96xf32, #tpu.memory_space<vmem>>, %arg4: memref<32x32xf32, #tpu.memory_space<vmem>>, %arg5: memref<32x64xf32, #tpu.memory_space<vmem>>, %arg6: memref<1x64xf32, #tpu.memory_space<vmem>>, %arg7: memref<64x32xf32, #tpu.memory_space<vmem>>, %arg8: memref<8x32xf32, #tpu.memory_space<vmem>>) attributes {dimension_semantics = [#tpu.dimension_semantics<parallel>], iteration_bounds = array<i64: 2>, scalar_prefetch = 0 : i64, scratch_operands = 0 : i64, tpu.core_type = #tpu.core_type<tc>, window_params = [{transform_indices = @transform_0, window_bounds = array<i64: 8, 32>}, {pipeline_mode = #tpu.pipeline_mode<synchronous>, transform_indices = @transform_1, window_bounds = array<i64: 8, 32>}, {pipeline_mode = #tpu.pipeline_mode<synchronous>, transform_indices = @transform_2, window_bounds = array<i64: 32, 96>}, {pipeline_mode = #tpu.pipeline_mode<synchronous>, transform_indices = @transform_3, window_bounds = array<i64: 32, 32>}, {pipeline_mode = #tpu.pipeline_mode<synchronous>, transform_indices = @transform_4, window_bounds = array<i64: 32, 64>}, {pipeline_mode = #tpu.pipeline_mode<synchronous>, transform_indices = @transform_5, window_bounds = array<i64: 1, 64>}, {pipeline_mode = #tpu.pipeline_mode<synchronous>, transform_indices = @transform_6, window_bounds = array<i64: 64, 32>}, {transform_indices = @transform_7, window_bounds = array<i64: 8, 32>}]} {
    %c0 = arith.constant 0 : index
    %c0_0 = arith.constant 0 : index
    %0 = vector.load %arg1[%c0, %c0_0] : memref<8x32xf32, #tpu.memory_space<vmem>>, vector<8x32xf32>
    %c0_1 = arith.constant 0 : index
    %c0_2 = arith.constant 0 : index
    %1 = vector.load %arg2[%c0_1, %c0_2] : memref<8x32xf32, #tpu.memory_space<vmem>>, vector<8x32xf32>
    %2 = vector.extract_strided_slice %1 {offsets = [0, 0], sizes = [1, 32], strides = [1, 1]} : vector<8x32xf32> to vector<1x32xf32>
    %3 = vector.extract_strided_slice %1 {offsets = [1, 0], sizes = [1, 32], strides = [1, 1]} : vector<8x32xf32> to vector<1x32xf32>
    %4 = vector.extract_strided_slice %1 {offsets = [2, 0], sizes = [1, 32], strides = [1, 1]} : vector<8x32xf32> to vector<1x32xf32>
    %5 = vector.extract_strided_slice %1 {offsets = [3, 0], sizes = [1, 32], strides = [1, 1]} : vector<8x32xf32> to vector<1x32xf32>
    %6 = vector.extract_strided_slice %1 {offsets = [4, 0], sizes = [1, 32], strides = [1, 1]} : vector<8x32xf32> to vector<1x32xf32>
    %7 = vector.extract_strided_slice %1 {offsets = [5, 0], sizes = [1, 32], strides = [1, 1]} : vector<8x32xf32> to vector<1x32xf32>
    %cst = arith.constant dense<0.000000e+00> : vector<8xf32>
    %8 = vector.multi_reduction <add>, %0, %cst [1] : vector<8x32xf32> to vector<8xf32>
    %9 = vector.shape_cast %8 : vector<8xf32> to vector<8x1xf32>
    %cst_3 = arith.constant 3.200000e+01 : f32
    %10 = vector.broadcast %cst_3 : f32 to vector<8x1xf32>
    %11 = arith.divf %9, %10 : vector<8x1xf32>
    %12 = vector.broadcast %11 : vector<8x1xf32> to vector<8x32xf32>
    %13 = arith.subf %0, %12 : vector<8x32xf32>
    %14 = arith.mulf %13, %13 : vector<8x32xf32>
    %cst_4 = arith.constant dense<0.000000e+00> : vector<8xf32>
    %15 = vector.multi_reduction <add>, %14, %cst_4 [1] : vector<8x32xf32> to vector<8xf32>
    %16 = vector.shape_cast %15 : vector<8xf32> to vector<8x1xf32>
    %cst_5 = arith.constant 3.200000e+01 : f32
    %17 = vector.broadcast %cst_5 : f32 to vector<8x1xf32>
    %18 = arith.divf %16, %17 : vector<8x1xf32>
    %cst_6 = arith.constant 9.99999974E-6 : f32
    %19 = vector.broadcast %cst_6 : f32 to vector<8x1xf32>
    %20 = arith.addf %18, %19 : vector<8x1xf32>
    %21 = math.rsqrt %20 : vector<8x1xf32>
    %22 = vector.broadcast %21 : vector<8x1xf32> to vector<8x32xf32>
    %23 = arith.mulf %13, %22 : vector<8x32xf32>
    %24 = vector.broadcast %2 : vector<1x32xf32> to vector<8x32xf32>
    %25 = arith.mulf %23, %24 : vector<8x32xf32>
    %26 = vector.broadcast %3 : vector<1x32xf32> to vector<8x32xf32>
    %27 = arith.addf %25, %26 : vector<8x32xf32>
    %c0_7 = arith.constant 0 : index
    %c0_8 = arith.constant 0 : index
    %28 = vector.load %arg3[%c0_7, %c0_8] : memref<32x96xf32, #tpu.memory_space<vmem>>, vector<32x96xf32>
    %cst_9 = arith.constant dense<0.000000e+00> : vector<8x96xf32>
    %29 = tpu.matmul %27, %28, %cst_9 {dimension_numbers = #tpu.dot_dimension_numbers<[1], [0], [0], [1], [0, 0, 1, 1], [], []>} : vector<8x32xf32>, vector<32x96xf32>, vector<8x96xf32> -> vector<8x96xf32>
    %30 = vector.extract_strided_slice %29 {offsets = [0, 0], sizes = [8, 32], strides = [1, 1]} : vector<8x96xf32> to vector<8x32xf32>
    %31 = vector.shape_cast %30 : vector<8x32xf32> to vector<1x8x4x8xf32>
    %32 = tpu.transpose %31, [0, 2, 1, 3] : vector<1x8x4x8xf32> -> vector<1x4x8x8xf32>
    %33 = vector.shape_cast %32 : vector<1x4x8x8xf32> to vector<4x8x8xf32>
    %34 = vector.extract_strided_slice %29 {offsets = [0, 32], sizes = [8, 32], strides = [1, 1]} : vector<8x96xf32> to vector<8x32xf32>
    %35 = vector.shape_cast %34 : vector<8x32xf32> to vector<1x8x4x8xf32>
    %36 = tpu.transpose %35, [0, 2, 1, 3] : vector<1x8x4x8xf32> -> vector<1x4x8x8xf32>
    %37 = vector.shape_cast %36 : vector<1x4x8x8xf32> to vector<4x8x8xf32>
    %38 = vector.extract_strided_slice %29 {offsets = [0, 64], sizes = [8, 32], strides = [1, 1]} : vector<8x96xf32> to vector<8x32xf32>
    %39 = vector.shape_cast %38 : vector<8x32xf32> to vector<1x8x4x8xf32>
    %40 = tpu.transpose %39, [0, 2, 1, 3] : vector<1x8x4x8xf32> -> vector<1x4x8x8xf32>
    %41 = vector.shape_cast %40 : vector<1x4x8x8xf32> to vector<4x8x8xf32>
    "tpu.trace_start"() <{level = 10 : i32, message = "gqe,gke->gqk"}> : () -> ()
    %cst_10 = arith.constant dense<0.000000e+00> : vector<4x8x8xf32>
    %42 = tpu.matmul %33, %37, %cst_10 {dimension_numbers = #tpu.dot_dimension_numbers<[2], [2], [1], [1], [0, 0, 0, 1, 1, 1], [0], [0]>} : vector<4x8x8xf32>, vector<4x8x8xf32>, vector<4x8x8xf32> -> vector<4x8x8xf32>
    "tpu.trace_stop"() : () -> ()
    %cst_11 = arith.constant dense<0xFF800000> : vector<4x8xf32>
    %43 = vector.multi_reduction <maximumf>, %42, %cst_11 [2] : vector<4x8x8xf32> to vector<4x8xf32>
    %44 = vector.shape_cast %43 : vector<4x8xf32> to vector<4x8x1xf32>
    %45 = vector.broadcast %44 : vector<4x8x1xf32> to vector<4x8x8xf32>
    %46 = arith.subf %42, %45 : vector<4x8x8xf32>
    %47 = math.exp %46 : vector<4x8x8xf32>
    %cst_12 = arith.constant dense<0.000000e+00> : vector<4x8xf32>
    %48 = vector.multi_reduction <add>, %47, %cst_12 [2] : vector<4x8x8xf32> to vector<4x8xf32>
    %49 = vector.shape_cast %48 : vector<4x8xf32> to vector<4x8x1xf32>
    "tpu.trace_start"() <{level = 10 : i32, message = "gqk,gke->gqe"}> : () -> ()
    %cst_13 = arith.constant dense<0.000000e+00> : vector<4x8x8xf32>
    %50 = tpu.matmul %47, %41, %cst_13 {dimension_numbers = #tpu.dot_dimension_numbers<[2], [1], [1], [2], [0, 0, 0, 1, 1, 2], [0], [0]>} : vector<4x8x8xf32>, vector<4x8x8xf32>, vector<4x8x8xf32> -> vector<4x8x8xf32>
    "tpu.trace_stop"() : () -> ()
    %51 = vector.broadcast %49 : vector<4x8x1xf32> to vector<4x8x8xf32>
    %52 = arith.divf %50, %51 : vector<4x8x8xf32>
    %53 = vector.shape_cast %52 : vector<4x8x8xf32> to vector<1x4x8x8xf32>
    %54 = tpu.transpose %53, [0, 2, 1, 3] : vector<1x4x8x8xf32> -> vector<1x8x4x8xf32>
    %55 = vector.shape_cast %54 : vector<1x8x4x8xf32> to vector<8x32xf32>
    %c0_14 = arith.constant 0 : index
    %c0_15 = arith.constant 0 : index
    %56 = vector.load %arg4[%c0_14, %c0_15] : memref<32x32xf32, #tpu.memory_space<vmem>>, vector<32x32xf32>
    %cst_16 = arith.constant dense<0.000000e+00> : vector<8x32xf32>
    %57 = tpu.matmul %55, %56, %cst_16 {dimension_numbers = #tpu.dot_dimension_numbers<[1], [0], [0], [1], [0, 0, 1, 1], [], []>} : vector<8x32xf32>, vector<32x32xf32>, vector<8x32xf32> -> vector<8x32xf32>
    %58 = vector.broadcast %6 : vector<1x32xf32> to vector<8x32xf32>
    %59 = arith.addf %57, %58 : vector<8x32xf32>
    %60 = arith.addf %0, %59 : vector<8x32xf32>
    %cst_17 = arith.constant dense<0.000000e+00> : vector<8xf32>
    %61 = vector.multi_reduction <add>, %60, %cst_17 [1] : vector<8x32xf32> to vector<8xf32>
    %62 = vector.shape_cast %61 : vector<8xf32> to vector<8x1xf32>
    %cst_18 = arith.constant 3.200000e+01 : f32
    %63 = vector.broadcast %cst_18 : f32 to vector<8x1xf32>
    %64 = arith.divf %62, %63 : vector<8x1xf32>
    %65 = vector.broadcast %64 : vector<8x1xf32> to vector<8x32xf32>
    %66 = arith.subf %60, %65 : vector<8x32xf32>
    %67 = arith.mulf %66, %66 : vector<8x32xf32>
    %cst_19 = arith.constant dense<0.000000e+00> : vector<8xf32>
    %68 = vector.multi_reduction <add>, %67, %cst_19 [1] : vector<8x32xf32> to vector<8xf32>
    %69 = vector.shape_cast %68 : vector<8xf32> to vector<8x1xf32>
    %cst_20 = arith.constant 3.200000e+01 : f32
    %70 = vector.broadcast %cst_20 : f32 to vector<8x1xf32>
    %71 = arith.divf %69, %70 : vector<8x1xf32>
    %cst_21 = arith.constant 9.99999974E-6 : f32
    %72 = vector.broadcast %cst_21 : f32 to vector<8x1xf32>
    %73 = arith.addf %71, %72 : vector<8x1xf32>
    %74 = math.rsqrt %73 : vector<8x1xf32>
    %75 = vector.broadcast %74 : vector<8x1xf32> to vector<8x32xf32>
    %76 = arith.mulf %66, %75 : vector<8x32xf32>
    %77 = vector.broadcast %4 : vector<1x32xf32> to vector<8x32xf32>
    %78 = arith.mulf %76, %77 : vector<8x32xf32>
    %79 = vector.broadcast %5 : vector<1x32xf32> to vector<8x32xf32>
    %80 = arith.addf %78, %79 : vector<8x32xf32>
    %c0_22 = arith.constant 0 : index
    %c0_23 = arith.constant 0 : index
    %81 = vector.load %arg5[%c0_22, %c0_23] : memref<32x64xf32, #tpu.memory_space<vmem>>, vector<32x64xf32>
    %cst_24 = arith.constant dense<0.000000e+00> : vector<8x64xf32>
    %82 = tpu.matmul %80, %81, %cst_24 {dimension_numbers = #tpu.dot_dimension_numbers<[1], [0], [0], [1], [0, 0, 1, 1], [], []>} : vector<8x32xf32>, vector<32x64xf32>, vector<8x64xf32> -> vector<8x64xf32>
    %c0_25 = arith.constant 0 : index
    %c0_26 = arith.constant 0 : index
    %83 = vector.load %arg6[%c0_25, %c0_26] : memref<1x64xf32, #tpu.memory_space<vmem>>, vector<1x64xf32>
    %84 = vector.broadcast %83 : vector<1x64xf32> to vector<8x64xf32>
    %85 = arith.addf %82, %84 : vector<8x64xf32>
    %cst_27 = arith.constant 0.000000e+00 : f32
    %86 = vector.broadcast %cst_27 : f32 to vector<8x64xf32>
    %87 = arith.maximumf %85, %86 : vector<8x64xf32>
    %c0_28 = arith.constant 0 : index
    %c0_29 = arith.constant 0 : index
    %88 = vector.load %arg7[%c0_28, %c0_29] : memref<64x32xf32, #tpu.memory_space<vmem>>, vector<64x32xf32>
    %cst_30 = arith.constant dense<0.000000e+00> : vector<8x32xf32>
    %89 = tpu.matmul %87, %88, %cst_30 {dimension_numbers = #tpu.dot_dimension_numbers<[1], [0], [0], [1], [0, 0, 1, 1], [], []>} : vector<8x64xf32>, vector<64x32xf32>, vector<8x32xf32> -> vector<8x32xf32>
    %90 = vector.broadcast %7 : vector<1x32xf32> to vector<8x32xf32>
    %91 = arith.addf %89, %90 : vector<8x32xf32>
    %92 = arith.addf %60, %91 : vector<8x32xf32>
    %c0_31 = arith.constant 0 : index
    %c0_32 = arith.constant 0 : index
    %93 = vector.load %arg8[%c0_31, %c0_32] : memref<8x32xf32, #tpu.memory_space<vmem>>, vector<8x32xf32>
    tpu.vector_store %arg8[%c0_31, %c0_32], %92 {strides = array<i32>} : memref<8x32xf32, #tpu.memory_space<vmem>>, vector<8x32xf32>,
    return
  }
  func.func @transform_0(%arg0: i32) -> (i32, i32) {
    %c0_i32 = arith.constant 0 : i32
    %c0_i32_0 = arith.constant 0 : i32
    return %arg0, %c0_i32 : i32, i32
  }
  func.func @transform_1(%arg0: i32) -> (i32, i32) {
    %c0_i32 = arith.constant 0 : i32
    %c0_i32_0 = arith.constant 0 : i32
    %c0_i32_1 = arith.constant 0 : i32
    return %c0_i32, %c0_i32_0 : i32, i32
  }
  func.func @transform_2(%arg0: i32) -> (i32, i32) {
    %c0_i32 = arith.constant 0 : i32
    %c0_i32_0 = arith.constant 0 : i32
    %c0_i32_1 = arith.constant 0 : i32
    return %c0_i32, %c0_i32_0 : i32, i32
  }
  func.func @transform_3(%arg0: i32) -> (i32, i32) {
    %c0_i32 = arith.constant 0 : i32
    %c0_i32_0 = arith.constant 0 : i32
    %c0_i32_1 = arith.constant 0 : i32
    return %c0_i32, %c0_i32_0 : i32, i32
  }
  func.func @transform_4(%arg0: i32) -> (i32, i32) {
    %c0_i32 = arith.constant 0 : i32
    %c0_i32_0 = arith.constant 0 : i32
    %c0_i32_1 = arith.constant 0 : i32
    return %c0_i32, %c0_i32_0 : i32, i32
  }
  func.func @transform_5(%arg0: i32) -> (i32, i32) {
    %c0_i32 = arith.constant 0 : i32
    %c0_i32_0 = arith.constant 0 : i32
    %c0_i32_1 = arith.constant 0 : i32
    return %c0_i32, %c0_i32_0 : i32, i32
  }
  func.func @transform_6(%arg0: i32) -> (i32, i32) {
    %c0_i32 = arith.constant 0 : i32
    %c0_i32_0 = arith.constant 0 : i32
    %c0_i32_1 = arith.constant 0 : i32
    return %c0_i32, %c0_i32_0 : i32, i32
  }
  func.func @transform_7(%arg0: i32) -> (i32, i32) {
    %c0_i32 = arith.constant 0 : i32
    %c0_i32_0 = arith.constant 0 : i32
    return %arg0, %c0_i32 : i32, i32
  }
}

</mosaic_0001>

<llo_original>
// kernel: tpu_custom_call.1
$region0: #{tpu_custom_call.1}
  #allocation0 [shape = 'u32[]', space=smem, size = 0x4, offset = 0x4, fixed_abs, tag = 'smem constant byte address 0x4 - core index']
  #allocation1 [shape = 'u32[144,128]{1,0:T(1,128)}', space=vmem, size = 0x12000, scoped, tag = 'internal scratch']
  %s0 = inlined_call_operand.hbm [shape: f32[16,32], index: 0, kind: input, shape index: {}]
  %s1 = inlined_call_operand.hbm [shape: f32[8,32], index: 1, kind: input, shape index: {}]
  %s2 = inlined_call_operand.vmem [shape: f32[32,96], index: 2, kind: input, shape index: {}]
  %s3 = inlined_call_operand.vmem [shape: f32[32,32], index: 3, kind: input, shape index: {}]
  %s4 = inlined_call_operand.vmem [shape: f32[32,64], index: 4, kind: input, shape index: {}]
  %s5 = inlined_call_operand.vmem [shape: f32[1,64], index: 5, kind: input, shape index: {}]
  %s6 = inlined_call_operand.vmem [shape: f32[64,32], index: 6, kind: input, shape index: {}]
  %s7 = inlined_call_operand.hbm [shape: f32[16,32], index: 7, kind: output, shape index: {}]
  %s8 = sld [smem:[#allocation0]]
  $region69: #{tpu_custom_call.1} parent=0
    _
  %s10 = ssub.s32 1, %s8
  %s11 = scalar_select 0, %s10, %s8
  $region1: #{tpu_custom_call.1} parent=0
    #allocation2 [shape = 'u8[8192]{0}', space=vmem, size = 0x2000, scoped, tag = 'input window, operand 0']
    #allocation3 [shape = 's32[2]{0}', space=sflag, size = 0x8, scoped, tag = 'scoped memory for tpu_custom_call.1']
    #allocation4 [shape = 's32[2]{0}', space=sflag, size = 0x8, scoped, tag = 'scoped memory for tpu_custom_call.1']
    #allocation5 [shape = 'u8[4096]{0}', space=vmem, size = 0x1000, scoped, tag = 'input window, operand 1, single buffered']
    #allocation6 [shape = 's32[1]{0}', space=sflag, size = 0x4, scoped, tag = 'scoped memory for tpu_custom_call.1']
    #allocation7 [shape = 'u8[8192]{0}', space=vmem, size = 0x2000, scoped, tag = 'output window, operand 0']
    %12 = vsyncpa [#allocation3], 0
    %s13 = scalar_lea.sflag [#allocation3], 1
    %14 = vsyncpa %s13, 0
    %15 = vsyncpa [#allocation6], 0
    %16 = vsyncpa [#allocation4], 0
    %s17 = scalar_lea.sflag [#allocation4], 1
    %18 = vsyncpa %s17, 0
    loop: start=0, step=1, limit=4
    $region2: #{tpu_custom_call.1} parent=1 // loop_pre_header
      _
    $region3: #{tpu_custom_call.1} parent=1 // loop_header
      %s20 = sphi 0, %s24
      %p21 = scmp.ge.s32.totalorder %s20, 4
      %s30 = sphi 0, %s32
      %s33 = sphi 0, %s30
      %s34 = sphi 0, %s33
      %s50 = sphi 0, %s34
      %s54 = sphi 0, %s54
      %s56 = sphi 0, %s54
      %s57 = sphi 0, %s56
      %s71 = sphi 0, %s57
      %s75 = sphi 0, %s75
      %s77 = sphi 0, %s75
      %s78 = sphi 0, %s77
      %s92 = sphi 0, %s78
      %s96 = sphi 0, %s96
      %s98 = sphi 0, %s96
      %s99 = sphi 0, %s98
      %s113 = sphi 0, %s99
      %s117 = sphi 0, %s117
      %s119 = sphi 0, %s117
      %s120 = sphi 0, %s119
      %s134 = sphi 0, %s120
      %s138 = sphi 0, %s138
      %s140 = sphi 0, %s138
      %s141 = sphi 0, %s140
      %s155 = sphi 0, %s141
      %s159 = sphi 0, %s159
      %s161 = sphi 0, %s159
      %s162 = sphi 0, %s161
      %s176 = sphi 0, %s162
      %s182 = sphi 0, %s184
      %s185 = sphi 0, %s182
      %s186 = sphi 0, %s185
      %s202 = sphi 0, %s186
    $region4: #{tpu_custom_call.1} parent=1 // loop_header_branch
      %23 = sbr.rel (%p21) target = $region8
    $region5: #{tpu_custom_call.1} parent=1 // loop_body
      %s25 = ssub.s32 %s20, 1
      %s26 = ssub.s32 %s20, 2
      %s27 = sadd.s32 %s20, 1
      %s28 = ssub.s32 %s20, %s27
      %p29 = scmp.eq.s32.totalorder %s28, 0
      %s31 = sadd.s32 %s30, 1
      %s32 = scalar_select %p29, %s30, %s31
      %p35 = pneg %p29
      %p36 = scmp.eq.s32.totalorder %s20, 1
      %p37 = por %p35, %p36
      %p38 = scmp.ne.s32.totalorder %s30, %s33
      %p39 = scmp.eq.s32.totalorder %s20, 0
      %p40 = por %p38, %p39
      %p41 = scmp.ne.s32.totalorder %s30, %s33
      %p42 = scmp.eq.s32.totalorder %s25, 1
      %p43 = por %p41, %p42
      %p44 = scmp.ne.s32.totalorder %s33, %s34
      %p45 = scmp.eq.s32.totalorder %s25, 0
      %p46 = por %p44, %p45
      %p47 = scmp.ne.s32.totalorder %s33, %s34
      %p48 = scmp.eq.s32.totalorder %s26, 1
      %p49 = por %p47, %p48
      %p51 = scmp.ne.s32.totalorder %s34, %s50
      %p52 = scmp.eq.s32.totalorder %s26, 0
      %p53 = por %p51, %p52
      %s55 = sadd.s32 %s54, 1
      %p58 = scmp.eq.s32.totalorder %s20, 1
      %p59 = scmp.ne.s32.totalorder %s54, %s56
      %p60 = scmp.eq.s32.totalorder %s20, 0
      %p61 = por %p59, %p60
      %p62 = scmp.ne.s32.totalorder %s54, %s56
      %p63 = scmp.eq.s32.totalorder %s25, 1
      %p64 = por %p62, %p63
      %p65 = scmp.ne.s32.totalorder %s56, %s57
      %p66 = scmp.eq.s32.totalorder %s25, 0
      %p67 = por %p65, %p66
      %p68 = scmp.ne.s32.totalorder %s56, %s57
      %p69 = scmp.eq.s32.totalorder %s26, 1
      %p70 = por %p68, %p69
      %p72 = scmp.ne.s32.totalorder %s57, %s71
      %p73 = scmp.eq.s32.totalorder %s26, 0
      %p74 = por %p72, %p73
      %s76 = sadd.s32 %s75, 1
      %p79 = scmp.eq.s32.totalorder %s20, 1
      %p80 = scmp.ne.s32.totalorder %s75, %s77
      %p81 = scmp.eq.s32.totalorder %s20, 0
      %p82 = por %p80, %p81
      %p83 = scmp.ne.s32.totalorder %s75, %s77
      %p84 = scmp.eq.s32.totalorder %s25, 1
      %p85 = por %p83, %p84
      %p86 = scmp.ne.s32.totalorder %s77, %s78
      %p87 = scmp.eq.s32.totalorder %s25, 0
      %p88 = por %p86, %p87
      %p89 = scmp.ne.s32.totalorder %s77, %s78
      %p90 = scmp.eq.s32.totalorder %s26, 1
      %p91 = por %p89, %p90
      %p93 = scmp.ne.s32.totalorder %s78, %s92
      %p94 = scmp.eq.s32.totalorder %s26, 0
      %p95 = por %p93, %p94
      %s97 = sadd.s32 %s96, 1
      %p100 = scmp.eq.s32.totalorder %s20, 1
      %p101 = scmp.ne.s32.totalorder %s96, %s98
      %p102 = scmp.eq.s32.totalorder %s20, 0
      %p103 = por %p101, %p102
      %p104 = scmp.ne.s32.totalorder %s96, %s98
      %p105 = scmp.eq.s32.totalorder %s25, 1
      %p106 = por %p104, %p105
      %p107 = scmp.ne.s32.totalorder %s98, %s99
      %p108 = scmp.eq.s32.totalorder %s25, 0
      %p109 = por %p107, %p108
      %p110 = scmp.ne.s32.totalorder %s98, %s99
      %p111 = scmp.eq.s32.totalorder %s26, 1
      %p112 = por %p110, %p111
      %p114 = scmp.ne.s32.totalorder %s99, %s113
      %p115 = scmp.eq.s32.totalorder %s26, 0
      %p116 = por %p114, %p115
      %s118 = sadd.s32 %s117, 1
      %p121 = scmp.eq.s32.totalorder %s20, 1
      %p122 = scmp.ne.s32.totalorder %s117, %s119
      %p123 = scmp.eq.s32.totalorder %s20, 0
      %p124 = por %p122, %p123
      %p125 = scmp.ne.s32.totalorder %s117, %s119
      %p126 = scmp.eq.s32.totalorder %s25, 1
      %p127 = por %p125, %p126
      %p128 = scmp.ne.s32.totalorder %s119, %s120
      %p129 = scmp.eq.s32.totalorder %s25, 0
      %p130 = por %p128, %p129
      %p131 = scmp.ne.s32.totalorder %s119, %s120
      %p132 = scmp.eq.s32.totalorder %s26, 1
      %p133 = por %p131, %p132
      %p135 = scmp.ne.s32.totalorder %s120, %s134
      %p136 = scmp.eq.s32.totalorder %s26, 0
      %p137 = por %p135, %p136
      %s139 = sadd.s32 %s138, 1
      %p142 = scmp.eq.s32.totalorder %s20, 1
      %p143 = scmp.ne.s32.totalorder %s138, %s140
      %p144 = scmp.eq.s32.totalorder %s20, 0
      %p145 = por %p143, %p144
      %p146 = scmp.ne.s32.totalorder %s138, %s140
      %p147 = scmp.eq.s32.totalorder %s25, 1
      %p148 = por %p146, %p147
      %p149 = scmp.ne.s32.totalorder %s140, %s141
      %p150 = scmp.eq.s32.totalorder %s25, 0
      %p151 = por %p149, %p150
      %p152 = scmp.ne.s32.totalorder %s140, %s141
      %p153 = scmp.eq.s32.totalorder %s26, 1
      %p154 = por %p152, %p153
      %p156 = scmp.ne.s32.totalorder %s141, %s155
      %p157 = scmp.eq.s32.totalorder %s26, 0
      %p158 = por %p156, %p157
      %s160 = sadd.s32 %s159, 1
      %p163 = scmp.eq.s32.totalorder %s20, 1
      %p164 = scmp.ne.s32.totalorder %s159, %s161
      %p165 = scmp.eq.s32.totalorder %s20, 0
      %p166 = por %p164, %p165
      %p167 = scmp.ne.s32.totalorder %s159, %s161
      %p168 = scmp.eq.s32.totalorder %s25, 1
      %p169 = por %p167, %p168
      %p170 = scmp.ne.s32.totalorder %s161, %s162
      %p171 = scmp.eq.s32.totalorder %s25, 0
      %p172 = por %p170, %p171
      %p173 = scmp.ne.s32.totalorder %s161, %s162
      %p174 = scmp.eq.s32.totalorder %s26, 1
      %p175 = por %p173, %p174
      %p177 = scmp.ne.s32.totalorder %s162, %s176
      %p178 = scmp.eq.s32.totalorder %s26, 0
      %p179 = por %p177, %p178
      %s180 = ssub.s32 %s20, %s27
      %p181 = scmp.eq.s32.totalorder %s180, 0
      %s183 = sadd.s32 %s182, 1
      %s184 = scalar_select %p181, %s182, %s183
      %p187 = pneg %p181
      %p188 = scmp.eq.s32.totalorder %s20, 1
      %p189 = por %p187, %p188
      %p190 = scmp.ne.s32.totalorder %s182, %s185
      %p191 = scmp.eq.s32.totalorder %s20, 0
      %p192 = por %p190, %p191
      %p193 = scmp.ne.s32.totalorder %s182, %s185
      %p194 = scmp.eq.s32.totalorder %s25, 1
      %p195 = por %p193, %p194
      %p196 = scmp.ne.s32.totalorder %s185, %s186
      %p197 = scmp.eq.s32.totalorder %s25, 0
      %p198 = por %p196, %p197
      %p199 = scmp.ne.s32.totalorder %s185, %s186
      %p200 = scmp.eq.s32.totalorder %s26, 1
      %p201 = por %p199, %p200
      %p203 = scmp.ne.s32.totalorder %s186, %s202
      %p204 = scmp.eq.s32.totalorder %s26, 0
      %p205 = por %p203, %p204
      %p206 = scmp.le.s32.totalorder 1, %s20
      %p207 = scmp.lt.s32.totalorder %s20, 3
      %p208 = pnand %p206, %p207
      %p209 = pneg %p208
      // Predicated region
      $region9: #{tpu_custom_call.1} parent=5 // pred_check
        _
      $region10: #{tpu_custom_call.1} parent=5 // pred_check_branch
        %211 = sbr.rel (%p208) target = $region12
      $region11: #{tpu_custom_call.1} parent=5 // pred_region
        %s212 = ssub.s32 %s20, 1
        // Predicated region
        $region13: #{tpu_custom_call.1} parent=11 // pred_check
          %p213 = pneg %p67
        $region14: #{tpu_custom_call.1} parent=11 // pred_check_branch
          %215 = sbr.rel (%p213) target = $region16
        $region15: #{tpu_custom_call.1} parent=11 // pred_region
          %s217 = ssub.s32 128, 128
          %218 = vsyncadd [#allocation6], %s217
          %s220 = sshll.u32 [#allocation5], 4
          %s221 = int_to_ptr.vmem [resolvable:$true] %s220
          %223 = dma.hbm_to_vmem [thread:$0]  %s1, 128, %s221, [#allocation6]
        $region16: #{tpu_custom_call.1} parent=11 // pred_fallthru
          _
        // Predicated region
        $region17: #{tpu_custom_call.1} parent=11 // pred_check
          %p224 = pneg %p88
        $region18: #{tpu_custom_call.1} parent=11 // pred_check_branch
          %226 = sbr.rel (%p224) target = $region20
        $region19: #{tpu_custom_call.1} parent=11 // pred_region
          _
        $region20: #{tpu_custom_call.1} parent=11 // pred_fallthru
          _
        // Predicated region
        $region21: #{tpu_custom_call.1} parent=11 // pred_check
          %p227 = pneg %p109
        $region22: #{tpu_custom_call.1} parent=11 // pred_check_branch
          %229 = sbr.rel (%p227) target = $region24
        $region23: #{tpu_custom_call.1} parent=11 // pred_region
          _
        $region24: #{tpu_custom_call.1} parent=11 // pred_fallthru
          _
        // Predicated region
        $region25: #{tpu_custom_call.1} parent=11 // pred_check
          %p230 = pneg %p130
        $region26: #{tpu_custom_call.1} parent=11 // pred_check_branch
          %232 = sbr.rel (%p230) target = $region28
        $region27: #{tpu_custom_call.1} parent=11 // pred_region
          _
        $region28: #{tpu_custom_call.1} parent=11 // pred_fallthru
          _
        // Predicated region
        $region29: #{tpu_custom_call.1} parent=11 // pred_check
          %p233 = pneg %p151
        $region30: #{tpu_custom_call.1} parent=11 // pred_check_branch
          %235 = sbr.rel (%p233) target = $region32
        $region31: #{tpu_custom_call.1} parent=11 // pred_region
          _
        $region32: #{tpu_custom_call.1} parent=11 // pred_fallthru
          _
        // Predicated region
        $region33: #{tpu_custom_call.1} parent=11 // pred_check
          %p236 = pneg %p172
        $region34: #{tpu_custom_call.1} parent=11 // pred_check_branch
          %238 = sbr.rel (%p236) target = $region36
        $region35: #{tpu_custom_call.1} parent=11 // pred_region
          _
        $region36: #{tpu_custom_call.1} parent=11 // pred_fallthru
          _
      $region12: #{tpu_custom_call.1} parent=5 // pred_fallthru
        _
      %p239 = scmp.lt.s32.totalorder %s20, 2
      // Predicated region
      $region37: #{tpu_custom_call.1} parent=5 // pred_check
        %p240 = pneg %p239
      $region38: #{tpu_custom_call.1} parent=5 // pred_check_branch
        %242 = sbr.rel (%p240) target = $region40
      $region39: #{tpu_custom_call.1} parent=5 // pred_region
        // Predicated region
        $region41: #{tpu_custom_call.1} parent=39 // pred_check
          %p243 = pneg %p40
        $region42: #{tpu_custom_call.1} parent=39 // pred_check_branch
          %245 = sbr.rel (%p243) target = $region44
        $region43: #{tpu_custom_call.1} parent=39 // pred_region
          %s246 = sand.u32 %s30, 1
          %s247 = scalar_lea.sflag [#allocation3], %s246
          %s248 = sand.u32 %s30, 1
          %s249 = smul.addr %s248, 8
          %s250 = scalar_lea.vmem [#allocation2], %s249
          %s252 = ssub.s32 128, 128
          %253 = vsyncadd %s247, %s252
          %s254 = smul.addr %s20, 128
          %s255 = scalar_lea.hbm %s0, %s254
          %s257 = sshll.u32 %s250, 4
          %s258 = int_to_ptr.vmem [resolvable:$true] %s257
          %260 = dma.hbm_to_vmem [thread:$0]  %s255, 128, %s258, %s247
        $region44: #{tpu_custom_call.1} parent=39 // pred_fallthru
          _
      $region40: #{tpu_custom_call.1} parent=5 // pred_fallthru
        _
      %p261 = scmp.le.s32.totalorder 1, %s20
      %p262 = scmp.lt.s32.totalorder %s20, 3
      %p263 = pnand %p261, %p262
      %p264 = pneg %p263
      // Predicated region
      $region45: #{tpu_custom_call.1} parent=5 // pred_check
        _
      $region46: #{tpu_custom_call.1} parent=5 // pred_check_branch
        %266 = sbr.rel (%p263) target = $region48
      $region47: #{tpu_custom_call.1} parent=5 // pred_region
        %s267 = ssub.s32 %s20, 1
        %s268 = sand.u32 %s33, 1
        %s269 = scalar_lea.sflag [#allocation3], %s268
        %s270 = sand.u32 %s33, 1
        %s271 = smul.addr %s270, 8
        %s272 = scalar_lea.vmem [#allocation2], %s271
        // Predicated region
        $region49: #{tpu_custom_call.1} parent=47 // pred_check
          %p273 = pneg %p46
        $region50: #{tpu_custom_call.1} parent=47 // pred_check_branch
          %275 = sbr.rel (%p273) target = $region52
        $region51: #{tpu_custom_call.1} parent=47 // pred_region
          %276 = dma.done %s269, 128
        $region52: #{tpu_custom_call.1} parent=47 // pred_fallthru
          _
        // Predicated region
        $region53: #{tpu_custom_call.1} parent=47 // pred_check
          %p277 = pneg %p67
        $region54: #{tpu_custom_call.1} parent=47 // pred_check_branch
          %279 = sbr.rel (%p277) target = $region56
        $region55: #{tpu_custom_call.1} parent=47 // pred_region
          %280 = dma.done [#allocation6], 128
        $region56: #{tpu_custom_call.1} parent=47 // pred_fallthru
          _
        %s281 = sand.u32 %s33, 1
        %s282 = scalar_lea.sflag [#allocation3], %s281
        %s283 = sand.u32 %s33, 1
        %s284 = smul.addr %s283, 8
        %s285 = scalar_lea.vmem [#allocation2], %s284
        %p286 = pneg %p46
        %p287 = pneg %p43
        %p288 = pneg %p67
        %p289 = pneg %p64
        %p290 = pneg %p88
        %p291 = pneg %p85
        %p292 = pneg %p109
        %p293 = pneg %p106
        %p294 = pneg %p130
        %p295 = pneg %p127
        %p296 = pneg %p151
        %p297 = pneg %p148
        %p298 = pneg %p172
        %p299 = pneg %p169
        %p300 = pneg %p198
        %p301 = pneg %p195
        %s302 = sand.u32 %s185, 1
        %s303 = scalar_lea.sflag [#allocation4], %s302
        %s304 = sand.u32 %s185, 1
        %s305 = smul.addr %s304, 8
        %s306 = scalar_lea.vmem [#allocation7], %s305
        %v307 = vld [vmem:[%s272] sm:$0xff]
        %v308 = vld [vmem:[#allocation5] sm:$0xff]
        %vm309 = vcmask 261120
        %v310 = vsel %vm309, %v307, 0.0
        %311 = vadd.xlane.f32.xlu0 %v310
        %v312 = vpop.xlane.xlu0 %311
        %v313 = vrcp.pop 32.0
        %v314 = vmul.f32 %v312, %v313
        %v315 = vsub.f32 %v307, %v314
        %v316 = vmul.f32 %v315, %v315
        %v317 = vsel %vm309, %v316, 0.0
        %318 = vadd.xlane.f32.xlu0 %v317
        %v319 = vpop.xlane.xlu0 %318
        %v320 = vmul.f32 %v319, %v313
        %v321 = vadd.f32 %v320, 1e-05
        %v322 = vrsqrt.pop %v321
        %v323 = vmul.f32 %v315, %v322
        %v324 = vlaneseq
        %v325 = vshrl.u32 %v324, 7
        %v326 = vsub.s32 0, %v325
        %v327 = vrot.slane %v308, %v326
        %v328 = vmul.f32 %v323, %v327
        %v329 = vlaneseq
        %v330 = vshrl.u32 %v329, 7
        %v331 = vsub.s32 1, %v330
        %v332 = vrot.slane %v308, %v331
        %v333 = vadd.f32 %v328, %v332
        %v334 = vld [vmem:[%s2] sm:$0xff]
        %v335 = vld [vmem:[%s2 + $0x8] sm:$0xff]
        %v336 = vld [vmem:[%s2 + $0x10] sm:$0xff]
        %v337 = vld [vmem:[%s2 + $0x18] sm:$0xff]
        %v339 = vsel %vm309, %v333, 0
        %341 = vmatprep.subr.mxu0 0.0
        %342 = vmatpush1.msra.mxu0 0.0
        %343 = vmatprep.subr.mxu0 0.0
        %344 = vmatpush1.msra.mxu0 0.0
        %345 = vmatprep.subr.mxu0 0.0
        %346 = vmatpush1.msra.mxu0 0.0
        %347 = vmatprep.subr.mxu0 0.0
        %348 = vmatpush1.msra.mxu0 0.0
        %349 = vmatprep.subr.mxu0 0.0
        %350 = vmatpush1.msra.mxu0 0.0
        %351 = vmatprep.subr.mxu0 0.0
        %352 = vmatpush1.msra.mxu0 0.0
        %353 = vmatprep.subr.mxu0 0.0
        %354 = vmatpush1.msra.mxu0 0.0
        %355 = vmatprep.subr.mxu0 0.0
        %356 = vmatpush1.msra.mxu0 0.0
        %357 = vmatprep.subr.mxu0 0.0
        %358 = vmatpush1.msra.mxu0 0.0
        %359 = vmatprep.subr.mxu0 0.0
        %360 = vmatpush1.msra.mxu0 0.0
        %361 = vmatprep.subr.mxu0 0.0
        %362 = vmatpush1.msra.mxu0 0.0
        %363 = vmatprep.subr.mxu0 0.0
        %364 = vmatpush1.msra.mxu0 0.0
        %365 = vmatprep.subr.mxu0 0.0
        %366 = vmatpush1.msra.mxu0 %v337
        %367 = vmatprep.subr.mxu0 0.0
        %368 = vmatpush1.msra.mxu0 %v336
        %369 = vmatprep.subr.mxu0 0.0
        %370 = vmatpush1.msra.mxu0 %v335
        %371 = vmatprep.subr.mxu0 0.0
        %372 = vmatpush1.msra.mxu0 %v334
        %373 = vmatprep.subr.mxu0 0.0
        %374 = vmatpush2.msra.mxu0 0.0
        %375 = vmatprep.subr.mxu0 0.0
        %376 = vmatpush2.msra.mxu0 0.0
        %377 = vmatprep.subr.mxu0 0.0
        %378 = vmatpush2.msra.mxu0 0.0
        %379 = vmatprep.subr.mxu0 0.0
        %380 = vmatpush2.msra.mxu0 0.0
        %381 = vmatprep.subr.mxu0 0.0
        %382 = vmatpush2.msra.mxu0 0.0
        %383 = vmatprep.subr.mxu0 0.0
        %384 = vmatpush2.msra.mxu0 0.0
        %385 = vmatprep.subr.mxu0 0.0
        %386 = vmatpush2.msra.mxu0 0.0
        %387 = vmatprep.subr.mxu0 0.0
        %388 = vmatpush2.msra.mxu0 0.0
        %389 = vmatprep.subr.mxu0 0.0
        %390 = vmatpush2.msra.mxu0 0.0
        %391 = vmatprep.subr.mxu0 0.0
        %392 = vmatpush2.msra.mxu0 0.0
        %393 = vmatprep.subr.mxu0 0.0
        %394 = vmatpush2.msra.mxu0 0.0
        %395 = vmatprep.subr.mxu0 0.0
        %396 = vmatpush2.msra.mxu0 0.0
        %397 = vmatprep.subr.mxu0 0.0
        %398 = vmatpush2.msra.mxu0 0.0
        %399 = vmatprep.subr.mxu0 0.0
        %400 = vmatpush2.msra.mxu0 0.0
        %401 = vmatprep.subr.mxu0 0.0
        %402 = vmatpush2.msra.mxu0 0.0
        %403 = vmatprep.subr.mxu0 0.0
        %404 = vmatpush2.msra.mxu0 0.0
        %405 = vmatprep.mubr.f32.mxu0 0.0
        %406 = vmatmul.mubr.f32.gmra.mxu0 %v339
        %v407 = vpop.f32.mrf.mxu0
        %v408 = vadd.f32 0.0, %v407
        %v409 = vpop.f32.mrf.mxu0
        %410 = vdwg.mxu0
        %412 = vrot.lane.b32.xlu0 %v408, 120
        %v413 = vpop.permute.xlu0 %412
        %415 = vrot.lane.b32.xlu0 %v408, 112
        %v416 = vpop.permute.xlu0 %415
        %418 = vrot.lane.b32.xlu0 %v408, 104
        %v419 = vpop.permute.xlu0 %418
        %v421 = vcombine.low %v408, %v416
        %v422 = vcombine.high %v408, %v416
        %v424 = vunpack.c.l.s4 1983009808
        %v425 = vunpack.c.0.s8 %v424
        %v426 = vlaneseq
        %v427 = vshrl.u32 %v426, 7
        %v428 = vsub.s32 %v425, %v427
        %v429 = vrot.slane %v421, %v428
        %v431 = vunpack.c.l.s4 1983009808
        %v432 = vunpack.c.0.s8 %v431
        %v433 = vlaneseq
        %v434 = vshrl.u32 %v433, 7
        %v435 = vsub.s32 %v432, %v434
        %v436 = vrot.slane %v422, %v435
        %v437 = vcombine.low %v413, %v419
        %v438 = vcombine.high %v413, %v419
        %v440 = vunpack.c.l.s4 1983009808
        %v441 = vunpack.c.0.s8 %v440
        %v442 = vlaneseq
        %v443 = vshrl.u32 %v442, 7
        %v444 = vsub.s32 %v441, %v443
        %v445 = vrot.slane %v437, %v444
        %v447 = vunpack.c.l.s4 1983009808
        %v448 = vunpack.c.0.s8 %v447
        %v449 = vlaneseq
        %v450 = vshrl.u32 %v449, 7
        %v451 = vsub.s32 %v448, %v450
        %v452 = vrot.slane %v438, %v451
        %v453 = vcombine.low %v429, %v445
        %v454 = vcombine.high %v429, %v445
        %v456 = vunpack.c.l.s4 1934713408
        %v457 = vunpack.c.0.s8 %v456
        %v458 = vlaneseq
        %v459 = vshrl.u32 %v458, 7
        %v460 = vsub.s32 %v457, %v459
        %v461 = vrot.slane %v453, %v460
        %v463 = vunpack.c.l.s4 1934713408
        %v464 = vunpack.c.0.s8 %v463
        %v465 = vlaneseq
        %v466 = vshrl.u32 %v465, 7
        %v467 = vsub.s32 %v464, %v466
        %v468 = vrot.slane %v454, %v467
        %v469 = vcombine.low %v436, %v452
        %v470 = vcombine.high %v436, %v452
        %v472 = vunpack.c.l.s4 1934713408
        %v473 = vunpack.c.0.s8 %v472
        %v474 = vlaneseq
        %v475 = vshrl.u32 %v474, 7
        %v476 = vsub.s32 %v473, %v475
        %v477 = vrot.slane %v469, %v476
        %v479 = vunpack.c.l.s4 1934713408
        %v480 = vunpack.c.0.s8 %v479
        %v481 = vlaneseq
        %v482 = vshrl.u32 %v481, 7
        %v483 = vsub.s32 %v480, %v482
        %v484 = vrot.slane %v470, %v483
        %v485 = vcombine.high %v461, 0.0
        %v486 = vcombine.high %v468, 0.0
        %v487 = vcombine.high %v477, 0.0
        %v488 = vcombine.high %v484, 0.0
        %v489 = vcombine.low %v461, %v468
        %v491 = vunpack.c.l.s4 1983009808
        %v492 = vunpack.c.0.s8 %v491
        %v493 = vlaneseq
        %v494 = vshrl.u32 %v493, 7
        %v495 = vsub.s32 %v492, %v494
        %v496 = vrot.slane %v489, %v495
        %v497 = vcombine.low %v485, %v486
        %v499 = vunpack.c.l.s4 1983009808
        %v500 = vunpack.c.0.s8 %v499
        %v501 = vlaneseq
        %v502 = vshrl.u32 %v501, 7
        %v503 = vsub.s32 %v500, %v502
        %v504 = vrot.slane %v497, %v503
        %v505 = vcombine.low %v477, %v484
        %v507 = vunpack.c.l.s4 1983009808
        %v508 = vunpack.c.0.s8 %v507
        %v509 = vlaneseq
        %v510 = vshrl.u32 %v509, 7
        %v511 = vsub.s32 %v508, %v510
        %v512 = vrot.slane %v505, %v511
        %v513 = vcombine.low %v487, %v488
        %v515 = vunpack.c.l.s4 1983009808
        %v516 = vunpack.c.0.s8 %v515
        %v517 = vlaneseq
        %v518 = vshrl.u32 %v517, 7
        %v519 = vsub.s32 %v516, %v518
        %v520 = vrot.slane %v513, %v519
        %v521 = vcombine.low %v496, %v504
        %v522 = vcombine.high %v496, %v504
        %v524 = vunpack.c.l.s4 1934713408
        %v525 = vunpack.c.0.s8 %v524
        %v526 = vlaneseq
        %v527 = vshrl.u32 %v526, 7
        %v528 = vsub.s32 %v525, %v527
        %v529 = vrot.slane %v521, %v528
        %v531 = vunpack.c.l.s4 1934713408
        %v532 = vunpack.c.0.s8 %v531
        %v533 = vlaneseq
        %v534 = vshrl.u32 %v533, 7
        %v535 = vsub.s32 %v532, %v534
        %v536 = vrot.slane %v522, %v535
        %v537 = vcombine.low %v512, %v520
        %v538 = vcombine.high %v512, %v520
        %v540 = vunpack.c.l.s4 1934713408
        %v541 = vunpack.c.0.s8 %v540
        %v542 = vlaneseq
        %v543 = vshrl.u32 %v542, 7
        %v544 = vsub.s32 %v541, %v543
        %v545 = vrot.slane %v537, %v544
        %v547 = vunpack.c.l.s4 1934713408
        %v548 = vunpack.c.0.s8 %v547
        %v549 = vlaneseq
        %v550 = vshrl.u32 %v549, 7
        %v551 = vsub.s32 %v548, %v550
        %v552 = vrot.slane %v538, %v551
        %v553 = vcombine.low %v529, %v545
        %v554 = vcombine.high %v529, %v545
        %v555 = vcombine.low %v536, %v552
        %v556 = vcombine.high %v536, %v552
        %557 = vrot.lane.b32.xlu0 %v408, 96
        %v558 = vpop.permute.xlu0 %557
        %559 = vrot.lane.b32.xlu0 %v413, 96
        %v560 = vpop.permute.xlu0 %559
        %561 = vrot.lane.b32.xlu0 %v416, 96
        %v562 = vpop.permute.xlu0 %561
        %563 = vrot.lane.b32.xlu0 %v419, 96
        %v564 = vpop.permute.xlu0 %563
        %v569 = vcombine.low %v558, %v562
        %v570 = vcombine.high %v558, %v562
        %v572 = vunpack.c.l.s4 1983009808
        %v573 = vunpack.c.0.s8 %v572
        %v574 = vlaneseq
        %v575 = vshrl.u32 %v574, 7
        %v576 = vsub.s32 %v573, %v575
        %v577 = vrot.slane %v569, %v576
        %v579 = vunpack.c.l.s4 1983009808
        %v580 = vunpack.c.0.s8 %v579
        %v581 = vlaneseq
        %v582 = vshrl.u32 %v581, 7
        %v583 = vsub.s32 %v580, %v582
        %v584 = vrot.slane %v570, %v583
        %v585 = vcombine.low %v560, %v564
        %v586 = vcombine.high %v560, %v564
        %v588 = vunpack.c.l.s4 1983009808
        %v589 = vunpack.c.0.s8 %v588
        %v590 = vlaneseq
        %v591 = vshrl.u32 %v590, 7
        %v592 = vsub.s32 %v589, %v591
        %v593 = vrot.slane %v585, %v592
        %v595 = vunpack.c.l.s4 1983009808
        %v596 = vunpack.c.0.s8 %v595
        %v597 = vlaneseq
        %v598 = vshrl.u32 %v597, 7
        %v599 = vsub.s32 %v596, %v598
        %v600 = vrot.slane %v586, %v599
        %v601 = vcombine.low %v577, %v593
        %v602 = vcombine.high %v577, %v593
        %v604 = vunpack.c.l.s4 1934713408
        %v605 = vunpack.c.0.s8 %v604
        %v606 = vlaneseq
        %v607 = vshrl.u32 %v606, 7
        %v608 = vsub.s32 %v605, %v607
        %v609 = vrot.slane %v601, %v608
        %v611 = vunpack.c.l.s4 1934713408
        %v612 = vunpack.c.0.s8 %v611
        %v613 = vlaneseq
        %v614 = vshrl.u32 %v613, 7
        %v615 = vsub.s32 %v612, %v614
        %v616 = vrot.slane %v602, %v615
        %v617 = vcombine.low %v584, %v600
        %v618 = vcombine.high %v584, %v600
        %v620 = vunpack.c.l.s4 1934713408
        %v621 = vunpack.c.0.s8 %v620
        %v622 = vlaneseq
        %v623 = vshrl.u32 %v622, 7
        %v624 = vsub.s32 %v621, %v623
        %v625 = vrot.slane %v617, %v624
        %v627 = vunpack.c.l.s4 1934713408
        %v628 = vunpack.c.0.s8 %v627
        %v629 = vlaneseq
        %v630 = vshrl.u32 %v629, 7
        %v631 = vsub.s32 %v628, %v630
        %v632 = vrot.slane %v618, %v631
        %v633 = vcombine.high %v609, 0.0
        %v634 = vcombine.high %v616, 0.0
        %v635 = vcombine.high %v625, 0.0
        %v636 = vcombine.high %v632, 0.0
        %v637 = vcombine.low %v609, %v616
        %v639 = vunpack.c.l.s4 1983009808
        %v640 = vunpack.c.0.s8 %v639
        %v641 = vlaneseq
        %v642 = vshrl.u32 %v641, 7
        %v643 = vsub.s32 %v640, %v642
        %v644 = vrot.slane %v637, %v643
        %v645 = vcombine.low %v633, %v634
        %v647 = vunpack.c.l.s4 1983009808
        %v648 = vunpack.c.0.s8 %v647
        %v649 = vlaneseq
        %v650 = vshrl.u32 %v649, 7
        %v651 = vsub.s32 %v648, %v650
        %v652 = vrot.slane %v645, %v651
        %v653 = vcombine.low %v625, %v632
        %v655 = vunpack.c.l.s4 1983009808
        %v656 = vunpack.c.0.s8 %v655
        %v657 = vlaneseq
        %v658 = vshrl.u32 %v657, 7
        %v659 = vsub.s32 %v656, %v658
        %v660 = vrot.slane %v653, %v659
        %v661 = vcombine.low %v635, %v636
        %v663 = vunpack.c.l.s4 1983009808
        %v664 = vunpack.c.0.s8 %v663
        %v665 = vlaneseq
        %v666 = vshrl.u32 %v665, 7
        %v667 = vsub.s32 %v664, %v666
        %v668 = vrot.slane %v661, %v667
        %v669 = vcombine.low %v644, %v652
        %v670 = vcombine.high %v644, %v652
        %v672 = vunpack.c.l.s4 1934713408
        %v673 = vunpack.c.0.s8 %v672
        %v674 = vlaneseq
        %v675 = vshrl.u32 %v674, 7
        %v676 = vsub.s32 %v673, %v675
        %v677 = vrot.slane %v669, %v676
        %v679 = vunpack.c.l.s4 1934713408
        %v680 = vunpack.c.0.s8 %v679
        %v681 = vlaneseq
        %v682 = vshrl.u32 %v681, 7
        %v683 = vsub.s32 %v680, %v682
        %v684 = vrot.slane %v670, %v683
        %v685 = vcombine.low %v660, %v668
        %v686 = vcombine.high %v660, %v668
        %v688 = vunpack.c.l.s4 1934713408
        %v689 = vunpack.c.0.s8 %v688
        %v690 = vlaneseq
        %v691 = vshrl.u32 %v690, 7
        %v692 = vsub.s32 %v689, %v691
        %v693 = vrot.slane %v685, %v692
        %v695 = vunpack.c.l.s4 1934713408
        %v696 = vunpack.c.0.s8 %v695
        %v697 = vlaneseq
        %v698 = vshrl.u32 %v697, 7
        %v699 = vsub.s32 %v696, %v698
        %v700 = vrot.slane %v686, %v699
        %v701 = vcombine.low %v677, %v693
        %v702 = vcombine.high %v677, %v693
        %v703 = vcombine.low %v684, %v700
        %v704 = vcombine.high %v684, %v700
        %705 = vrot.lane.b32.xlu0 %v408, 64
        %v706 = vpop.permute.xlu0 %705
        %707 = vrot.lane.b32.xlu0 %v413, 64
        %v708 = vpop.permute.xlu0 %707
        %709 = vrot.lane.b32.xlu0 %v416, 64
        %v710 = vpop.permute.xlu0 %709
        %711 = vrot.lane.b32.xlu0 %v419, 64
        %v712 = vpop.permute.xlu0 %711
        %v717 = vcombine.low %v706, %v710
        %v718 = vcombine.high %v706, %v710
        %v720 = vunpack.c.l.s4 1983009808
        %v721 = vunpack.c.0.s8 %v720
        %v722 = vlaneseq
        %v723 = vshrl.u32 %v722, 7
        %v724 = vsub.s32 %v721, %v723
        %v725 = vrot.slane %v717, %v724
        %v727 = vunpack.c.l.s4 1983009808
        %v728 = vunpack.c.0.s8 %v727
        %v729 = vlaneseq
        %v730 = vshrl.u32 %v729, 7
        %v731 = vsub.s32 %v728, %v730
        %v732 = vrot.slane %v718, %v731
        %v733 = vcombine.low %v708, %v712
        %v734 = vcombine.high %v708, %v712
        %v736 = vunpack.c.l.s4 1983009808
        %v737 = vunpack.c.0.s8 %v736
        %v738 = vlaneseq
        %v739 = vshrl.u32 %v738, 7
        %v740 = vsub.s32 %v737, %v739
        %v741 = vrot.slane %v733, %v740
        %v743 = vunpack.c.l.s4 1983009808
        %v744 = vunpack.c.0.s8 %v743
        %v745 = vlaneseq
        %v746 = vshrl.u32 %v745, 7
        %v747 = vsub.s32 %v744, %v746
        %v748 = vrot.slane %v734, %v747
        %v749 = vcombine.low %v725, %v741
        %v750 = vcombine.high %v725, %v741
        %v752 = vunpack.c.l.s4 1934713408
        %v753 = vunpack.c.0.s8 %v752
        %v754 = vlaneseq
        %v755 = vshrl.u32 %v754, 7
        %v756 = vsub.s32 %v753, %v755
        %v757 = vrot.slane %v749, %v756
        %v759 = vunpack.c.l.s4 1934713408
        %v760 = vunpack.c.0.s8 %v759
        %v761 = vlaneseq
        %v762 = vshrl.u32 %v761, 7
        %v763 = vsub.s32 %v760, %v762
        %v764 = vrot.slane %v750, %v763
        %v765 = vcombine.low %v732, %v748
        %v766 = vcombine.high %v732, %v748
        %v768 = vunpack.c.l.s4 1934713408
        %v769 = vunpack.c.0.s8 %v768
        %v770 = vlaneseq
        %v771 = vshrl.u32 %v770, 7
        %v772 = vsub.s32 %v769, %v771
        %v773 = vrot.slane %v765, %v772
        %v775 = vunpack.c.l.s4 1934713408
        %v776 = vunpack.c.0.s8 %v775
        %v777 = vlaneseq
        %v778 = vshrl.u32 %v777, 7
        %v779 = vsub.s32 %v776, %v778
        %v780 = vrot.slane %v766, %v779
        %v781 = vcombine.high %v757, 0.0
        %v782 = vcombine.high %v764, 0.0
        %v783 = vcombine.high %v773, 0.0
        %v784 = vcombine.high %v780, 0.0
        %v785 = vcombine.low %v757, %v764
        %v787 = vunpack.c.l.s4 1983009808
        %v788 = vunpack.c.0.s8 %v787
        %v789 = vlaneseq
        %v790 = vshrl.u32 %v789, 7
        %v791 = vsub.s32 %v788, %v790
        %v792 = vrot.slane %v785, %v791
        %v793 = vcombine.low %v781, %v782
        %v795 = vunpack.c.l.s4 1983009808
        %v796 = vunpack.c.0.s8 %v795
        %v797 = vlaneseq
        %v798 = vshrl.u32 %v797, 7
        %v799 = vsub.s32 %v796, %v798
        %v800 = vrot.slane %v793, %v799
        %v801 = vcombine.low %v773, %v780
        %v803 = vunpack.c.l.s4 1983009808
        %v804 = vunpack.c.0.s8 %v803
        %v805 = vlaneseq
        %v806 = vshrl.u32 %v805, 7
        %v807 = vsub.s32 %v804, %v806
        %v808 = vrot.slane %v801, %v807
        %v809 = vcombine.low %v783, %v784
        %v811 = vunpack.c.l.s4 1983009808
        %v812 = vunpack.c.0.s8 %v811
        %v813 = vlaneseq
        %v814 = vshrl.u32 %v813, 7
        %v815 = vsub.s32 %v812, %v814
        %v816 = vrot.slane %v809, %v815
        %v817 = vcombine.low %v792, %v800
        %v818 = vcombine.high %v792, %v800
        %v820 = vunpack.c.l.s4 1934713408
        %v821 = vunpack.c.0.s8 %v820
        %v822 = vlaneseq
        %v823 = vshrl.u32 %v822, 7
        %v824 = vsub.s32 %v821, %v823
        %v825 = vrot.slane %v817, %v824
        %v827 = vunpack.c.l.s4 1934713408
        %v828 = vunpack.c.0.s8 %v827
        %v829 = vlaneseq
        %v830 = vshrl.u32 %v829, 7
        %v831 = vsub.s32 %v828, %v830
        %v832 = vrot.slane %v818, %v831
        %v833 = vcombine.low %v808, %v816
        %v834 = vcombine.high %v808, %v816
        %v836 = vunpack.c.l.s4 1934713408
        %v837 = vunpack.c.0.s8 %v836
        %v838 = vlaneseq
        %v839 = vshrl.u32 %v838, 7
        %v840 = vsub.s32 %v837, %v839
        %v841 = vrot.slane %v833, %v840
        %v843 = vunpack.c.l.s4 1934713408
        %v844 = vunpack.c.0.s8 %v843
        %v845 = vlaneseq
        %v846 = vshrl.u32 %v845, 7
        %v847 = vsub.s32 %v844, %v846
        %v848 = vrot.slane %v834, %v847
        %v849 = vcombine.low %v825, %v841
        %v850 = vcombine.high %v825, %v841
        %v851 = vcombine.low %v832, %v848
        %v852 = vcombine.high %v832, %v848
        %vm853 = vcmask 64512
        %v855 = vsel %vm853, %v553, 0
        %v858 = vsel %vm853, %v701, 0
        %860 = vmatprep.subr.mxu0 0.0
        %861 = vmatpush1.xpose.msra.mxu0 0.0
        %862 = vmatprep.subr.mxu0 0.0
        %863 = vmatpush1.xpose.msra.mxu0 0.0
        %864 = vmatprep.subr.mxu0 0.0
        %865 = vmatpush1.xpose.msra.mxu0 0.0
        %866 = vmatprep.subr.mxu0 0.0
        %867 = vmatpush1.xpose.msra.mxu0 0.0
        %868 = vmatprep.subr.mxu0 0.0
        %869 = vmatpush1.xpose.msra.mxu0 0.0
        %870 = vmatprep.subr.mxu0 0.0
        %871 = vmatpush1.xpose.msra.mxu0 0.0
        %872 = vmatprep.subr.mxu0 0.0
        %873 = vmatpush1.xpose.msra.mxu0 0.0
        %874 = vmatprep.subr.mxu0 0.0
        %875 = vmatpush1.xpose.msra.mxu0 0.0
        %876 = vmatprep.subr.mxu0 0.0
        %877 = vmatpush1.xpose.msra.mxu0 0.0
        %878 = vmatprep.subr.mxu0 0.0
        %879 = vmatpush1.xpose.msra.mxu0 0.0
        %880 = vmatprep.subr.mxu0 0.0
        %881 = vmatpush1.xpose.msra.mxu0 0.0
        %882 = vmatprep.subr.mxu0 0.0
        %883 = vmatpush1.xpose.msra.mxu0 0.0
        %884 = vmatprep.subr.mxu0 0.0
        %885 = vmatpush1.xpose.msra.mxu0 0.0
        %886 = vmatprep.subr.mxu0 0.0
        %887 = vmatpush1.xpose.msra.mxu0 0.0
        %888 = vmatprep.subr.mxu0 0.0
        %889 = vmatpush1.xpose.msra.mxu0 0.0
        %890 = vmatprep.subr.mxu0 0.0
        %891 = vmatpush1.xpose.msra.mxu0 %v858
        %892 = vmatprep.subr.mxu0 0.0
        %893 = vmatpush2.xpose.msra.mxu0 0.0
        %894 = vmatprep.subr.mxu0 0.0
        %895 = vmatpush2.xpose.msra.mxu0 0.0
        %896 = vmatprep.subr.mxu0 0.0
        %897 = vmatpush2.xpose.msra.mxu0 0.0
        %898 = vmatprep.subr.mxu0 0.0
        %899 = vmatpush2.xpose.msra.mxu0 0.0
        %900 = vmatprep.subr.mxu0 0.0
        %901 = vmatpush2.xpose.msra.mxu0 0.0
        %902 = vmatprep.subr.mxu0 0.0
        %903 = vmatpush2.xpose.msra.mxu0 0.0
        %904 = vmatprep.subr.mxu0 0.0
        %905 = vmatpush2.xpose.msra.mxu0 0.0
        %906 = vmatprep.subr.mxu0 0.0
        %907 = vmatpush2.xpose.msra.mxu0 0.0
        %908 = vmatprep.subr.mxu0 0.0
        %909 = vmatpush2.xpose.msra.mxu0 0.0
        %910 = vmatprep.subr.mxu0 0.0
        %911 = vmatpush2.xpose.msra.mxu0 0.0
        %912 = vmatprep.subr.mxu0 0.0
        %913 = vmatpush2.xpose.msra.mxu0 0.0
        %914 = vmatprep.subr.mxu0 0.0
        %915 = vmatpush2.xpose.msra.mxu0 0.0
        %916 = vmatprep.subr.mxu0 0.0
        %917 = vmatpush2.xpose.msra.mxu0 0.0
        %918 = vmatprep.subr.mxu0 0.0
        %919 = vmatpush2.xpose.msra.mxu0 0.0
        %920 = vmatprep.subr.mxu0 0.0
        %921 = vmatpush2.xpose.msra.mxu0 0.0
        %922 = vmatprep.subr.mxu0 0.0
        %923 = vmatpush2.xpose.msra.mxu0 0.0
        %924 = vmatprep.mubr.f32.mxu0 0.0
        %925 = vmatmul.mubr.f32.gmra.mxu0 %v855
        %v926 = vpop.f32.mrf.mxu0
        %v927 = vadd.f32 0.0, %v926
        %v928 = vpop.f32.mrf.mxu0
        %929 = vdwg.mxu0
        %v931 = vsel %vm853, %v554, 0
        %v934 = vsel %vm853, %v702, 0
        %936 = vmatprep.subr.mxu0 0.0
        %937 = vmatpush1.xpose.msra.mxu0 0.0
        %938 = vmatprep.subr.mxu0 0.0
        %939 = vmatpush1.xpose.msra.mxu0 0.0
        %940 = vmatprep.subr.mxu0 0.0
        %941 = vmatpush1.xpose.msra.mxu0 0.0
        %942 = vmatprep.subr.mxu0 0.0
        %943 = vmatpush1.xpose.msra.mxu0 0.0
        %944 = vmatprep.subr.mxu0 0.0
        %945 = vmatpush1.xpose.msra.mxu0 0.0
        %946 = vmatprep.subr.mxu0 0.0
        %947 = vmatpush1.xpose.msra.mxu0 0.0
        %948 = vmatprep.subr.mxu0 0.0
        %949 = vmatpush1.xpose.msra.mxu0 0.0
        %950 = vmatprep.subr.mxu0 0.0
        %951 = vmatpush1.xpose.msra.mxu0 0.0
        %952 = vmatprep.subr.mxu0 0.0
        %953 = vmatpush1.xpose.msra.mxu0 0.0
        %954 = vmatprep.subr.mxu0 0.0
        %955 = vmatpush1.xpose.msra.mxu0 0.0
        %956 = vmatprep.subr.mxu0 0.0
        %957 = vmatpush1.xpose.msra.mxu0 0.0
        %958 = vmatprep.subr.mxu0 0.0
        %959 = vmatpush1.xpose.msra.mxu0 0.0
        %960 = vmatprep.subr.mxu0 0.0
        %961 = vmatpush1.xpose.msra.mxu0 0.0
        %962 = vmatprep.subr.mxu0 0.0
        %963 = vmatpush1.xpose.msra.mxu0 0.0
        %964 = vmatprep.subr.mxu0 0.0
        %965 = vmatpush1.xpose.msra.mxu0 0.0
        %966 = vmatprep.subr.mxu0 0.0
        %967 = vmatpush1.xpose.msra.mxu0 %v934
        %968 = vmatprep.subr.mxu0 0.0
        %969 = vmatpush2.xpose.msra.mxu0 0.0
        %970 = vmatprep.subr.mxu0 0.0
        %971 = vmatpush2.xpose.msra.mxu0 0.0
        %972 = vmatprep.subr.mxu0 0.0
        %973 = vmatpush2.xpose.msra.mxu0 0.0
        %974 = vmatprep.subr.mxu0 0.0
        %975 = vmatpush2.xpose.msra.mxu0 0.0
        %976 = vmatprep.subr.mxu0 0.0
        %977 = vmatpush2.xpose.msra.mxu0 0.0
        %978 = vmatprep.subr.mxu0 0.0
        %979 = vmatpush2.xpose.msra.mxu0 0.0
        %980 = vmatprep.subr.mxu0 0.0
        %981 = vmatpush2.xpose.msra.mxu0 0.0
        %982 = vmatprep.subr.mxu0 0.0
        %983 = vmatpush2.xpose.msra.mxu0 0.0
        %984 = vmatprep.subr.mxu0 0.0
        %985 = vmatpush2.xpose.msra.mxu0 0.0
        %986 = vmatprep.subr.mxu0 0.0
        %987 = vmatpush2.xpose.msra.mxu0 0.0
        %988 = vmatprep.subr.mxu0 0.0
        %989 = vmatpush2.xpose.msra.mxu0 0.0
        %990 = vmatprep.subr.mxu0 0.0
        %991 = vmatpush2.xpose.msra.mxu0 0.0
        %992 = vmatprep.subr.mxu0 0.0
        %993 = vmatpush2.xpose.msra.mxu0 0.0
        %994 = vmatprep.subr.mxu0 0.0
        %995 = vmatpush2.xpose.msra.mxu0 0.0
        %996 = vmatprep.subr.mxu0 0.0
        %997 = vmatpush2.xpose.msra.mxu0 0.0
        %998 = vmatprep.subr.mxu0 0.0
        %999 = vmatpush2.xpose.msra.mxu0 0.0
        %1000 = vmatprep.mubr.f32.mxu0 0.0
        %1001 = vmatmul.mubr.f32.gmra.mxu0 %v931
        %v1002 = vpop.f32.mrf.mxu0
        %v1003 = vadd.f32 0.0, %v1002
        %v1004 = vpop.f32.mrf.mxu0
        %1005 = vdwg.mxu0
        %v1007 = vsel %vm853, %v555, 0
        %v1010 = vsel %vm853, %v703, 0
        %1012 = vmatprep.subr.mxu0 0.0
        %1013 = vmatpush1.xpose.msra.mxu0 0.0
        %1014 = vmatprep.subr.mxu0 0.0
        %1015 = vmatpush1.xpose.msra.mxu0 0.0
        %1016 = vmatprep.subr.mxu0 0.0
        %1017 = vmatpush1.xpose.msra.mxu0 0.0
        %1018 = vmatprep.subr.mxu0 0.0
        %1019 = vmatpush1.xpose.msra.mxu0 0.0
        %1020 = vmatprep.subr.mxu0 0.0
        %1021 = vmatpush1.xpose.msra.mxu0 0.0
        %1022 = vmatprep.subr.mxu0 0.0
        %1023 = vmatpush1.xpose.msra.mxu0 0.0
        %1024 = vmatprep.subr.mxu0 0.0
        %1025 = vmatpush1.xpose.msra.mxu0 0.0
        %1026 = vmatprep.subr.mxu0 0.0
        %1027 = vmatpush1.xpose.msra.mxu0 0.0
        %1028 = vmatprep.subr.mxu0 0.0
        %1029 = vmatpush1.xpose.msra.mxu0 0.0
        %1030 = vmatprep.subr.mxu0 0.0
        %1031 = vmatpush1.xpose.msra.mxu0 0.0
        %1032 = vmatprep.subr.mxu0 0.0
        %1033 = vmatpush1.xpose.msra.mxu0 0.0
        %1034 = vmatprep.subr.mxu0 0.0
        %1035 = vmatpush1.xpose.msra.mxu0 0.0
        %1036 = vmatprep.subr.mxu0 0.0
        %1037 = vmatpush1.xpose.msra.mxu0 0.0
        %1038 = vmatprep.subr.mxu0 0.0
        %1039 = vmatpush1.xpose.msra.mxu0 0.0
        %1040 = vmatprep.subr.mxu0 0.0
        %1041 = vmatpush1.xpose.msra.mxu0 0.0
        %1042 = vmatprep.subr.mxu0 0.0
        %1043 = vmatpush1.xpose.msra.mxu0 %v1010
        %1044 = vmatprep.subr.mxu0 0.0
        %1045 = vmatpush2.xpose.msra.mxu0 0.0
        %1046 = vmatprep.subr.mxu0 0.0
        %1047 = vmatpush2.xpose.msra.mxu0 0.0
        %1048 = vmatprep.subr.mxu0 0.0
        %1049 = vmatpush2.xpose.msra.mxu0 0.0
        %1050 = vmatprep.subr.mxu0 0.0
        %1051 = vmatpush2.xpose.msra.mxu0 0.0
        %1052 = vmatprep.subr.mxu0 0.0
        %1053 = vmatpush2.xpose.msra.mxu0 0.0
        %1054 = vmatprep.subr.mxu0 0.0
        %1055 = vmatpush2.xpose.msra.mxu0 0.0
        %1056 = vmatprep.subr.mxu0 0.0
        %1057 = vmatpush2.xpose.msra.mxu0 0.0
        %1058 = vmatprep.subr.mxu0 0.0
        %1059 = vmatpush2.xpose.msra.mxu0 0.0
        %1060 = vmatprep.subr.mxu0 0.0
        %1061 = vmatpush2.xpose.msra.mxu0 0.0
        %1062 = vmatprep.subr.mxu0 0.0
        %1063 = vmatpush2.xpose.msra.mxu0 0.0
        %1064 = vmatprep.subr.mxu0 0.0
        %1065 = vmatpush2.xpose.msra.mxu0 0.0
        %1066 = vmatprep.subr.mxu0 0.0
        %1067 = vmatpush2.xpose.msra.mxu0 0.0
        %1068 = vmatprep.subr.mxu0 0.0
        %1069 = vmatpush2.xpose.msra.mxu0 0.0
        %1070 = vmatprep.subr.mxu0 0.0
        %1071 = vmatpush2.xpose.msra.mxu0 0.0
        %1072 = vmatprep.subr.mxu0 0.0
        %1073 = vmatpush2.xpose.msra.mxu0 0.0
        %1074 = vmatprep.subr.mxu0 0.0
        %1075 = vmatpush2.xpose.msra.mxu0 0.0
        %1076 = vmatprep.mubr.f32.mxu0 0.0
        %1077 = vmatmul.mubr.f32.gmra.mxu0 %v1007
        %v1078 = vpop.f32.mrf.mxu0
        %v1079 = vadd.f32 0.0, %v1078
        %v1080 = vpop.f32.mrf.mxu0
        %1081 = vdwg.mxu0
        %v1083 = vsel %vm853, %v556, 0
        %v1086 = vsel %vm853, %v704, 0
        %1088 = vmatprep.subr.mxu0 0.0
        %1089 = vmatpush1.xpose.msra.mxu0 0.0
        %1090 = vmatprep.subr.mxu0 0.0
        %1091 = vmatpush1.xpose.msra.mxu0 0.0
        %1092 = vmatprep.subr.mxu0 0.0
        %1093 = vmatpush1.xpose.msra.mxu0 0.0
        %1094 = vmatprep.subr.mxu0 0.0
        %1095 = vmatpush1.xpose.msra.mxu0 0.0
        %1096 = vmatprep.subr.mxu0 0.0
        %1097 = vmatpush1.xpose.msra.mxu0 0.0
        %1098 = vmatprep.subr.mxu0 0.0
        %1099 = vmatpush1.xpose.msra.mxu0 0.0
        %1100 = vmatprep.subr.mxu0 0.0
        %1101 = vmatpush1.xpose.msra.mxu0 0.0
        %1102 = vmatprep.subr.mxu0 0.0
        %1103 = vmatpush1.xpose.msra.mxu0 0.0
        %1104 = vmatprep.subr.mxu0 0.0
        %1105 = vmatpush1.xpose.msra.mxu0 0.0
        %1106 = vmatprep.subr.mxu0 0.0
        %1107 = vmatpush1.xpose.msra.mxu0 0.0
        %1108 = vmatprep.subr.mxu0 0.0
        %1109 = vmatpush1.xpose.msra.mxu0 0.0
        %1110 = vmatprep.subr.mxu0 0.0
        %1111 = vmatpush1.xpose.msra.mxu0 0.0
        %1112 = vmatprep.subr.mxu0 0.0
        %1113 = vmatpush1.xpose.msra.mxu0 0.0
        %1114 = vmatprep.subr.mxu0 0.0
        %1115 = vmatpush1.xpose.msra.mxu0 0.0
        %1116 = vmatprep.subr.mxu0 0.0
        %1117 = vmatpush1.xpose.msra.mxu0 0.0
        %1118 = vmatprep.subr.mxu0 0.0
        %1119 = vmatpush1.xpose.msra.mxu0 %v1086
        %1120 = vmatprep.subr.mxu0 0.0
        %1121 = vmatpush2.xpose.msra.mxu0 0.0
        %1122 = vmatprep.subr.mxu0 0.0
        %1123 = vmatpush2.xpose.msra.mxu0 0.0
        %1124 = vmatprep.subr.mxu0 0.0
        %1125 = vmatpush2.xpose.msra.mxu0 0.0
        %1126 = vmatprep.subr.mxu0 0.0
        %1127 = vmatpush2.xpose.msra.mxu0 0.0
        %1128 = vmatprep.subr.mxu0 0.0
        %1129 = vmatpush2.xpose.msra.mxu0 0.0
        %1130 = vmatprep.subr.mxu0 0.0
        %1131 = vmatpush2.xpose.msra.mxu0 0.0
        %1132 = vmatprep.subr.mxu0 0.0
        %1133 = vmatpush2.xpose.msra.mxu0 0.0
        %1134 = vmatprep.subr.mxu0 0.0
        %1135 = vmatpush2.xpose.msra.mxu0 0.0
        %1136 = vmatprep.subr.mxu0 0.0
        %1137 = vmatpush2.xpose.msra.mxu0 0.0
        %1138 = vmatprep.subr.mxu0 0.0
        %1139 = vmatpush2.xpose.msra.mxu0 0.0
        %1140 = vmatprep.subr.mxu0 0.0
        %1141 = vmatpush2.xpose.msra.mxu0 0.0
        %1142 = vmatprep.subr.mxu0 0.0
        %1143 = vmatpush2.xpose.msra.mxu0 0.0
        %1144 = vmatprep.subr.mxu0 0.0
        %1145 = vmatpush2.xpose.msra.mxu0 0.0
        %1146 = vmatprep.subr.mxu0 0.0
        %1147 = vmatpush2.xpose.msra.mxu0 0.0
        %1148 = vmatprep.subr.mxu0 0.0
        %1149 = vmatpush2.xpose.msra.mxu0 0.0
        %1150 = vmatprep.subr.mxu0 0.0
        %1151 = vmatpush2.xpose.msra.mxu0 0.0
        %1152 = vmatprep.mubr.f32.mxu0 0.0
        %1153 = vmatmul.mubr.f32.gmra.mxu0 %v1083
        %v1154 = vpop.f32.mrf.mxu0
        %v1155 = vadd.f32 0.0, %v1154
        %v1156 = vpop.f32.mrf.mxu0
        %1157 = vdwg.mxu0
        %v1158 = vsel %vm853, %v927, -inf
        %1159 = vmax.xlane.f32.xlu0 %v1158
        %v1160 = vpop.xlane.xlu0 %1159
        %v1161 = vsel %vm853, %v1003, -inf
        %1162 = vmax.xlane.f32.xlu0 %v1161
        %v1163 = vpop.xlane.xlu0 %1162
        %v1164 = vsel %vm853, %v1079, -inf
        %1165 = vmax.xlane.f32.xlu0 %v1164
        %v1166 = vpop.xlane.xlu0 %1165
        %v1167 = vsel %vm853, %v1155, -inf
        %1168 = vmax.xlane.f32.xlu0 %v1167
        %v1169 = vpop.xlane.xlu0 %1168
        %v1170 = vsub.f32 %v927, %v1160
        %v1171 = vsub.f32 %v1003, %v1163
        %v1172 = vsub.f32 %v1079, %v1166
        %v1173 = vsub.f32 %v1155, %v1169
        %v1174 = vmul.f32 %v1170, 1.442695
        %v1175 = vpow.pop %v1174
        %v1176 = vmul.f32 %v1171, 1.442695
        %v1177 = vpow.pop %v1176
        %v1178 = vmul.f32 %v1172, 1.442695
        %v1179 = vpow.pop %v1178
        %v1180 = vmul.f32 %v1173, 1.442695
        %v1181 = vpow.pop %v1180
        %v1182 = vsel %vm853, %v1175, 0.0
        %1183 = vadd.xlane.f32.xlu0 %v1182
        %v1184 = vpop.xlane.xlu0 %1183
        %v1185 = vsel %vm853, %v1177, 0.0
        %1186 = vadd.xlane.f32.xlu0 %v1185
        %v1187 = vpop.xlane.xlu0 %1186
        %v1188 = vsel %vm853, %v1179, 0.0
        %1189 = vadd.xlane.f32.xlu0 %v1188
        %v1190 = vpop.xlane.xlu0 %1189
        %v1191 = vsel %vm853, %v1181, 0.0
        %1192 = vadd.xlane.f32.xlu0 %v1191
        %v1193 = vpop.xlane.xlu0 %1192
        %v1195 = vsel %vm853, %v1175, 0
        %1197 = vmatprep.subr.mxu0 0.0
        %1198 = vmatpush1.msra.mxu0 0.0
        %1199 = vmatprep.subr.mxu0 0.0
        %1200 = vmatpush1.msra.mxu0 0.0
        %1201 = vmatprep.subr.mxu0 0.0
        %1202 = vmatpush1.msra.mxu0 0.0
        %1203 = vmatprep.subr.mxu0 0.0
        %1204 = vmatpush1.msra.mxu0 0.0
        %1205 = vmatprep.subr.mxu0 0.0
        %1206 = vmatpush1.msra.mxu0 0.0
        %1207 = vmatprep.subr.mxu0 0.0
        %1208 = vmatpush1.msra.mxu0 0.0
        %1209 = vmatprep.subr.mxu0 0.0
        %1210 = vmatpush1.msra.mxu0 0.0
        %1211 = vmatprep.subr.mxu0 0.0
        %1212 = vmatpush1.msra.mxu0 0.0
        %1213 = vmatprep.subr.mxu0 0.0
        %1214 = vmatpush1.msra.mxu0 0.0
        %1215 = vmatprep.subr.mxu0 0.0
        %1216 = vmatpush1.msra.mxu0 0.0
        %1217 = vmatprep.subr.mxu0 0.0
        %1218 = vmatpush1.msra.mxu0 0.0
        %1219 = vmatprep.subr.mxu0 0.0
        %1220 = vmatpush1.msra.mxu0 0.0
        %1221 = vmatprep.subr.mxu0 0.0
        %1222 = vmatpush1.msra.mxu0 0.0
        %1223 = vmatprep.subr.mxu0 0.0
        %1224 = vmatpush1.msra.mxu0 0.0
        %1225 = vmatprep.subr.mxu0 0.0
        %1226 = vmatpush1.msra.mxu0 0.0
        %1227 = vmatprep.subr.mxu0 0.0
        %1228 = vmatpush1.msra.mxu0 %v849
        %1229 = vmatprep.subr.mxu0 0.0
        %1230 = vmatpush2.msra.mxu0 0.0
        %1231 = vmatprep.subr.mxu0 0.0
        %1232 = vmatpush2.msra.mxu0 0.0
        %1233 = vmatprep.subr.mxu0 0.0
        %1234 = vmatpush2.msra.mxu0 0.0
        %1235 = vmatprep.subr.mxu0 0.0
        %1236 = vmatpush2.msra.mxu0 0.0
        %1237 = vmatprep.subr.mxu0 0.0
        %1238 = vmatpush2.msra.mxu0 0.0
        %1239 = vmatprep.subr.mxu0 0.0
        %1240 = vmatpush2.msra.mxu0 0.0
        %1241 = vmatprep.subr.mxu0 0.0
        %1242 = vmatpush2.msra.mxu0 0.0
        %1243 = vmatprep.subr.mxu0 0.0
        %1244 = vmatpush2.msra.mxu0 0.0
        %1245 = vmatprep.subr.mxu0 0.0
        %1246 = vmatpush2.msra.mxu0 0.0
        %1247 = vmatprep.subr.mxu0 0.0
        %1248 = vmatpush2.msra.mxu0 0.0
        %1249 = vmatprep.subr.mxu0 0.0
        %1250 = vmatpush2.msra.mxu0 0.0
        %1251 = vmatprep.subr.mxu0 0.0
        %1252 = vmatpush2.msra.mxu0 0.0
        %1253 = vmatprep.subr.mxu0 0.0
        %1254 = vmatpush2.msra.mxu0 0.0
        %1255 = vmatprep.subr.mxu0 0.0
        %1256 = vmatpush2.msra.mxu0 0.0
        %1257 = vmatprep.subr.mxu0 0.0
        %1258 = vmatpush2.msra.mxu0 0.0
        %1259 = vmatprep.subr.mxu0 0.0
        %1260 = vmatpush2.msra.mxu0 0.0
        %1261 = vmatprep.mubr.f32.mxu0 0.0
        %1262 = vmatmul.mubr.f32.gmra.mxu0 %v1195
        %v1263 = vpop.f32.mrf.mxu0
        %v1264 = vadd.f32 0.0, %v1263
        %v1265 = vpop.f32.mrf.mxu0
        %1266 = vdwg.mxu0
        %v1268 = vsel %vm853, %v1177, 0
        %1270 = vmatprep.subr.mxu0 0.0
        %1271 = vmatpush1.msra.mxu0 0.0
        %1272 = vmatprep.subr.mxu0 0.0
        %1273 = vmatpush1.msra.mxu0 0.0
        %1274 = vmatprep.subr.mxu0 0.0
        %1275 = vmatpush1.msra.mxu0 0.0
        %1276 = vmatprep.subr.mxu0 0.0
        %1277 = vmatpush1.msra.mxu0 0.0
        %1278 = vmatprep.subr.mxu0 0.0
        %1279 = vmatpush1.msra.mxu0 0.0
        %1280 = vmatprep.subr.mxu0 0.0
        %1281 = vmatpush1.msra.mxu0 0.0
        %1282 = vmatprep.subr.mxu0 0.0
        %1283 = vmatpush1.msra.mxu0 0.0
        %1284 = vmatprep.subr.mxu0 0.0
        %1285 = vmatpush1.msra.mxu0 0.0
        %1286 = vmatprep.subr.mxu0 0.0
        %1287 = vmatpush1.msra.mxu0 0.0
        %1288 = vmatprep.subr.mxu0 0.0
        %1289 = vmatpush1.msra.mxu0 0.0
        %1290 = vmatprep.subr.mxu0 0.0
        %1291 = vmatpush1.msra.mxu0 0.0
        %1292 = vmatprep.subr.mxu0 0.0
        %1293 = vmatpush1.msra.mxu0 0.0
        %1294 = vmatprep.subr.mxu0 0.0
        %1295 = vmatpush1.msra.mxu0 0.0
        %1296 = vmatprep.subr.mxu0 0.0
        %1297 = vmatpush1.msra.mxu0 0.0
        %1298 = vmatprep.subr.mxu0 0.0
        %1299 = vmatpush1.msra.mxu0 0.0
        %1300 = vmatprep.subr.mxu0 0.0
        %1301 = vmatpush1.msra.mxu0 %v850
        %1302 = vmatprep.subr.mxu0 0.0
        %1303 = vmatpush2.msra.mxu0 0.0
        %1304 = vmatprep.subr.mxu0 0.0
        %1305 = vmatpush2.msra.mxu0 0.0
        %1306 = vmatprep.subr.mxu0 0.0
        %1307 = vmatpush2.msra.mxu0 0.0
        %1308 = vmatprep.subr.mxu0 0.0
        %1309 = vmatpush2.msra.mxu0 0.0
        %1310 = vmatprep.subr.mxu0 0.0
        %1311 = vmatpush2.msra.mxu0 0.0
        %1312 = vmatprep.subr.mxu0 0.0
        %1313 = vmatpush2.msra.mxu0 0.0
        %1314 = vmatprep.subr.mxu0 0.0
        %1315 = vmatpush2.msra.mxu0 0.0
        %1316 = vmatprep.subr.mxu0 0.0
        %1317 = vmatpush2.msra.mxu0 0.0
        %1318 = vmatprep.subr.mxu0 0.0
        %1319 = vmatpush2.msra.mxu0 0.0
        %1320 = vmatprep.subr.mxu0 0.0
        %1321 = vmatpush2.msra.mxu0 0.0
        %1322 = vmatprep.subr.mxu0 0.0
        %1323 = vmatpush2.msra.mxu0 0.0
        %1324 = vmatprep.subr.mxu0 0.0
        %1325 = vmatpush2.msra.mxu0 0.0
        %1326 = vmatprep.subr.mxu0 0.0
        %1327 = vmatpush2.msra.mxu0 0.0
        %1328 = vmatprep.subr.mxu0 0.0
        %1329 = vmatpush2.msra.mxu0 0.0
        %1330 = vmatprep.subr.mxu0 0.0
        %1331 = vmatpush2.msra.mxu0 0.0
        %1332 = vmatprep.subr.mxu0 0.0
        %1333 = vmatpush2.msra.mxu0 0.0
        %1334 = vmatprep.mubr.f32.mxu0 0.0
        %1335 = vmatmul.mubr.f32.gmra.mxu0 %v1268
        %v1336 = vpop.f32.mrf.mxu0
        %v1337 = vadd.f32 0.0, %v1336
        %v1338 = vpop.f32.mrf.mxu0
        %1339 = vdwg.mxu0
        %v1341 = vsel %vm853, %v1179, 0
        %1343 = vmatprep.subr.mxu0 0.0
        %1344 = vmatpush1.msra.mxu0 0.0
        %1345 = vmatprep.subr.mxu0 0.0
        %1346 = vmatpush1.msra.mxu0 0.0
        %1347 = vmatprep.subr.mxu0 0.0
        %1348 = vmatpush1.msra.mxu0 0.0
        %1349 = vmatprep.subr.mxu0 0.0
        %1350 = vmatpush1.msra.mxu0 0.0
        %1351 = vmatprep.subr.mxu0 0.0
        %1352 = vmatpush1.msra.mxu0 0.0
        %1353 = vmatprep.subr.mxu0 0.0
        %1354 = vmatpush1.msra.mxu0 0.0
        %1355 = vmatprep.subr.mxu0 0.0
        %1356 = vmatpush1.msra.mxu0 0.0
        %1357 = vmatprep.subr.mxu0 0.0
        %1358 = vmatpush1.msra.mxu0 0.0
        %1359 = vmatprep.subr.mxu0 0.0
        %1360 = vmatpush1.msra.mxu0 0.0
        %1361 = vmatprep.subr.mxu0 0.0
        %1362 = vmatpush1.msra.mxu0 0.0
        %1363 = vmatprep.subr.mxu0 0.0
        %1364 = vmatpush1.msra.mxu0 0.0
        %1365 = vmatprep.subr.mxu0 0.0
        %1366 = vmatpush1.msra.mxu0 0.0
        %1367 = vmatprep.subr.mxu0 0.0
        %1368 = vmatpush1.msra.mxu0 0.0
        %1369 = vmatprep.subr.mxu0 0.0
        %1370 = vmatpush1.msra.mxu0 0.0
        %1371 = vmatprep.subr.mxu0 0.0
        %1372 = vmatpush1.msra.mxu0 0.0
        %1373 = vmatprep.subr.mxu0 0.0
        %1374 = vmatpush1.msra.mxu0 %v851
        %1375 = vmatprep.subr.mxu0 0.0
        %1376 = vmatpush2.msra.mxu0 0.0
        %1377 = vmatprep.subr.mxu0 0.0
        %1378 = vmatpush2.msra.mxu0 0.0
        %1379 = vmatprep.subr.mxu0 0.0
        %1380 = vmatpush2.msra.mxu0 0.0
        %1381 = vmatprep.subr.mxu0 0.0
        %1382 = vmatpush2.msra.mxu0 0.0
        %1383 = vmatprep.subr.mxu0 0.0
        %1384 = vmatpush2.msra.mxu0 0.0
        %1385 = vmatprep.subr.mxu0 0.0
        %1386 = vmatpush2.msra.mxu0 0.0
        %1387 = vmatprep.subr.mxu0 0.0
        %1388 = vmatpush2.msra.mxu0 0.0
        %1389 = vmatprep.subr.mxu0 0.0
        %1390 = vmatpush2.msra.mxu0 0.0
        %1391 = vmatprep.subr.mxu0 0.0
        %1392 = vmatpush2.msra.mxu0 0.0
        %1393 = vmatprep.subr.mxu0 0.0
        %1394 = vmatpush2.msra.mxu0 0.0
        %1395 = vmatprep.subr.mxu0 0.0
        %1396 = vmatpush2.msra.mxu0 0.0
        %1397 = vmatprep.subr.mxu0 0.0
        %1398 = vmatpush2.msra.mxu0 0.0
        %1399 = vmatprep.subr.mxu0 0.0
        %1400 = vmatpush2.msra.mxu0 0.0
        %1401 = vmatprep.subr.mxu0 0.0
        %1402 = vmatpush2.msra.mxu0 0.0
        %1403 = vmatprep.subr.mxu0 0.0
        %1404 = vmatpush2.msra.mxu0 0.0
        %1405 = vmatprep.subr.mxu0 0.0
        %1406 = vmatpush2.msra.mxu0 0.0
        %1407 = vmatprep.mubr.f32.mxu0 0.0
        %1408 = vmatmul.mubr.f32.gmra.mxu0 %v1341
        %v1409 = vpop.f32.mrf.mxu0
        %v1410 = vadd.f32 0.0, %v1409
        %v1411 = vpop.f32.mrf.mxu0
        %1412 = vdwg.mxu0
        %v1414 = vsel %vm853, %v1181, 0
        %1416 = vmatprep.subr.mxu0 0.0
        %1417 = vmatpush1.msra.mxu0 0.0
        %1418 = vmatprep.subr.mxu0 0.0
        %1419 = vmatpush1.msra.mxu0 0.0
        %1420 = vmatprep.subr.mxu0 0.0
        %1421 = vmatpush1.msra.mxu0 0.0
        %1422 = vmatprep.subr.mxu0 0.0
        %1423 = vmatpush1.msra.mxu0 0.0
        %1424 = vmatprep.subr.mxu0 0.0
        %1425 = vmatpush1.msra.mxu0 0.0
        %1426 = vmatprep.subr.mxu0 0.0
        %1427 = vmatpush1.msra.mxu0 0.0
        %1428 = vmatprep.subr.mxu0 0.0
        %1429 = vmatpush1.msra.mxu0 0.0
        %1430 = vmatprep.subr.mxu0 0.0
        %1431 = vmatpush1.msra.mxu0 0.0
        %1432 = vmatprep.subr.mxu0 0.0
        %1433 = vmatpush1.msra.mxu0 0.0
        %1434 = vmatprep.subr.mxu0 0.0
        %1435 = vmatpush1.msra.mxu0 0.0
        %1436 = vmatprep.subr.mxu0 0.0
        %1437 = vmatpush1.msra.mxu0 0.0
        %1438 = vmatprep.subr.mxu0 0.0
        %1439 = vmatpush1.msra.mxu0 0.0
        %1440 = vmatprep.subr.mxu0 0.0
        %1441 = vmatpush1.msra.mxu0 0.0
        %1442 = vmatprep.subr.mxu0 0.0
        %1443 = vmatpush1.msra.mxu0 0.0
        %1444 = vmatprep.subr.mxu0 0.0
        %1445 = vmatpush1.msra.mxu0 0.0
        %1446 = vmatprep.subr.mxu0 0.0
        %1447 = vmatpush1.msra.mxu0 %v852
        %1448 = vmatprep.subr.mxu0 0.0
        %1449 = vmatpush2.msra.mxu0 0.0
        %1450 = vmatprep.subr.mxu0 0.0
        %1451 = vmatpush2.msra.mxu0 0.0
        %1452 = vmatprep.subr.mxu0 0.0
        %1453 = vmatpush2.msra.mxu0 0.0
        %1454 = vmatprep.subr.mxu0 0.0
        %1455 = vmatpush2.msra.mxu0 0.0
        %1456 = vmatprep.subr.mxu0 0.0
        %1457 = vmatpush2.msra.mxu0 0.0
        %1458 = vmatprep.subr.mxu0 0.0
        %1459 = vmatpush2.msra.mxu0 0.0
        %1460 = vmatprep.subr.mxu0 0.0
        %1461 = vmatpush2.msra.mxu0 0.0
        %1462 = vmatprep.subr.mxu0 0.0
        %1463 = vmatpush2.msra.mxu0 0.0
        %1464 = vmatprep.subr.mxu0 0.0
        %1465 = vmatpush2.msra.mxu0 0.0
        %1466 = vmatprep.subr.mxu0 0.0
        %1467 = vmatpush2.msra.mxu0 0.0
        %1468 = vmatprep.subr.mxu0 0.0
        %1469 = vmatpush2.msra.mxu0 0.0
        %1470 = vmatprep.subr.mxu0 0.0
        %1471 = vmatpush2.msra.mxu0 0.0
        %1472 = vmatprep.subr.mxu0 0.0
        %1473 = vmatpush2.msra.mxu0 0.0
        %1474 = vmatprep.subr.mxu0 0.0
        %1475 = vmatpush2.msra.mxu0 0.0
        %1476 = vmatprep.subr.mxu0 0.0
        %1477 = vmatpush2.msra.mxu0 0.0
        %1478 = vmatprep.subr.mxu0 0.0
        %1479 = vmatpush2.msra.mxu0 0.0
        %1480 = vmatprep.mubr.f32.mxu0 0.0
        %1481 = vmatmul.mubr.f32.gmra.mxu0 %v1414
        %v1482 = vpop.f32.mrf.mxu0
        %v1483 = vadd.f32 0.0, %v1482
        %v1484 = vpop.f32.mrf.mxu0
        %1485 = vdwg.mxu0
        %v1486 = vrcp.pop %v1184
        %v1487 = vmul.f32 %v1264, %v1486
        %v1488 = vrcp.pop %v1187
        %v1489 = vmul.f32 %v1337, %v1488
        %v1490 = vrcp.pop %v1190
        %v1491 = vmul.f32 %v1410, %v1490
        %v1492 = vrcp.pop %v1193
        %v1493 = vmul.f32 %v1483, %v1492
        %v1494 = vcombine.low %v1487, %v1491
        %v1495 = vcombine.high %v1487, %v1491
        %v1497 = vunpack.c.l.s4 1983009808
        %v1498 = vunpack.c.0.s8 %v1497
        %v1499 = vlaneseq
        %v1500 = vshrl.u32 %v1499, 7
        %v1501 = vsub.s32 %v1498, %v1500
        %v1502 = vrot.slane %v1494, %v1501
        %v1504 = vunpack.c.l.s4 1983009808
        %v1505 = vunpack.c.0.s8 %v1504
        %v1506 = vlaneseq
        %v1507 = vshrl.u32 %v1506, 7
        %v1508 = vsub.s32 %v1505, %v1507
        %v1509 = vrot.slane %v1495, %v1508
        %v1510 = vcombine.low %v1489, %v1493
        %v1511 = vcombine.high %v1489, %v1493
        %v1513 = vunpack.c.l.s4 1983009808
        %v1514 = vunpack.c.0.s8 %v1513
        %v1515 = vlaneseq
        %v1516 = vshrl.u32 %v1515, 7
        %v1517 = vsub.s32 %v1514, %v1516
        %v1518 = vrot.slane %v1510, %v1517
        %v1520 = vunpack.c.l.s4 1983009808
        %v1521 = vunpack.c.0.s8 %v1520
        %v1522 = vlaneseq
        %v1523 = vshrl.u32 %v1522, 7
        %v1524 = vsub.s32 %v1521, %v1523
        %v1525 = vrot.slane %v1511, %v1524
        %v1526 = vcombine.low %v1502, %v1518
        %v1527 = vcombine.high %v1502, %v1518
        %v1529 = vunpack.c.l.s4 1934713408
        %v1530 = vunpack.c.0.s8 %v1529
        %v1531 = vlaneseq
        %v1532 = vshrl.u32 %v1531, 7
        %v1533 = vsub.s32 %v1530, %v1532
        %v1534 = vrot.slane %v1526, %v1533
        %v1536 = vunpack.c.l.s4 1934713408
        %v1537 = vunpack.c.0.s8 %v1536
        %v1538 = vlaneseq
        %v1539 = vshrl.u32 %v1538, 7
        %v1540 = vsub.s32 %v1537, %v1539
        %v1541 = vrot.slane %v1527, %v1540
        %v1542 = vcombine.low %v1509, %v1525
        %v1543 = vcombine.high %v1509, %v1525
        %v1545 = vunpack.c.l.s4 1934713408
        %v1546 = vunpack.c.0.s8 %v1545
        %v1547 = vlaneseq
        %v1548 = vshrl.u32 %v1547, 7
        %v1549 = vsub.s32 %v1546, %v1548
        %v1550 = vrot.slane %v1542, %v1549
        %v1552 = vunpack.c.l.s4 1934713408
        %v1553 = vunpack.c.0.s8 %v1552
        %v1554 = vlaneseq
        %v1555 = vshrl.u32 %v1554, 7
        %v1556 = vsub.s32 %v1553, %v1555
        %v1557 = vrot.slane %v1543, %v1556
        %v1558 = vcombine.high %v1534, 0.0
        %v1559 = vcombine.high %v1541, 0.0
        %v1560 = vcombine.high %v1550, 0.0
        %v1561 = vcombine.high %v1557, 0.0
        %v1562 = vcombine.low %v1534, %v1541
        %v1564 = vunpack.c.l.s4 1983009808
        %v1565 = vunpack.c.0.s8 %v1564
        %v1566 = vlaneseq
        %v1567 = vshrl.u32 %v1566, 7
        %v1568 = vsub.s32 %v1565, %v1567
        %v1569 = vrot.slane %v1562, %v1568
        %v1570 = vcombine.low %v1558, %v1559
        %v1572 = vunpack.c.l.s4 1983009808
        %v1573 = vunpack.c.0.s8 %v1572
        %v1574 = vlaneseq
        %v1575 = vshrl.u32 %v1574, 7
        %v1576 = vsub.s32 %v1573, %v1575
        %v1577 = vrot.slane %v1570, %v1576
        %v1578 = vcombine.low %v1550, %v1557
        %v1580 = vunpack.c.l.s4 1983009808
        %v1581 = vunpack.c.0.s8 %v1580
        %v1582 = vlaneseq
        %v1583 = vshrl.u32 %v1582, 7
        %v1584 = vsub.s32 %v1581, %v1583
        %v1585 = vrot.slane %v1578, %v1584
        %v1586 = vcombine.low %v1560, %v1561
        %v1588 = vunpack.c.l.s4 1983009808
        %v1589 = vunpack.c.0.s8 %v1588
        %v1590 = vlaneseq
        %v1591 = vshrl.u32 %v1590, 7
        %v1592 = vsub.s32 %v1589, %v1591
        %v1593 = vrot.slane %v1586, %v1592
        %v1594 = vcombine.low %v1569, %v1577
        %v1595 = vcombine.high %v1569, %v1577
        %v1597 = vunpack.c.l.s4 1934713408
        %v1598 = vunpack.c.0.s8 %v1597
        %v1599 = vlaneseq
        %v1600 = vshrl.u32 %v1599, 7
        %v1601 = vsub.s32 %v1598, %v1600
        %v1602 = vrot.slane %v1594, %v1601
        %v1604 = vunpack.c.l.s4 1934713408
        %v1605 = vunpack.c.0.s8 %v1604
        %v1606 = vlaneseq
        %v1607 = vshrl.u32 %v1606, 7
        %v1608 = vsub.s32 %v1605, %v1607
        %v1609 = vrot.slane %v1595, %v1608
        %v1610 = vcombine.low %v1585, %v1593
        %v1611 = vcombine.high %v1585, %v1593
        %v1613 = vunpack.c.l.s4 1934713408
        %v1614 = vunpack.c.0.s8 %v1613
        %v1615 = vlaneseq
        %v1616 = vshrl.u32 %v1615, 7
        %v1617 = vsub.s32 %v1614, %v1616
        %v1618 = vrot.slane %v1610, %v1617
        %v1620 = vunpack.c.l.s4 1934713408
        %v1621 = vunpack.c.0.s8 %v1620
        %v1622 = vlaneseq
        %v1623 = vshrl.u32 %v1622, 7
        %v1624 = vsub.s32 %v1621, %v1623
        %v1625 = vrot.slane %v1611, %v1624
        %v1626 = vcombine.low %v1602, %v1618
        %v1627 = vcombine.high %v1602, %v1618
        %v1628 = vcombine.low %v1609, %v1625
        %v1629 = vcombine.high %v1609, %v1625
        %1631 = vrot.lane.b32.xlu0 %v1627, 8
        %v1632 = vpop.permute.xlu0 %1631
        %1635 = vrot.lane.b32.xlu0 %v1628, 16
        %v1636 = vpop.permute.xlu0 %1635
        %1639 = vrot.lane.b32.xlu0 %v1629, 24
        %v1640 = vpop.permute.xlu0 %1639
        %v1642 = vsel %vm853, %v1626, %v1632
        %vm1643 = vcmask 130048
        %v1644 = vsel %vm1643, %v1642, %v1636
        %vm1645 = vcmask 195584
        %v1646 = vsel %vm1645, %v1644, %v1640
        %v1647 = vld [vmem:[%s3] sm:$0xff]
        %v1648 = vld [vmem:[%s3 + $0x8] sm:$0xff]
        %v1649 = vld [vmem:[%s3 + $0x10] sm:$0xff]
        %v1650 = vld [vmem:[%s3 + $0x18] sm:$0xff]
        %v1651 = vlaneseq
        %v1652 = vshrl.u32 %v1651, 7
        %v1653 = vsub.s32 4, %v1652
        %v1654 = vrot.slane %v308, %v1653
        %v1656 = vsel %vm309, %v1646, 0
        %1658 = vmatprep.subr.mxu0 0.0
        %1659 = vmatpush1.msra.mxu0 0.0
        %1660 = vmatprep.subr.mxu0 0.0
        %1661 = vmatpush1.msra.mxu0 0.0
        %1662 = vmatprep.subr.mxu0 0.0
        %1663 = vmatpush1.msra.mxu0 0.0
        %1664 = vmatprep.subr.mxu0 0.0
        %1665 = vmatpush1.msra.mxu0 0.0
        %1666 = vmatprep.subr.mxu0 0.0
        %1667 = vmatpush1.msra.mxu0 0.0
        %1668 = vmatprep.subr.mxu0 0.0
        %1669 = vmatpush1.msra.mxu0 0.0
        %1670 = vmatprep.subr.mxu0 0.0
        %1671 = vmatpush1.msra.mxu0 0.0
        %1672 = vmatprep.subr.mxu0 0.0
        %1673 = vmatpush1.msra.mxu0 0.0
        %1674 = vmatprep.subr.mxu0 0.0
        %1675 = vmatpush1.msra.mxu0 0.0
        %1676 = vmatprep.subr.mxu0 0.0
        %1677 = vmatpush1.msra.mxu0 0.0
        %1678 = vmatprep.subr.mxu0 0.0
        %1679 = vmatpush1.msra.mxu0 0.0
        %1680 = vmatprep.subr.mxu0 0.0
        %1681 = vmatpush1.msra.mxu0 0.0
        %1682 = vmatprep.subr.mxu0 0.0
        %1683 = vmatpush1.msra.mxu0 %v1650
        %1684 = vmatprep.subr.mxu0 0.0
        %1685 = vmatpush1.msra.mxu0 %v1649
        %1686 = vmatprep.subr.mxu0 0.0
        %1687 = vmatpush1.msra.mxu0 %v1648
        %1688 = vmatprep.subr.mxu0 0.0
        %1689 = vmatpush1.msra.mxu0 %v1647
        %1690 = vmatprep.subr.mxu0 0.0
        %1691 = vmatpush2.msra.mxu0 0.0
        %1692 = vmatprep.subr.mxu0 0.0
        %1693 = vmatpush2.msra.mxu0 0.0
        %1694 = vmatprep.subr.mxu0 0.0
        %1695 = vmatpush2.msra.mxu0 0.0
        %1696 = vmatprep.subr.mxu0 0.0
        %1697 = vmatpush2.msra.mxu0 0.0
        %1698 = vmatprep.subr.mxu0 0.0
        %1699 = vmatpush2.msra.mxu0 0.0
        %1700 = vmatprep.subr.mxu0 0.0
        %1701 = vmatpush2.msra.mxu0 0.0
        %1702 = vmatprep.subr.mxu0 0.0
        %1703 = vmatpush2.msra.mxu0 0.0
        %1704 = vmatprep.subr.mxu0 0.0
        %1705 = vmatpush2.msra.mxu0 0.0
        %1706 = vmatprep.subr.mxu0 0.0
        %1707 = vmatpush2.msra.mxu0 0.0
        %1708 = vmatprep.subr.mxu0 0.0
        %1709 = vmatpush2.msra.mxu0 0.0
        %1710 = vmatprep.subr.mxu0 0.0
        %1711 = vmatpush2.msra.mxu0 0.0
        %1712 = vmatprep.subr.mxu0 0.0
        %1713 = vmatpush2.msra.mxu0 0.0
        %1714 = vmatprep.subr.mxu0 0.0
        %1715 = vmatpush2.msra.mxu0 0.0
        %1716 = vmatprep.subr.mxu0 0.0
        %1717 = vmatpush2.msra.mxu0 0.0
        %1718 = vmatprep.subr.mxu0 0.0
        %1719 = vmatpush2.msra.mxu0 0.0
        %1720 = vmatprep.subr.mxu0 0.0
        %1721 = vmatpush2.msra.mxu0 0.0
        %1722 = vmatprep.mubr.f32.mxu0 0.0
        %1723 = vmatmul.mubr.f32.gmra.mxu0 %v1656
        %v1724 = vpop.f32.mrf.mxu0
        %v1725 = vadd.f32 %v1654, %v1724
        %v1726 = vpop.f32.mrf.mxu0
        %1727 = vdwg.mxu0
        %v1728 = vadd.f32 %v307, %v1725
        %v1729 = vsel %vm309, %v1728, 0.0
        %1730 = vadd.xlane.f32.xlu0 %v1729
        %v1731 = vpop.xlane.xlu0 %1730
        %v1732 = vmul.f32 %v1731, %v313
        %v1733 = vsub.f32 %v1728, %v1732
        %v1734 = vmul.f32 %v1733, %v1733
        %v1735 = vsel %vm309, %v1734, 0.0
        %1736 = vadd.xlane.f32.xlu0 %v1735
        %v1737 = vpop.xlane.xlu0 %1736
        %v1738 = vmul.f32 %v1737, %v313
        %v1739 = vadd.f32 %v1738, 1e-05
        %v1740 = vrsqrt.pop %v1739
        %v1741 = vmul.f32 %v1733, %v1740
        %v1742 = vlaneseq
        %v1743 = vshrl.u32 %v1742, 7
        %v1744 = vsub.s32 2, %v1743
        %v1745 = vrot.slane %v308, %v1744
        %v1746 = vmul.f32 %v1741, %v1745
        %v1747 = vlaneseq
        %v1748 = vshrl.u32 %v1747, 7
        %v1749 = vsub.s32 3, %v1748
        %v1750 = vrot.slane %v308, %v1749
        %v1751 = vadd.f32 %v1746, %v1750
        %v1752 = vld [vmem:[%s4] sm:$0xff]
        %v1753 = vld [vmem:[%s4 + $0x8] sm:$0xff]
        %v1754 = vld [vmem:[%s4 + $0x10] sm:$0xff]
        %v1755 = vld [vmem:[%s4 + $0x18] sm:$0xff]
        %v1756 = vld [vmem:[%s5] sm:$0x1]
        %v1758 = vlaneseq
        %v1759 = vshrl.u32 %v1758, 7
        %v1760 = vsub.s32 0, %v1759
        %v1761 = vrot.slane %v1756, %v1760
        %v1764 = vsel %vm309, %v1751, 0
        %1766 = vmatprep.subr.mxu0 0.0
        %1767 = vmatpush1.msra.mxu0 0.0
        %1768 = vmatprep.subr.mxu0 0.0
        %1769 = vmatpush1.msra.mxu0 0.0
        %1770 = vmatprep.subr.mxu0 0.0
        %1771 = vmatpush1.msra.mxu0 0.0
        %1772 = vmatprep.subr.mxu0 0.0
        %1773 = vmatpush1.msra.mxu0 0.0
        %1774 = vmatprep.subr.mxu0 0.0
        %1775 = vmatpush1.msra.mxu0 0.0
        %1776 = vmatprep.subr.mxu0 0.0
        %1777 = vmatpush1.msra.mxu0 0.0
        %1778 = vmatprep.subr.mxu0 0.0
        %1779 = vmatpush1.msra.mxu0 0.0
        %1780 = vmatprep.subr.mxu0 0.0
        %1781 = vmatpush1.msra.mxu0 0.0
        %1782 = vmatprep.subr.mxu0 0.0
        %1783 = vmatpush1.msra.mxu0 0.0
        %1784 = vmatprep.subr.mxu0 0.0
        %1785 = vmatpush1.msra.mxu0 0.0
        %1786 = vmatprep.subr.mxu0 0.0
        %1787 = vmatpush1.msra.mxu0 0.0
        %1788 = vmatprep.subr.mxu0 0.0
        %1789 = vmatpush1.msra.mxu0 0.0
        %1790 = vmatprep.subr.mxu0 0.0
        %1791 = vmatpush1.msra.mxu0 %v1755
        %1792 = vmatprep.subr.mxu0 0.0
        %1793 = vmatpush1.msra.mxu0 %v1754
        %1794 = vmatprep.subr.mxu0 0.0
        %1795 = vmatpush1.msra.mxu0 %v1753
        %1796 = vmatprep.subr.mxu0 0.0
        %1797 = vmatpush1.msra.mxu0 %v1752
        %1798 = vmatprep.subr.mxu0 0.0
        %1799 = vmatpush2.msra.mxu0 0.0
        %1800 = vmatprep.subr.mxu0 0.0
        %1801 = vmatpush2.msra.mxu0 0.0
        %1802 = vmatprep.subr.mxu0 0.0
        %1803 = vmatpush2.msra.mxu0 0.0
        %1804 = vmatprep.subr.mxu0 0.0
        %1805 = vmatpush2.msra.mxu0 0.0
        %1806 = vmatprep.subr.mxu0 0.0
        %1807 = vmatpush2.msra.mxu0 0.0
        %1808 = vmatprep.subr.mxu0 0.0
        %1809 = vmatpush2.msra.mxu0 0.0
        %1810 = vmatprep.subr.mxu0 0.0
        %1811 = vmatpush2.msra.mxu0 0.0
        %1812 = vmatprep.subr.mxu0 0.0
        %1813 = vmatpush2.msra.mxu0 0.0
        %1814 = vmatprep.subr.mxu0 0.0
        %1815 = vmatpush2.msra.mxu0 0.0
        %1816 = vmatprep.subr.mxu0 0.0
        %1817 = vmatpush2.msra.mxu0 0.0
        %1818 = vmatprep.subr.mxu0 0.0
        %1819 = vmatpush2.msra.mxu0 0.0
        %1820 = vmatprep.subr.mxu0 0.0
        %1821 = vmatpush2.msra.mxu0 0.0
        %1822 = vmatprep.subr.mxu0 0.0
        %1823 = vmatpush2.msra.mxu0 0.0
        %1824 = vmatprep.subr.mxu0 0.0
        %1825 = vmatpush2.msra.mxu0 0.0
        %1826 = vmatprep.subr.mxu0 0.0
        %1827 = vmatpush2.msra.mxu0 0.0
        %1828 = vmatprep.subr.mxu0 0.0
        %1829 = vmatpush2.msra.mxu0 0.0
        %1830 = vmatprep.mubr.f32.mxu0 0.0
        %1831 = vmatmul.mubr.f32.gmra.mxu0 %v1764
        %v1832 = vpop.f32.mrf.mxu0
        %v1833 = vadd.f32 %v1761, %v1832
        %v1834 = vpop.f32.mrf.mxu0
        %1835 = vdwg.mxu0
        %v1836 = vmax.f32 %v1833, 0.0
        %v1837 = vld [vmem:[%s6] sm:$0xff]
        %v1838 = vld [vmem:[%s6 + $0x8] sm:$0xff]
        %v1839 = vld [vmem:[%s6 + $0x10] sm:$0xff]
        %v1840 = vld [vmem:[%s6 + $0x18] sm:$0xff]
        %v1841 = vld [vmem:[%s6 + $0x20] sm:$0xff]
        %v1842 = vld [vmem:[%s6 + $0x28] sm:$0xff]
        %v1843 = vld [vmem:[%s6 + $0x30] sm:$0xff]
        %v1844 = vld [vmem:[%s6 + $0x38] sm:$0xff]
        %v1845 = vlaneseq
        %v1846 = vshrl.u32 %v1845, 7
        %v1847 = vsub.s32 5, %v1846
        %v1848 = vrot.slane %v308, %v1847
        %vm1849 = vcmask 523264
        %v1851 = vsel %vm1849, %v1836, 0
        %1853 = vmatprep.subr.mxu0 0.0
        %1854 = vmatpush1.msra.mxu0 0.0
        %1855 = vmatprep.subr.mxu0 0.0
        %1856 = vmatpush1.msra.mxu0 0.0
        %1857 = vmatprep.subr.mxu0 0.0
        %1858 = vmatpush1.msra.mxu0 0.0
        %1859 = vmatprep.subr.mxu0 0.0
        %1860 = vmatpush1.msra.mxu0 0.0
        %1861 = vmatprep.subr.mxu0 0.0
        %1862 = vmatpush1.msra.mxu0 0.0
        %1863 = vmatprep.subr.mxu0 0.0
        %1864 = vmatpush1.msra.mxu0 0.0
        %1865 = vmatprep.subr.mxu0 0.0
        %1866 = vmatpush1.msra.mxu0 0.0
        %1867 = vmatprep.subr.mxu0 0.0
        %1868 = vmatpush1.msra.mxu0 0.0
        %1869 = vmatprep.subr.mxu0 0.0
        %1870 = vmatpush1.msra.mxu0 %v1844
        %1871 = vmatprep.subr.mxu0 0.0
        %1872 = vmatpush1.msra.mxu0 %v1843
        %1873 = vmatprep.subr.mxu0 0.0
        %1874 = vmatpush1.msra.mxu0 %v1842
        %1875 = vmatprep.subr.mxu0 0.0
        %1876 = vmatpush1.msra.mxu0 %v1841
        %1877 = vmatprep.subr.mxu0 0.0
        %1878 = vmatpush1.msra.mxu0 %v1840
        %1879 = vmatprep.subr.mxu0 0.0
        %1880 = vmatpush1.msra.mxu0 %v1839
        %1881 = vmatprep.subr.mxu0 0.0
        %1882 = vmatpush1.msra.mxu0 %v1838
        %1883 = vmatprep.subr.mxu0 0.0
        %1884 = vmatpush1.msra.mxu0 %v1837
        %1885 = vmatprep.subr.mxu0 0.0
        %1886 = vmatpush2.msra.mxu0 0.0
        %1887 = vmatprep.subr.mxu0 0.0
        %1888 = vmatpush2.msra.mxu0 0.0
        %1889 = vmatprep.subr.mxu0 0.0
        %1890 = vmatpush2.msra.mxu0 0.0
        %1891 = vmatprep.subr.mxu0 0.0
        %1892 = vmatpush2.msra.mxu0 0.0
        %1893 = vmatprep.subr.mxu0 0.0
        %1894 = vmatpush2.msra.mxu0 0.0
        %1895 = vmatprep.subr.mxu0 0.0
        %1896 = vmatpush2.msra.mxu0 0.0
        %1897 = vmatprep.subr.mxu0 0.0
        %1898 = vmatpush2.msra.mxu0 0.0
        %1899 = vmatprep.subr.mxu0 0.0
        %1900 = vmatpush2.msra.mxu0 0.0
        %1901 = vmatprep.subr.mxu0 0.0
        %1902 = vmatpush2.msra.mxu0 0.0
        %1903 = vmatprep.subr.mxu0 0.0
        %1904 = vmatpush2.msra.mxu0 0.0
        %1905 = vmatprep.subr.mxu0 0.0
        %1906 = vmatpush2.msra.mxu0 0.0
        %1907 = vmatprep.subr.mxu0 0.0
        %1908 = vmatpush2.msra.mxu0 0.0
        %1909 = vmatprep.subr.mxu0 0.0
        %1910 = vmatpush2.msra.mxu0 0.0
        %1911 = vmatprep.subr.mxu0 0.0
        %1912 = vmatpush2.msra.mxu0 0.0
        %1913 = vmatprep.subr.mxu0 0.0
        %1914 = vmatpush2.msra.mxu0 0.0
        %1915 = vmatprep.subr.mxu0 0.0
        %1916 = vmatpush2.msra.mxu0 0.0
        %1917 = vmatprep.mubr.f32.mxu0 0.0
        %1918 = vmatmul.mubr.f32.gmra.mxu0 %v1851
        %v1919 = vpop.f32.mrf.mxu0
        %v1920 = vadd.f32 %v1848, %v1919
        %v1921 = vpop.f32.mrf.mxu0
        %1922 = vdwg.mxu0
        %v1923 = vadd.f32 %v1728, %v1920
        %1924 = vst.msk [vmem:[%s306] sm:$0xff] %vm309, %v1923
        %s1925 = sand.u32 %s185, 1
        %s1926 = scalar_lea.sflag [#allocation4], %s1925
        %s1927 = sand.u32 %s185, 1
        %s1928 = smul.addr %s1927, 8
        %s1929 = scalar_lea.vmem [#allocation7], %s1928
        // Predicated region
        $region57: #{tpu_custom_call.1} parent=47 // pred_check
          %p1930 = pneg %p195
        $region58: #{tpu_custom_call.1} parent=47 // pred_check_branch
          %1932 = sbr.rel (%p1930) target = $region60
        $region59: #{tpu_custom_call.1} parent=47 // pred_region
          %s1934 = ssub.s32 128, 128
          %1935 = vsyncadd %s1926, %s1934
          %s1936 = smul.addr %s25, 128
          %s1937 = scalar_lea.hbm %s7, %s1936
          %s1939 = sshll.u32 %s1929, 4
          %s1940 = int_to_ptr.vmem [resolvable:$true] %s1939
          %1942 = dma.vmem_to_hbm [thread:$0]  %s1940, 128, %s1937, %s1926
        $region60: #{tpu_custom_call.1} parent=47 // pred_fallthru
          _
      $region48: #{tpu_custom_call.1} parent=5 // pred_fallthru
        _
      %p1943 = scmp.le.s32.totalorder 2, %s20
      // Predicated region
      $region61: #{tpu_custom_call.1} parent=5 // pred_check
        %p1944 = pneg %p1943
      $region62: #{tpu_custom_call.1} parent=5 // pred_check_branch
        %1946 = sbr.rel (%p1944) target = $region64
      $region63: #{tpu_custom_call.1} parent=5 // pred_region
        %s1947 = ssub.s32 %s20, 2
        // Predicated region
        $region65: #{tpu_custom_call.1} parent=63 // pred_check
          %p1948 = pneg %p201
        $region66: #{tpu_custom_call.1} parent=63 // pred_check_branch
          %1950 = sbr.rel (%p1948) target = $region68
        $region67: #{tpu_custom_call.1} parent=63 // pred_region
          %s1951 = sand.u32 %s186, 1
          %s1952 = scalar_lea.sflag [#allocation4], %s1951
          %s1953 = sand.u32 %s186, 1
          %s1954 = smul.addr %s1953, 8
          %s1955 = scalar_lea.vmem [#allocation7], %s1954
          %1956 = dma.done %s1952, 128
        $region68: #{tpu_custom_call.1} parent=63 // pred_fallthru
          _
      $region64: #{tpu_custom_call.1} parent=5 // pred_fallthru
        _
    $region6: #{tpu_custom_call.1} parent=1 // loop_footer
      %s24 = sadd.s32 1, %s20
    $region7: #{tpu_custom_call.1} parent=1 // loop_footer_branch
      %19 = sbr.rel target = $region3
    $region8: #{tpu_custom_call.1} parent=1 // loop_exit
      _
    %1957 = vsyncpa [#allocation3], 1
    %s1958 = scalar_lea.sflag [#allocation3], 1
    %1959 = vsyncpa %s1958, 1
    %1960 = vsyncpa [#allocation6], 1
    %1961 = vsyncpa [#allocation4], 1
    %s1962 = scalar_lea.sflag [#allocation4], 1
    %1963 = vsyncpa %s1962, 1

// kernel: tpu_custom_call.1
$region0: #{tpu_custom_call.1}
  #allocation0 [shape = 'u32[]', space=smem, size = 0x4, offset = 0x4, fixed_abs, tag = 'smem constant byte address 0x4 - core index']
  #allocation1 [shape = 'u32[144,128]{1,0:T(1,128)}', space=vmem, size = 0x12000, scoped, tag = 'internal scratch']
  %s0 = inlined_call_operand.hbm [shape: f32[16,32], index: 0, kind: input, shape index: {}]
  %s1 = inlined_call_operand.hbm [shape: f32[8,32], index: 1, kind: input, shape index: {}]
  %s2 = inlined_call_operand.vmem [shape: f32[32,96], index: 2, kind: input, shape index: {}]
  %s3 = inlined_call_operand.vmem [shape: f32[32,32], index: 3, kind: input, shape index: {}]
  %s4 = inlined_call_operand.vmem [shape: f32[32,64], index: 4, kind: input, shape index: {}]
  %s5 = inlined_call_operand.vmem [shape: f32[1,64], index: 5, kind: input, shape index: {}]
  %s6 = inlined_call_operand.vmem [shape: f32[64,32], index: 6, kind: input, shape index: {}]
  %s7 = inlined_call_operand.hbm [shape: f32[16,32], index: 7, kind: output, shape index: {}]
  %s8 = sld [smem:[#allocation0]]
  $region69: #{tpu_custom_call.1} parent=0
    _
  %s10 = ssub.s32 1, %s8
  %s11 = scalar_select 0, %s10, %s8
  $region1: #{tpu_custom_call.1} parent=0
    #allocation2 [shape = 'u8[8192]{0}', space=vmem, size = 0x2000, scoped, tag = 'input window, operand 0']
    #allocation3 [shape = 's32[2]{0}', space=sflag, size = 0x8, scoped, tag = 'scoped memory for tpu_custom_call.1']
    #allocation4 [shape = 's32[2]{0}', space=sflag, size = 0x8, scoped, tag = 'scoped memory for tpu_custom_call.1']
    #allocation5 [shape = 'u8[4096]{0}', space=vmem, size = 0x1000, scoped, tag = 'input window, operand 1, single buffered']
    #allocation6 [shape = 's32[1]{0}', space=sflag, size = 0x4, scoped, tag = 'scoped memory for tpu_custom_call.1']
    #allocation7 [shape = 'u8[8192]{0}', space=vmem, size = 0x2000, scoped, tag = 'output window, operand 0']
    %12 = vsyncpa [#allocation3], 0
    %s13 = scalar_lea.sflag [#allocation3], 1
    %14 = vsyncpa %s13, 0
    %15 = vsyncpa [#allocation6], 0
    %16 = vsyncpa [#allocation4], 0
    %s17 = scalar_lea.sflag [#allocation4], 1
    %18 = vsyncpa %s17, 0
    loop: start=0, step=1, limit=4
    $region2: #{tpu_custom_call.1} parent=1 // loop_pre_header
      _
    $region3: #{tpu_custom_call.1} parent=1 // loop_header
      %s20 = sphi 0, %s24
      %p21 = scmp.ge.s32.totalorder %s20, 4
      %s30 = sphi 0, %s32
      %s33 = sphi 0, %s30
      %s34 = sphi 0, %s33
      %s50 = sphi 0, %s34
      %s54 = sphi 0, %s54
      %s56 = sphi 0, %s54
      %s57 = sphi 0, %s56
      %s71 = sphi 0, %s57
      %s75 = sphi 0, %s75
      %s77 = sphi 0, %s75
      %s78 = sphi 0, %s77
      %s92 = sphi 0, %s78
      %s96 = sphi 0, %s96
      %s98 = sphi 0, %s96
      %s99 = sphi 0, %s98
      %s113 = sphi 0, %s99
      %s117 = sphi 0, %s117
      %s119 = sphi 0, %s117
      %s120 = sphi 0, %s119
      %s134 = sphi 0, %s120
      %s138 = sphi 0, %s138
      %s140 = sphi 0, %s138
      %s141 = sphi 0, %s140
      %s155 = sphi 0, %s141
      %s159 = sphi 0, %s159
      %s161 = sphi 0, %s159
      %s162 = sphi 0, %s161
      %s176 = sphi 0, %s162
      %s182 = sphi 0, %s184
      %s185 = sphi 0, %s182
      %s186 = sphi 0, %s185
      %s202 = sphi 0, %s186
    $region4: #{tpu_custom_call.1} parent=1 // loop_header_branch
      %23 = sbr.rel (%p21) target = $region8
    $region5: #{tpu_custom_call.1} parent=1 // loop_body
      %s25 = ssub.s32 %s20, 1
      %s26 = ssub.s32 %s20, 2
      %s27 = sadd.s32 %s20, 1
      %s28 = ssub.s32 %s20, %s27
      %p29 = scmp.eq.s32.totalorder %s28, 0
      %s31 = sadd.s32 %s30, 1
      %s32 = scalar_select %p29, %s30, %s31
      %p35 = pneg %p29
      %p36 = scmp.eq.s32.totalorder %s20, 1
      %p37 = por %p35, %p36
      %p38 = scmp.ne.s32.totalorder %s30, %s33
      %p39 = scmp.eq.s32.totalorder %s20, 0
      %p40 = por %p38, %p39
      %p41 = scmp.ne.s32.totalorder %s30, %s33
      %p42 = scmp.eq.s32.totalorder %s25, 1
      %p43 = por %p41, %p42
      %p44 = scmp.ne.s32.totalorder %s33, %s34
      %p45 = scmp.eq.s32.totalorder %s25, 0
      %p46 = por %p44, %p45
      %p47 = scmp.ne.s32.totalorder %s33, %s34
      %p48 = scmp.eq.s32.totalorder %s26, 1
      %p49 = por %p47, %p48
      %p51 = scmp.ne.s32.totalorder %s34, %s50
      %p52 = scmp.eq.s32.totalorder %s26, 0
      %p53 = por %p51, %p52
      %s55 = sadd.s32 %s54, 1
      %p58 = scmp.eq.s32.totalorder %s20, 1
      %p59 = scmp.ne.s32.totalorder %s54, %s56
      %p60 = scmp.eq.s32.totalorder %s20, 0
      %p61 = por %p59, %p60
      %p62 = scmp.ne.s32.totalorder %s54, %s56
      %p63 = scmp.eq.s32.totalorder %s25, 1
      %p64 = por %p62, %p63
      %p65 = scmp.ne.s32.totalorder %s56, %s57
      %p66 = scmp.eq.s32.totalorder %s25, 0
      %p67 = por %p65, %p66
      %p68 = scmp.ne.s32.totalorder %s56, %s57
      %p69 = scmp.eq.s32.totalorder %s26, 1
      %p70 = por %p68, %p69
      %p72 = scmp.ne.s32.totalorder %s57, %s71
      %p73 = scmp.eq.s32.totalorder %s26, 0
      %p74 = por %p72, %p73
      %s76 = sadd.s32 %s75, 1
      %p79 = scmp.eq.s32.totalorder %s20, 1
      %p80 = scmp.ne.s32.totalorder %s75, %s77
      %p81 = scmp.eq.s32.totalorder %s20, 0
      %p82 = por %p80, %p81
      %p83 = scmp.ne.s32.totalorder %s75, %s77
      %p84 = scmp.eq.s32.totalorder %s25, 1
      %p85 = por %p83, %p84
      %p86 = scmp.ne.s32.totalorder %s77, %s78
      %p87 = scmp.eq.s32.totalorder %s25, 0
      %p88 = por %p86, %p87
      %p89 = scmp.ne.s32.totalorder %s77, %s78
      %p90 = scmp.eq.s32.totalorder %s26, 1
      %p91 = por %p89, %p90
      %p93 = scmp.ne.s32.totalorder %s78, %s92
      %p94 = scmp.eq.s32.totalorder %s26, 0
      %p95 = por %p93, %p94
      %s97 = sadd.s32 %s96, 1
      %p100 = scmp.eq.s32.totalorder %s20, 1
      %p101 = scmp.ne.s32.totalorder %s96, %s98
      %p102 = scmp.eq.s32.totalorder %s20, 0
      %p103 = por %p101, %p102
      %p104 = scmp.ne.s32.totalorder %s96, %s98
      %p105 = scmp.eq.s32.totalorder %s25, 1
      %p106 = por %p104, %p105
      %p107 = scmp.ne.s32.totalorder %s98, %s99
      %p108 = scmp.eq.s32.totalorder %s25, 0
      %p109 = por %p107, %p108
      %p110 = scmp.ne.s32.totalorder %s98, %s99
      %p111 = scmp.eq.s32.totalorder %s26, 1
      %p112 = por %p110, %p111
      %p114 = scmp.ne.s32.totalorder %s99, %s113
      %p115 = scmp.eq.s32.totalorder %s26, 0
      %p116 = por %p114, %p115
      %s118 = sadd.s32 %s117, 1
      %p121 = scmp.eq.s32.totalorder %s20, 1
      %p122 = scmp.ne.s32.totalorder %s117, %s119
      %p123 = scmp.eq.s32.totalorder %s20, 0
      %p124 = por %p122, %p123
      %p125 = scmp.ne.s32.totalorder %s117, %s119
      %p126 = scmp.eq.s32.totalorder %s25, 1
      %p127 = por %p125, %p126
      %p128 = scmp.ne.s32.totalorder %s119, %s120
      %p129 = scmp.eq.s32.totalorder %s25, 0
      %p130 = por %p128, %p129
      %p131 = scmp.ne.s32.totalorder %s119, %s120
      %p132 = scmp.eq.s32.totalorder %s26, 1
      %p133 = por %p131, %p132
      %p135 = scmp.ne.s32.totalorder %s120, %s134
      %p136 = scmp.eq.s32.totalorder %s26, 0
      %p137 = por %p135, %p136
      %s139 = sadd.s32 %s138, 1
      %p142 = scmp.eq.s32.totalorder %s20, 1
      %p143 = scmp.ne.s32.totalorder %s138, %s140
      %p144 = scmp.eq.s32.totalorder %s20, 0
      %p145 = por %p143, %p144
      %p146 = scmp.ne.s32.totalorder %s138, %s140
      %p147 = scmp.eq.s32.totalorder %s25, 1
      %p148 = por %p146, %p147
      %p149 = scmp.ne.s32.totalorder %s140, %s141
      %p150 = scmp.eq.s32.totalorder %s25, 0
      %p151 = por %p149, %p150
      %p152 = scmp.ne.s32.totalorder %s140, %s141
      %p153 = scmp.eq.s32.totalorder %s26, 1
      %p154 = por %p152, %p153
      %p156 = scmp.ne.s32.totalorder %s141, %s155
      %p157 = scmp.eq.s32.totalorder %s26, 0
      %p158 = por %p156, %p157
      %s160 = sadd.s32 %s159, 1
      %p163 = scmp.eq.s32.totalorder %s20, 1
      %p164 = scmp.ne.s32.totalorder %s159, %s161
      %p165 = scmp.eq.s32.totalorder %s20, 0
      %p166 = por %p164, %p165
      %p167 = scmp.ne.s32.totalorder %s159, %s161
      %p168 = scmp.eq.s32.totalorder %s25, 1
      %p169 = por %p167, %p168
      %p170 = scmp.ne.s32.totalorder %s161, %s162
      %p171 = scmp.eq.s32.totalorder %s25, 0
      %p172 = por %p170, %p171
      %p173 = scmp.ne.s32.totalorder %s161, %s162
      %p174 = scmp.eq.s32.totalorder %s26, 1
      %p175 = por %p173, %p174
      %p177 = scmp.ne.s32.totalorder %s162, %s176
      %p178 = scmp.eq.s32.totalorder %s26, 0
      %p179 = por %p177, %p178
      %s180 = ssub.s32 %s20, %s27
      %p181 = scmp.eq.s32.totalorder %s180, 0
      %s183 = sadd.s32 %s182, 1
      %s184 = scalar_select %p181, %s182, %s183
      %p187 = pneg %p181
      %p188 = scmp.eq.s32.totalorder %s20, 1
      %p189 = por %p187, %p188
      %p190 = scmp.ne.s32.totalorder %s182, %s185
      %p191 = scmp.eq.s32.totalorder %s20, 0
      %p192 = por %p190, %p191
      %p193 = scmp.ne.s32.totalorder %s182, %s185
      %p194 = scmp.eq.s32.totalorder %s25, 1
      %p195 = por %p193, %p194
      %p196 = scmp.ne.s32.totalorder %s185, %s186
      %p197 = scmp.eq.s32.totalorder %s25, 0
      %p198 = por %p196, %p197
      %p199 = scmp.ne.s32.totalorder %s185, %s186
      %p200 = scmp.eq.s32.totalorder %s26, 1
      %p201 = por %p199, %p200
      %p203 = scmp.ne.s32.totalorder %s186, %s202
      %p204 = scmp.eq.s32.totalorder %s26, 0
      %p205 = por %p203, %p204
      %p206 = scmp.le.s32.totalorder 1, %s20
      %p207 = scmp.lt.s32.totalorder %s20, 3
      %p208 = pnand %p206, %p207
      %p209 = pneg %p208
      // Predicated region
      $region9: #{tpu_custom_call.1} parent=5 // pred_check
        _
      $region10: #{tpu_custom_call.1} parent=5 // pred_check_branch
        %211 = sbr.rel (%p208) target = $region12
      $region11: #{tpu_custom_call.1} parent=5 // pred_region
        %s212 = ssub.s32 %s20, 1
        // Predicated region
        $region13: #{tpu_custom_call.1} parent=11 // pred_check
          %p213 = pneg %p67
        $region14: #{tpu_custom_call.1} parent=11 // pred_check_branch
          %215 = sbr.rel (%p213) target = $region16
        $region15: #{tpu_custom_call.1} parent=11 // pred_region
          %s217 = ssub.s32 128, 128
          %218 = vsyncadd [#allocation6], %s217
          %s220 = sshll.u32 [#allocation5], 4
          %s221 = int_to_ptr.vmem [resolvable:$true] %s220
          %223 = dma.hbm_to_vmem [thread:$0]  %s1, 128, %s221, [#allocation6]
        $region16: #{tpu_custom_call.1} parent=11 // pred_fallthru
          _
        // Predicated region
        $region17: #{tpu_custom_call.1} parent=11 // pred_check
          %p224 = pneg %p88
        $region18: #{tpu_custom_call.1} parent=11 // pred_check_branch
          %226 = sbr.rel (%p224) target = $region20
        $region19: #{tpu_custom_call.1} parent=11 // pred_region
          _
        $region20: #{tpu_custom_call.1} parent=11 // pred_fallthru
          _
        // Predicated region
        $region21: #{tpu_custom_call.1} parent=11 // pred_check
          %p227 = pneg %p109
        $region22: #{tpu_custom_call.1} parent=11 // pred_check_branch
          %229 = sbr.rel (%p227) target = $region24
        $region23: #{tpu_custom_call.1} parent=11 // pred_region
          _
        $region24: #{tpu_custom_call.1} parent=11 // pred_fallthru
          _
        // Predicated region
        $region25: #{tpu_custom_call.1} parent=11 // pred_check
          %p230 = pneg %p130
        $region26: #{tpu_custom_call.1} parent=11 // pred_check_branch
          %232 = sbr.rel (%p230) target = $region28
        $region27: #{tpu_custom_call.1} parent=11 // pred_region
          _
        $region28: #{tpu_custom_call.1} parent=11 // pred_fallthru
          _
        // Predicated region
        $region29: #{tpu_custom_call.1} parent=11 // pred_check
          %p233 = pneg %p151
        $region30: #{tpu_custom_call.1} parent=11 // pred_check_branch
          %235 = sbr.rel (%p233) target = $region32
        $region31: #{tpu_custom_call.1} parent=11 // pred_region
          _
        $region32: #{tpu_custom_call.1} parent=11 // pred_fallthru
          _
        // Predicated region
        $region33: #{tpu_custom_call.1} parent=11 // pred_check
          %p236 = pneg %p172
        $region34: #{tpu_custom_call.1} parent=11 // pred_check_branch
          %238 = sbr.rel (%p236) target = $region36
        $region35: #{tpu_custom_call.1} parent=11 // pred_region
          _
        $region36: #{tpu_custom_call.1} parent=11 // pred_fallthru
          _
      $region12: #{tpu_custom_call.1} parent=5 // pred_fallthru
        _
      %p239 = scmp.lt.s32.totalorder %s20, 2
      // Predicated region
      $region37: #{tpu_custom_call.1} parent=5 // pred_check
        %p240 = pneg %p239
      $region38: #{tpu_custom_call.1} parent=5 // pred_check_branch
        %242 = sbr.rel (%p240) target = $region40
      $region39: #{tpu_custom_call.1} parent=5 // pred_region
        // Predicated region
        $region41: #{tpu_custom_call.1} parent=39 // pred_check
          %p243 = pneg %p40
        $region42: #{tpu_custom_call.1} parent=39 // pred_check_branch
          %245 = sbr.rel (%p243) target = $region44
        $region43: #{tpu_custom_call.1} parent=39 // pred_region
          %s246 = sand.u32 %s30, 1
          %s247 = scalar_lea.sflag [#allocation3], %s246
          %s248 = sand.u32 %s30, 1
          %s249 = smul.addr %s248, 8
          %s250 = scalar_lea.vmem [#allocation2], %s249
          %s252 = ssub.s32 128, 128
          %253 = vsyncadd %s247, %s252
          %s254 = smul.addr %s20, 128
          %s255 = scalar_lea.hbm %s0, %s254
          %s257 = sshll.u32 %s250, 4
          %s258 = int_to_ptr.vmem [resolvable:$true] %s257
          %260 = dma.hbm_to_vmem [thread:$0]  %s255, 128, %s258, %s247
        $region44: #{tpu_custom_call.1} parent=39 // pred_fallthru
          _
      $region40: #{tpu_custom_call.1} parent=5 // pred_fallthru
        _
      %p261 = scmp.le.s32.totalorder 1, %s20
      %p262 = scmp.lt.s32.totalorder %s20, 3
      %p263 = pnand %p261, %p262
      %p264 = pneg %p263
      // Predicated region
      $region45: #{tpu_custom_call.1} parent=5 // pred_check
        _
      $region46: #{tpu_custom_call.1} parent=5 // pred_check_branch
        %266 = sbr.rel (%p263) target = $region48
      $region47: #{tpu_custom_call.1} parent=5 // pred_region
        %s267 = ssub.s32 %s20, 1
        %s268 = sand.u32 %s33, 1
        %s269 = scalar_lea.sflag [#allocation3], %s268
        %s270 = sand.u32 %s33, 1
        %s271 = smul.addr %s270, 8
        %s272 = scalar_lea.vmem [#allocation2], %s271
        // Predicated region
        $region49: #{tpu_custom_call.1} parent=47 // pred_check
          %p273 = pneg %p46
        $region50: #{tpu_custom_call.1} parent=47 // pred_check_branch
          %275 = sbr.rel (%p273) target = $region52
        $region51: #{tpu_custom_call.1} parent=47 // pred_region
          %276 = dma.done %s269, 128
        $region52: #{tpu_custom_call.1} parent=47 // pred_fallthru
          _
        // Predicated region
        $region53: #{tpu_custom_call.1} parent=47 // pred_check
          %p277 = pneg %p67
        $region54: #{tpu_custom_call.1} parent=47 // pred_check_branch
          %279 = sbr.rel (%p277) target = $region56
        $region55: #{tpu_custom_call.1} parent=47 // pred_region
          %280 = dma.done [#allocation6], 128
        $region56: #{tpu_custom_call.1} parent=47 // pred_fallthru
          _
        %s281 = sand.u32 %s33, 1
        %s282 = scalar_lea.sflag [#allocation3], %s281
        %s283 = sand.u32 %s33, 1
        %s284 = smul.addr %s283, 8
        %s285 = scalar_lea.vmem [#allocation2], %s284
        %p286 = pneg %p46
        %p287 = pneg %p43
        %p288 = pneg %p67
        %p289 = pneg %p64
        %p290 = pneg %p88
        %p291 = pneg %p85
        %p292 = pneg %p109
        %p293 = pneg %p106
        %p294 = pneg %p130
        %p295 = pneg %p127
        %p296 = pneg %p151
        %p297 = pneg %p148
        %p298 = pneg %p172
        %p299 = pneg %p169
        %p300 = pneg %p198
        %p301 = pneg %p195
        %s302 = sand.u32 %s185, 1
        %s303 = scalar_lea.sflag [#allocation4], %s302
        %s304 = sand.u32 %s185, 1
        %s305 = smul.addr %s304, 8
        %s306 = scalar_lea.vmem [#allocation7], %s305
        %v307 = vld [vmem:[%s272] sm:$0xff]
        %v308 = vld [vmem:[#allocation5] sm:$0xff]
        %vm309 = vcmask 261120
        %v310 = vsel %vm309, %v307, 0.0
        %311 = vadd.xlane.f32.xlu0 %v310
        %v312 = vpop.xlane.xlu0 %311
        %v313 = vrcp.pop 32.0
        %v314 = vmul.f32 %v312, %v313
        %v315 = vsub.f32 %v307, %v314
        %v316 = vmul.f32 %v315, %v315
        %v317 = vsel %vm309, %v316, 0.0
        %318 = vadd.xlane.f32.xlu0 %v317
        %v319 = vpop.xlane.xlu0 %318
        %v320 = vmul.f32 %v319, %v313
        %v321 = vadd.f32 %v320, 1e-05
        %v322 = vrsqrt.pop %v321
        %v323 = vmul.f32 %v315, %v322
        %v324 = vlaneseq
        %v325 = vshrl.u32 %v324, 7
        %v326 = vsub.s32 0, %v325
        %v327 = vrot.slane %v308, %v326
        %v328 = vmul.f32 %v323, %v327
        %v329 = vlaneseq
        %v330 = vshrl.u32 %v329, 7
        %v331 = vsub.s32 1, %v330
        %v332 = vrot.slane %v308, %v331
        %v333 = vadd.f32 %v328, %v332
        %v334 = vld [vmem:[%s2] sm:$0xff]
        %v335 = vld [vmem:[%s2 + $0x8] sm:$0xff]
        %v336 = vld [vmem:[%s2 + $0x10] sm:$0xff]
        %v337 = vld [vmem:[%s2 + $0x18] sm:$0xff]
        %v339 = vsel %vm309, %v333, 0
        %341 = vmatprep.subr.mxu0 0.0
        %342 = vmatpush1.msra.mxu0 0.0
        %343 = vmatprep.subr.mxu0 0.0
        %344 = vmatpush1.msra.mxu0 0.0
        %345 = vmatprep.subr.mxu0 0.0
        %346 = vmatpush1.msra.mxu0 0.0
        %347 = vmatprep.subr.mxu0 0.0
        %348 = vmatpush1.msra.mxu0 0.0
        %349 = vmatprep.subr.mxu0 0.0
        %350 = vmatpush1.msra.mxu0 0.0
        %351 = vmatprep.subr.mxu0 0.0
        %352 = vmatpush1.msra.mxu0 0.0
        %353 = vmatprep.subr.mxu0 0.0
        %354 = vmatpush1.msra.mxu0 0.0
        %355 = vmatprep.subr.mxu0 0.0
        %356 = vmatpush1.msra.mxu0 0.0
        %357 = vmatprep.subr.mxu0 0.0
        %358 = vmatpush1.msra.mxu0 0.0
        %359 = vmatprep.subr.mxu0 0.0
        %360 = vmatpush1.msra.mxu0 0.0
        %361 = vmatprep.subr.mxu0 0.0
        %362 = vmatpush1.msra.mxu0 0.0
        %363 = vmatprep.subr.mxu0 0.0
        %364 = vmatpush1.msra.mxu0 0.0
        %365 = vmatprep.subr.mxu0 0.0
        %366 = vmatpush1.msra.mxu0 %v337
        %367 = vmatprep.subr.mxu0 0.0
        %368 = vmatpush1.msra.mxu0 %v336
        %369 = vmatprep.subr.mxu0 0.0
        %370 = vmatpush1.msra.mxu0 %v335
        %371 = vmatprep.subr.mxu0 0.0
        %372 = vmatpush1.msra.mxu0 %v334
        %373 = vmatprep.subr.mxu0 0.0
        %374 = vmatpush2.msra.mxu0 0.0
        %375 = vmatprep.subr.mxu0 0.0
        %376 = vmatpush2.msra.mxu0 0.0
        %377 = vmatprep.subr.mxu0 0.0
        %378 = vmatpush2.msra.mxu0 0.0
        %379 = vmatprep.subr.mxu0 0.0
        %380 = vmatpush2.msra.mxu0 0.0
        %381 = vmatprep.subr.mxu0 0.0
        %382 = vmatpush2.msra.mxu0 0.0
        %383 = vmatprep.subr.mxu0 0.0
        %384 = vmatpush2.msra.mxu0 0.0
        %385 = vmatprep.subr.mxu0 0.0
        %386 = vmatpush2.msra.mxu0 0.0
        %387 = vmatprep.subr.mxu0 0.0
        %388 = vmatpush2.msra.mxu0 0.0
        %389 = vmatprep.subr.mxu0 0.0
        %390 = vmatpush2.msra.mxu0 0.0
        %391 = vmatprep.subr.mxu0 0.0
        %392 = vmatpush2.msra.mxu0 0.0
        %393 = vmatprep.subr.mxu0 0.0
        %394 = vmatpush2.msra.mxu0 0.0
        %395 = vmatprep.subr.mxu0 0.0
        %396 = vmatpush2.msra.mxu0 0.0
        %397 = vmatprep.subr.mxu0 0.0
        %398 = vmatpush2.msra.mxu0 0.0
        %399 = vmatprep.subr.mxu0 0.0
        %400 = vmatpush2.msra.mxu0 0.0
        %401 = vmatprep.subr.mxu0 0.0
        %402 = vmatpush2.msra.mxu0 0.0
        %403 = vmatprep.subr.mxu0 0.0
        %404 = vmatpush2.msra.mxu0 0.0
        %405 = vmatprep.mubr.f32.mxu0 0.0
        %406 = vmatmul.mubr.f32.gmra.mxu0 %v339
        %v407 = vpop.f32.mrf.mxu0
        %v408 = vadd.f32 0.0, %v407
        %v409 = vpop.f32.mrf.mxu0
        %410 = vdwg.mxu0
        %412 = vrot.lane.b32.xlu0 %v408, 120
        %v413 = vpop.permute.xlu0 %412
        %415 = vrot.lane.b32.xlu0 %v408, 112
        %v416 = vpop.permute.xlu0 %415
        %418 = vrot.lane.b32.xlu0 %v408, 104
        %v419 = vpop.permute.xlu0 %418
        %v421 = vcombine.low %v408, %v416
        %v422 = vcombine.high %v408, %v416
        %v424 = vunpack.c.l.s4 1983009808
        %v425 = vunpack.c.0.s8 %v424
        %v426 = vlaneseq
        %v427 = vshrl.u32 %v426, 7
        %v428 = vsub.s32 %v425, %v427
        %v429 = vrot.slane %v421, %v428
        %v431 = vunpack.c.l.s4 1983009808
        %v432 = vunpack.c.0.s8 %v431
        %v433 = vlaneseq
        %v434 = vshrl.u32 %v433, 7
        %v435 = vsub.s32 %v432, %v434
        %v436 = vrot.slane %v422, %v435
        %v437 = vcombine.low %v413, %v419
        %v438 = vcombine.high %v413, %v419
        %v440 = vunpack.c.l.s4 1983009808
        %v441 = vunpack.c.0.s8 %v440
        %v442 = vlaneseq
        %v443 = vshrl.u32 %v442, 7
        %v444 = vsub.s32 %v441, %v443
        %v445 = vrot.slane %v437, %v444
        %v447 = vunpack.c.l.s4 1983009808
        %v448 = vunpack.c.0.s8 %v447
        %v449 = vlaneseq
        %v450 = vshrl.u32 %v449, 7
        %v451 = vsub.s32 %v448, %v450
        %v452 = vrot.slane %v438, %v451
        %v453 = vcombine.low %v429, %v445
        %v454 = vcombine.high %v429, %v445
        %v456 = vunpack.c.l.s4 1934713408
        %v457 = vunpack.c.0.s8 %v456
        %v458 = vlaneseq
        %v459 = vshrl.u32 %v458, 7
        %v460 = vsub.s32 %v457, %v459
        %v461 = vrot.slane %v453, %v460
        %v463 = vunpack.c.l.s4 1934713408
        %v464 = vunpack.c.0.s8 %v463
        %v465 = vlaneseq
        %v466 = vshrl.u32 %v465, 7
        %v467 = vsub.s32 %v464, %v466
        %v468 = vrot.slane %v454, %v467
        %v469 = vcombine.low %v436, %v452
        %v470 = vcombine.high %v436, %v452
        %v472 = vunpack.c.l.s4 1934713408
        %v473 = vunpack.c.0.s8 %v472
        %v474 = vlaneseq
        %v475 = vshrl.u32 %v474, 7
        %v476 = vsub.s32 %v473, %v475
        %v477 = vrot.slane %v469, %v476
        %v479 = vunpack.c.l.s4 1934713408
        %v480 = vunpack.c.0.s8 %v479
        %v481 = vlaneseq
        %v482 = vshrl.u32 %v481, 7
        %v483 = vsub.s32 %v480, %v482
        %v484 = vrot.slane %v470, %v483
        %v485 = vcombine.high %v461, 0.0
        %v486 = vcombine.high %v468, 0.0
        %v487 = vcombine.high %v477, 0.0
        %v488 = vcombine.high %v484, 0.0
        %v489 = vcombine.low %v461, %v468
        %v491 = vunpack.c.l.s4 1983009808
        %v492 = vunpack.c.0.s8 %v491
        %v493 = vlaneseq
        %v494 = vshrl.u32 %v493, 7
        %v495 = vsub.s32 %v492, %v494
        %v496 = vrot.slane %v489, %v495
        %v497 = vcombine.low %v485, %v486
        %v499 = vunpack.c.l.s4 1983009808
        %v500 = vunpack.c.0.s8 %v499
        %v501 = vlaneseq
        %v502 = vshrl.u32 %v501, 7
        %v503 = vsub.s32 %v500, %v502
        %v504 = vrot.slane %v497, %v503
        %v505 = vcombine.low %v477, %v484
        %v507 = vunpack.c.l.s4 1983009808
        %v508 = vunpack.c.0.s8 %v507
        %v509 = vlaneseq
        %v510 = vshrl.u32 %v509, 7
        %v511 = vsub.s32 %v508, %v510
        %v512 = vrot.slane %v505, %v511
        %v513 = vcombine.low %v487, %v488
        %v515 = vunpack.c.l.s4 1983009808
        %v516 = vunpack.c.0.s8 %v515
        %v517 = vlaneseq
        %v518 = vshrl.u32 %v517, 7
        %v519 = vsub.s32 %v516, %v518
        %v520 = vrot.slane %v513, %v519
        %v521 = vcombine.low %v496, %v504
        %v522 = vcombine.high %v496, %v504
        %v524 = vunpack.c.l.s4 1934713408
        %v525 = vunpack.c.0.s8 %v524
        %v526 = vlaneseq
        %v527 = vshrl.u32 %v526, 7
        %v528 = vsub.s32 %v525, %v527
        %v529 = vrot.slane %v521, %v528
        %v531 = vunpack.c.l.s4 1934713408
        %v532 = vunpack.c.0.s8 %v531
        %v533 = vlaneseq
        %v534 = vshrl.u32 %v533, 7
        %v535 = vsub.s32 %v532, %v534
        %v536 = vrot.slane %v522, %v535
        %v537 = vcombine.low %v512, %v520
        %v538 = vcombine.high %v512, %v520
        %v540 = vunpack.c.l.s4 1934713408
        %v541 = vunpack.c.0.s8 %v540
        %v542 = vlaneseq
        %v543 = vshrl.u32 %v542, 7
        %v544 = vsub.s32 %v541, %v543
        %v545 = vrot.slane %v537, %v544
        %v547 = vunpack.c.l.s4 1934713408
        %v548 = vunpack.c.0.s8 %v547
        %v549 = vlaneseq
        %v550 = vshrl.u32 %v549, 7
        %v551 = vsub.s32 %v548, %v550
        %v552 = vrot.slane %v538, %v551
        %v553 = vcombine.low %v529, %v545
        %v554 = vcombine.high %v529, %v545
        %v555 = vcombine.low %v536, %v552
        %v556 = vcombine.high %v536, %v552
        %557 = vrot.lane.b32.xlu0 %v408, 96
        %v558 = vpop.permute.xlu0 %557
        %559 = vrot.lane.b32.xlu0 %v413, 96
        %v560 = vpop.permute.xlu0 %559
        %561 = vrot.lane.b32.xlu0 %v416, 96
        %v562 = vpop.permute.xlu0 %561
        %563 = vrot.lane.b32.xlu0 %v419, 96
        %v564 = vpop.permute.xlu0 %563
        %v569 = vcombine.low %v558, %v562
        %v570 = vcombine.high %v558, %v562
        %v572 = vunpack.c.l.s4 1983009808
        %v573 = vunpack.c.0.s8 %v572
        %v574 = vlaneseq
        %v575 = vshrl.u32 %v574, 7
        %v576 = vsub.s32 %v573, %v575
        %v577 = vrot.slane %v569, %v576
        %v579 = vunpack.c.l.s4 1983009808
        %v580 = vunpack.c.0.s8 %v579
        %v581 = vlaneseq
        %v582 = vshrl.u32 %v581, 7
        %v583 = vsub.s32 %v580, %v582
        %v584 = vrot.slane %v570, %v583
        %v585 = vcombine.low %v560, %v564
        %v586 = vcombine.high %v560, %v564
        %v588 = vunpack.c.l.s4 1983009808
        %v589 = vunpack.c.0.s8 %v588
        %v590 = vlaneseq
        %v591 = vshrl.u32 %v590, 7
        %v592 = vsub.s32 %v589, %v591
        %v593 = vrot.slane %v585, %v592
        %v595 = vunpack.c.l.s4 1983009808
        %v596 = vunpack.c.0.s8 %v595
        %v597 = vlaneseq
        %v598 = vshrl.u32 %v597, 7
        %v599 = vsub.s32 %v596, %v598
        %v600 = vrot.slane %v586, %v599
        %v601 = vcombine.low %v577, %v593
        %v602 = vcombine.high %v577, %v593
        %v604 = vunpack.c.l.s4 1934713408
        %v605 = vunpack.c.0.s8 %v604
        %v606 = vlaneseq
        %v607 = vshrl.u32 %v606, 7
        %v608 = vsub.s32 %v605, %v607
        %v609 = vrot.slane %v601, %v608
        %v611 = vunpack.c.l.s4 1934713408
        %v612 = vunpack.c.0.s8 %v611
        %v613 = vlaneseq
        %v614 = vshrl.u32 %v613, 7
        %v615 = vsub.s32 %v612, %v614
        %v616 = vrot.slane %v602, %v615
        %v617 = vcombine.low %v584, %v600
        %v618 = vcombine.high %v584, %v600
        %v620 = vunpack.c.l.s4 1934713408
        %v621 = vunpack.c.0.s8 %v620
        %v622 = vlaneseq
        %v623 = vshrl.u32 %v622, 7
        %v624 = vsub.s32 %v621, %v623
        %v625 = vrot.slane %v617, %v624
        %v627 = vunpack.c.l.s4 1934713408
        %v628 = vunpack.c.0.s8 %v627
        %v629 = vlaneseq
        %v630 = vshrl.u32 %v629, 7
        %v631 = vsub.s32 %v628, %v630
        %v632 = vrot.slane %v618, %v631
        %v633 = vcombine.high %v609, 0.0
        %v634 = vcombine.high %v616, 0.0
        %v635 = vcombine.high %v625, 0.0
        %v636 = vcombine.high %v632, 0.0
        %v637 = vcombine.low %v609, %v616
        %v639 = vunpack.c.l.s4 1983009808
        %v640 = vunpack.c.0.s8 %v639
        %v641 = vlaneseq
        %v642 = vshrl.u32 %v641, 7
        %v643 = vsub.s32 %v640, %v642
        %v644 = vrot.slane %v637, %v643
        %v645 = vcombine.low %v633, %v634
        %v647 = vunpack.c.l.s4 1983009808
        %v648 = vunpack.c.0.s8 %v647
        %v649 = vlaneseq
        %v650 = vshrl.u32 %v649, 7
        %v651 = vsub.s32 %v648, %v650
        %v652 = vrot.slane %v645, %v651
        %v653 = vcombine.low %v625, %v632
        %v655 = vunpack.c.l.s4 1983009808
        %v656 = vunpack.c.0.s8 %v655
        %v657 = vlaneseq
        %v658 = vshrl.u32 %v657, 7
        %v659 = vsub.s32 %v656, %v658
        %v660 = vrot.slane %v653, %v659
        %v661 = vcombine.low %v635, %v636
        %v663 = vunpack.c.l.s4 1983009808
        %v664 = vunpack.c.0.s8 %v663
        %v665 = vlaneseq
        %v666 = vshrl.u32 %v665, 7
        %v667 = vsub.s32 %v664, %v666
        %v668 = vrot.slane %v661, %v667
        %v669 = vcombine.low %v644, %v652
        %v670 = vcombine.high %v644, %v652
        %v672 = vunpack.c.l.s4 1934713408
        %v673 = vunpack.c.0.s8 %v672
        %v674 = vlaneseq
        %v675 = vshrl.u32 %v674, 7
        %v676 = vsub.s32 %v673, %v675
        %v677 = vrot.slane %v669, %v676
        %v679 = vunpack.c.l.s4 1934713408
        %v680 = vunpack.c.0.s8 %v679
        %v681 = vlaneseq
        %v682 = vshrl.u32 %v681, 7
        %v683 = vsub.s32 %v680, %v682
        %v684 = vrot.slane %v670, %v683
        %v685 = vcombine.low %v660, %v668
        %v686 = vcombine.high %v660, %v668
        %v688 = vunpack.c.l.s4 1934713408
        %v689 = vunpack.c.0.s8 %v688
        %v690 = vlaneseq
        %v691 = vshrl.u32 %v690, 7
        %v692 = vsub.s32 %v689, %v691
        %v693 = vrot.slane %v685, %v692
        %v695 = vunpack.c.l.s4 1934713408
        %v696 = vunpack.c.0.s8 %v695
        %v697 = vlaneseq
        %v698 = vshrl.u32 %v697, 7
        %v699 = vsub.s32 %v696, %v698
        %v700 = vrot.slane %v686, %v699
        %v701 = vcombine.low %v677, %v693
        %v702 = vcombine.high %v677, %v693
        %v703 = vcombine.low %v684, %v700
        %v704 = vcombine.high %v684, %v700
        %705 = vrot.lane.b32.xlu0 %v408, 64
        %v706 = vpop.permute.xlu0 %705
        %707 = vrot.lane.b32.xlu0 %v413, 64
        %v708 = vpop.permute.xlu0 %707
        %709 = vrot.lane.b32.xlu0 %v416, 64
        %v710 = vpop.permute.xlu0 %709
        %711 = vrot.lane.b32.xlu0 %v419, 64
        %v712 = vpop.permute.xlu0 %711
        %v717 = vcombine.low %v706, %v710
        %v718 = vcombine.high %v706, %v710
        %v720 = vunpack.c.l.s4 1983009808
        %v721 = vunpack.c.0.s8 %v720
        %v722 = vlaneseq
        %v723 = vshrl.u32 %v722, 7
        %v724 = vsub.s32 %v721, %v723
        %v725 = vrot.slane %v717, %v724
        %v727 = vunpack.c.l.s4 1983009808
        %v728 = vunpack.c.0.s8 %v727
        %v729 = vlaneseq
        %v730 = vshrl.u32 %v729, 7
        %v731 = vsub.s32 %v728, %v730
        %v732 = vrot.slane %v718, %v731
        %v733 = vcombine.low %v708, %v712
        %v734 = vcombine.high %v708, %v712
        %v736 = vunpack.c.l.s4 1983009808
        %v737 = vunpack.c.0.s8 %v736
        %v738 = vlaneseq
        %v739 = vshrl.u32 %v738, 7
        %v740 = vsub.s32 %v737, %v739
        %v741 = vrot.slane %v733, %v740
        %v743 = vunpack.c.l.s4 1983009808
        %v744 = vunpack.c.0.s8 %v743
        %v745 = vlaneseq
        %v746 = vshrl.u32 %v745, 7
        %v747 = vsub.s32 %v744, %v746
        %v748 = vrot.slane %v734, %v747
        %v749 = vcombine.low %v725, %v741
        %v750 = vcombine.high %v725, %v741
        %v752 = vunpack.c.l.s4 1934713408
        %v753 = vunpack.c.0.s8 %v752
        %v754 = vlaneseq
        %v755 = vshrl.u32 %v754, 7
        %v756 = vsub.s32 %v753, %v755
        %v757 = vrot.slane %v749, %v756
        %v759 = vunpack.c.l.s4 1934713408
        %v760 = vunpack.c.0.s8 %v759
        %v761 = vlaneseq
        %v762 = vshrl.u32 %v761, 7
        %v763 = vsub.s32 %v760, %v762
        %v764 = vrot.slane %v750, %v763
        %v765 = vcombine.low %v732, %v748
        %v766 = vcombine.high %v732, %v748
        %v768 = vunpack.c.l.s4 1934713408
        %v769 = vunpack.c.0.s8 %v768
        %v770 = vlaneseq
        %v771 = vshrl.u32 %v770, 7
        %v772 = vsub.s32 %v769, %v771
        %v773 = vrot.slane %v765, %v772
        %v775 = vunpack.c.l.s4 1934713408
        %v776 = vunpack.c.0.s8 %v775
        %v777 = vlaneseq
        %v778 = vshrl.u32 %v777, 7
        %v779 = vsub.s32 %v776, %v778
        %v780 = vrot.slane %v766, %v779
        %v781 = vcombine.high %v757, 0.0
        %v782 = vcombine.high %v764, 0.0
        %v783 = vcombine.high %v773, 0.0
        %v784 = vcombine.high %v780, 0.0
        %v785 = vcombine.low %v757, %v764
        %v787 = vunpack.c.l.s4 1983009808
        %v788 = vunpack.c.0.s8 %v787
        %v789 = vlaneseq
        %v790 = vshrl.u32 %v789, 7
        %v791 = vsub.s32 %v788, %v790
        %v792 = vrot.slane %v785, %v791
        %v793 = vcombine.low %v781, %v782
        %v795 = vunpack.c.l.s4 1983009808
        %v796 = vunpack.c.0.s8 %v795
        %v797 = vlaneseq
        %v798 = vshrl.u32 %v797, 7
        %v799 = vsub.s32 %v796, %v798
        %v800 = vrot.slane %v793, %v799
        %v801 = vcombine.low %v773, %v780
        %v803 = vunpack.c.l.s4 1983009808
        %v804 = vunpack.c.0.s8 %v803
        %v805 = vlaneseq
        %v806 = vshrl.u32 %v805, 7
        %v807 = vsub.s32 %v804, %v806
        %v808 = vrot.slane %v801, %v807
        %v809 = vcombine.low %v783, %v784
        %v811 = vunpack.c.l.s4 1983009808
        %v812 = vunpack.c.0.s8 %v811
        %v813 = vlaneseq
        %v814 = vshrl.u32 %v813, 7
        %v815 = vsub.s32 %v812, %v814
        %v816 = vrot.slane %v809, %v815
        %v817 = vcombine.low %v792, %v800
        %v818 = vcombine.high %v792, %v800
        %v820 = vunpack.c.l.s4 1934713408
        %v821 = vunpack.c.0.s8 %v820
        %v822 = vlaneseq
        %v823 = vshrl.u32 %v822, 7
        %v824 = vsub.s32 %v821, %v823
        %v825 = vrot.slane %v817, %v824
        %v827 = vunpack.c.l.s4 1934713408
        %v828 = vunpack.c.0.s8 %v827
        %v829 = vlaneseq
        %v830 = vshrl.u32 %v829, 7
        %v831 = vsub.s32 %v828, %v830
        %v832 = vrot.slane %v818, %v831
        %v833 = vcombine.low %v808, %v816
        %v834 = vcombine.high %v808, %v816
        %v836 = vunpack.c.l.s4 1934713408
        %v837 = vunpack.c.0.s8 %v836
        %v838 = vlaneseq
        %v839 = vshrl.u32 %v838, 7
        %v840 = vsub.s32 %v837, %v839
        %v841 = vrot.slane %v833, %v840
        %v843 = vunpack.c.l.s4 1934713408
        %v844 = vunpack.c.0.s8 %v843
        %v845 = vlaneseq
        %v846 = vshrl.u32 %v845, 7
        %v847 = vsub.s32 %v844, %v846
        %v848 = vrot.slane %v834, %v847
        %v849 = vcombine.low %v825, %v841
        %v850 = vcombine.high %v825, %v841
        %v851 = vcombine.low %v832, %v848
        %v852 = vcombine.high %v832, %v848
        %vm853 = vcmask 64512
        %v855 = vsel %vm853, %v553, 0
        %v858 = vsel %vm853, %v701, 0
        %860 = vmatprep.subr.mxu0 0.0
        %861 = vmatpush1.xpose.msra.mxu0 0.0
        %862 = vmatprep.subr.mxu0 0.0
        %863 = vmatpush1.xpose.msra.mxu0 0.0
        %864 = vmatprep.subr.mxu0 0.0
        %865 = vmatpush1.xpose.msra.mxu0 0.0
        %866 = vmatprep.subr.mxu0 0.0
        %867 = vmatpush1.xpose.msra.mxu0 0.0
        %868 = vmatprep.subr.mxu0 0.0
        %869 = vmatpush1.xpose.msra.mxu0 0.0
        %870 = vmatprep.subr.mxu0 0.0
        %871 = vmatpush1.xpose.msra.mxu0 0.0
        %872 = vmatprep.subr.mxu0 0.0
        %873 = vmatpush1.xpose.msra.mxu0 0.0
        %874 = vmatprep.subr.mxu0 0.0
        %875 = vmatpush1.xpose.msra.mxu0 0.0
        %876 = vmatprep.subr.mxu0 0.0
        %877 = vmatpush1.xpose.msra.mxu0 0.0
        %878 = vmatprep.subr.mxu0 0.0
        %879 = vmatpush1.xpose.msra.mxu0 0.0
        %880 = vmatprep.subr.mxu0 0.0
        %881 = vmatpush1.xpose.msra.mxu0 0.0
        %882 = vmatprep.subr.mxu0 0.0
        %883 = vmatpush1.xpose.msra.mxu0 0.0
        %884 = vmatprep.subr.mxu0 0.0
        %885 = vmatpush1.xpose.msra.mxu0 0.0
        %886 = vmatprep.subr.mxu0 0.0
        %887 = vmatpush1.xpose.msra.mxu0 0.0
        %888 = vmatprep.subr.mxu0 0.0
        %889 = vmatpush1.xpose.msra.mxu0 0.0
        %890 = vmatprep.subr.mxu0 0.0
        %891 = vmatpush1.xpose.msra.mxu0 %v858
        %892 = vmatprep.subr.mxu0 0.0
        %893 = vmatpush2.xpose.msra.mxu0 0.0
        %894 = vmatprep.subr.mxu0 0.0
        %895 = vmatpush2.xpose.msra.mxu0 0.0
        %896 = vmatprep.subr.mxu0 0.0
        %897 = vmatpush2.xpose.msra.mxu0 0.0
        %898 = vmatprep.subr.mxu0 0.0
        %899 = vmatpush2.xpose.msra.mxu0 0.0
        %900 = vmatprep.subr.mxu0 0.0
        %901 = vmatpush2.xpose.msra.mxu0 0.0
        %902 = vmatprep.subr.mxu0 0.0
        %903 = vmatpush2.xpose.msra.mxu0 0.0
        %904 = vmatprep.subr.mxu0 0.0
        %905 = vmatpush2.xpose.msra.mxu0 0.0
        %906 = vmatprep.subr.mxu0 0.0
        %907 = vmatpush2.xpose.msra.mxu0 0.0
        %908 = vmatprep.subr.mxu0 0.0
        %909 = vmatpush2.xpose.msra.mxu0 0.0
        %910 = vmatprep.subr.mxu0 0.0
        %911 = vmatpush2.xpose.msra.mxu0 0.0
        %912 = vmatprep.subr.mxu0 0.0
        %913 = vmatpush2.xpose.msra.mxu0 0.0
        %914 = vmatprep.subr.mxu0 0.0
        %915 = vmatpush2.xpose.msra.mxu0 0.0
        %916 = vmatprep.subr.mxu0 0.0
        %917 = vmatpush2.xpose.msra.mxu0 0.0
        %918 = vmatprep.subr.mxu0 0.0
        %919 = vmatpush2.xpose.msra.mxu0 0.0
        %920 = vmatprep.subr.mxu0 0.0
        %921 = vmatpush2.xpose.msra.mxu0 0.0
        %922 = vmatprep.subr.mxu0 0.0
        %923 = vmatpush2.xpose.msra.mxu0 0.0
        %924 = vmatprep.mubr.f32.mxu0 0.0
        %925 = vmatmul.mubr.f32.gmra.mxu0 %v855
        %v926 = vpop.f32.mrf.mxu0
        %v927 = vadd.f32 0.0, %v926
        %v928 = vpop.f32.mrf.mxu0
        %929 = vdwg.mxu0
        %v931 = vsel %vm853, %v554, 0
        %v934 = vsel %vm853, %v702, 0
        %936 = vmatprep.subr.mxu0 0.0
        %937 = vmatpush1.xpose.msra.mxu0 0.0
        %938 = vmatprep.subr.mxu0 0.0
        %939 = vmatpush1.xpose.msra.mxu0 0.0
        %940 = vmatprep.subr.mxu0 0.0
        %941 = vmatpush1.xpose.msra.mxu0 0.0
        %942 = vmatprep.subr.mxu0 0.0
        %943 = vmatpush1.xpose.msra.mxu0 0.0
        %944 = vmatprep.subr.mxu0 0.0
        %945 = vmatpush1.xpose.msra.mxu0 0.0
        %946 = vmatprep.subr.mxu0 0.0
        %947 = vmatpush1.xpose.msra.mxu0 0.0
        %948 = vmatprep.subr.mxu0 0.0
        %949 = vmatpush1.xpose.msra.mxu0 0.0
        %950 = vmatprep.subr.mxu0 0.0
        %951 = vmatpush1.xpose.msra.mxu0 0.0
        %952 = vmatprep.subr.mxu0 0.0
        %953 = vmatpush1.xpose.msra.mxu0 0.0
        %954 = vmatprep.subr.mxu0 0.0
        %955 = vmatpush1.xpose.msra.mxu0 0.0
        %956 = vmatprep.subr.mxu0 0.0
        %957 = vmatpush1.xpose.msra.mxu0 0.0
        %958 = vmatprep.subr.mxu0 0.0
        %959 = vmatpush1.xpose.msra.mxu0 0.0
        %960 = vmatprep.subr.mxu0 0.0
        %961 = vmatpush1.xpose.msra.mxu0 0.0
        %962 = vmatprep.subr.mxu0 0.0
        %963 = vmatpush1.xpose.msra.mxu0 0.0
        %964 = vmatprep.subr.mxu0 0.0
        %965 = vmatpush1.xpose.msra.mxu0 0.0
        %966 = vmatprep.subr.mxu0 0.0
        %967 = vmatpush1.xpose.msra.mxu0 %v934
        %968 = vmatprep.subr.mxu0 0.0
        %969 = vmatpush2.xpose.msra.mxu0 0.0
        %970 = vmatprep.subr.mxu0 0.0
        %971 = vmatpush2.xpose.msra.mxu0 0.0
        %972 = vmatprep.subr.mxu0 0.0
        %973 = vmatpush2.xpose.msra.mxu0 0.0
        %974 = vmatprep.subr.mxu0 0.0
        %975 = vmatpush2.xpose.msra.mxu0 0.0
        %976 = vmatprep.subr.mxu0 0.0
        %977 = vmatpush2.xpose.msra.mxu0 0.0
        %978 = vmatprep.subr.mxu0 0.0
        %979 = vmatpush2.xpose.msra.mxu0 0.0
        %980 = vmatprep.subr.mxu0 0.0
        %981 = vmatpush2.xpose.msra.mxu0 0.0
        %982 = vmatprep.subr.mxu0 0.0
        %983 = vmatpush2.xpose.msra.mxu0 0.0
        %984 = vmatprep.subr.mxu0 0.0
        %985 = vmatpush2.xpose.msra.mxu0 0.0
        %986 = vmatprep.subr.mxu0 0.0
        %987 = vmatpush2.xpose.msra.mxu0 0.0
        %988 = vmatprep.subr.mxu0 0.0
        %989 = vmatpush2.xpose.msra.mxu0 0.0
        %990 = vmatprep.subr.mxu0 0.0
        %991 = vmatpush2.xpose.msra.mxu0 0.0
        %992 = vmatprep.subr.mxu0 0.0
        %993 = vmatpush2.xpose.msra.mxu0 0.0
        %994 = vmatprep.subr.mxu0 0.0
        %995 = vmatpush2.xpose.msra.mxu0 0.0
        %996 = vmatprep.subr.mxu0 0.0
        %997 = vmatpush2.xpose.msra.mxu0 0.0
        %998 = vmatprep.subr.mxu0 0.0
        %999 = vmatpush2.xpose.msra.mxu0 0.0
        %1000 = vmatprep.mubr.f32.mxu0 0.0
        %1001 = vmatmul.mubr.f32.gmra.mxu0 %v931
        %v1002 = vpop.f32.mrf.mxu0
        %v1003 = vadd.f32 0.0, %v1002
        %v1004 = vpop.f32.mrf.mxu0
        %1005 = vdwg.mxu0
        %v1007 = vsel %vm853, %v555, 0
        %v1010 = vsel %vm853, %v703, 0
        %1012 = vmatprep.subr.mxu0 0.0
        %1013 = vmatpush1.xpose.msra.mxu0 0.0
        %1014 = vmatprep.subr.mxu0 0.0
        %1015 = vmatpush1.xpose.msra.mxu0 0.0
        %1016 = vmatprep.subr.mxu0 0.0
        %1017 = vmatpush1.xpose.msra.mxu0 0.0
        %1018 = vmatprep.subr.mxu0 0.0
        %1019 = vmatpush1.xpose.msra.mxu0 0.0
        %1020 = vmatprep.subr.mxu0 0.0
        %1021 = vmatpush1.xpose.msra.mxu0 0.0
        %1022 = vmatprep.subr.mxu0 0.0
        %1023 = vmatpush1.xpose.msra.mxu0 0.0
        %1024 = vmatprep.subr.mxu0 0.0
        %1025 = vmatpush1.xpose.msra.mxu0 0.0
        %1026 = vmatprep.subr.mxu0 0.0
        %1027 = vmatpush1.xpose.msra.mxu0 0.0
        %1028 = vmatprep.subr.mxu0 0.0
        %1029 = vmatpush1.xpose.msra.mxu0 0.0
        %1030 = vmatprep.subr.mxu0 0.0
        %1031 = vmatpush1.xpose.msra.mxu0 0.0
        %1032 = vmatprep.subr.mxu0 0.0
        %1033 = vmatpush1.xpose.msra.mxu0 0.0
        %1034 = vmatprep.subr.mxu0 0.0
        %1035 = vmatpush1.xpose.msra.mxu0 0.0
        %1036 = vmatprep.subr.mxu0 0.0
        %1037 = vmatpush1.xpose.msra.mxu0 0.0
        %1038 = vmatprep.subr.mxu0 0.0
        %1039 = vmatpush1.xpose.msra.mxu0 0.0
        %1040 = vmatprep.subr.mxu0 0.0
        %1041 = vmatpush1.xpose.msra.mxu0 0.0
        %1042 = vmatprep.subr.mxu0 0.0
        %1043 = vmatpush1.xpose.msra.mxu0 %v1010
        %1044 = vmatprep.subr.mxu0 0.0
        %1045 = vmatpush2.xpose.msra.mxu0 0.0
        %1046 = vmatprep.subr.mxu0 0.0
        %1047 = vmatpush2.xpose.msra.mxu0 0.0
        %1048 = vmatprep.subr.mxu0 0.0
        %1049 = vmatpush2.xpose.msra.mxu0 0.0
        %1050 = vmatprep.subr.mxu0 0.0
        %1051 = vmatpush2.xpose.msra.mxu0 0.0
        %1052 = vmatprep.subr.mxu0 0.0
        %1053 = vmatpush2.xpose.msra.mxu0 0.0
        %1054 = vmatprep.subr.mxu0 0.0
        %1055 = vmatpush2.xpose.msra.mxu0 0.0
        %1056 = vmatprep.subr.mxu0 0.0
        %1057 = vmatpush2.xpose.msra.mxu0 0.0
        %1058 = vmatprep.subr.mxu0 0.0
        %1059 = vmatpush2.xpose.msra.mxu0 0.0
        %1060 = vmatprep.subr.mxu0 0.0
        %1061 = vmatpush2.xpose.msra.mxu0 0.0
        %1062 = vmatprep.subr.mxu0 0.0
        %1063 = vmatpush2.xpose.msra.mxu0 0.0
        %1064 = vmatprep.subr.mxu0 0.0
        %1065 = vmatpush2.xpose.msra.mxu0 0.0
        %1066 = vmatprep.subr.mxu0 0.0
        %1067 = vmatpush2.xpose.msra.mxu0 0.0
        %1068 = vmatprep.subr.mxu0 0.0
        %1069 = vmatpush2.xpose.msra.mxu0 0.0
        %1070 = vmatprep.subr.mxu0 0.0
        %1071 = vmatpush2.xpose.msra.mxu0 0.0
        %1072 = vmatprep.subr.mxu0 0.0
        %1073 = vmatpush2.xpose.msra.mxu0 0.0
        %1074 = vmatprep.subr.mxu0 0.0
        %1075 = vmatpush2.xpose.msra.mxu0 0.0
        %1076 = vmatprep.mubr.f32.mxu0 0.0
        %1077 = vmatmul.mubr.f32.gmra.mxu0 %v1007
        %v1078 = vpop.f32.mrf.mxu0
        %v1079 = vadd.f32 0.0, %v1078
        %v1080 = vpop.f32.mrf.mxu0
        %1081 = vdwg.mxu0
        %v1083 = vsel %vm853, %v556, 0
        %v1086 = vsel %vm853, %v704, 0
        %1088 = vmatprep.subr.mxu0 0.0
        %1089 = vmatpush1.xpose.msra.mxu0 0.0
        %1090 = vmatprep.subr.mxu0 0.0
        %1091 = vmatpush1.xpose.msra.mxu0 0.0
        %1092 = vmatprep.subr.mxu0 0.0
        %1093 = vmatpush1.xpose.msra.mxu0 0.0
        %1094 = vmatprep.subr.mxu0 0.0
        %1095 = vmatpush1.xpose.msra.mxu0 0.0
        %1096 = vmatprep.subr.mxu0 0.0
        %1097 = vmatpush1.xpose.msra.mxu0 0.0
        %1098 = vmatprep.subr.mxu0 0.0
        %1099 = vmatpush1.xpose.msra.mxu0 0.0
        %1100 = vmatprep.subr.mxu0 0.0
        %1101 = vmatpush1.xpose.msra.mxu0 0.0
        %1102 = vmatprep.subr.mxu0 0.0
        %1103 = vmatpush1.xpose.msra.mxu0 0.0
        %1104 = vmatprep.subr.mxu0 0.0
        %1105 = vmatpush1.xpose.msra.mxu0 0.0
        %1106 = vmatprep.subr.mxu0 0.0
        %1107 = vmatpush1.xpose.msra.mxu0 0.0
        %1108 = vmatprep.subr.mxu0 0.0
        %1109 = vmatpush1.xpose.msra.mxu0 0.0
        %1110 = vmatprep.subr.mxu0 0.0
        %1111 = vmatpush1.xpose.msra.mxu0 0.0
        %1112 = vmatprep.subr.mxu0 0.0
        %1113 = vmatpush1.xpose.msra.mxu0 0.0
        %1114 = vmatprep.subr.mxu0 0.0
        %1115 = vmatpush1.xpose.msra.mxu0 0.0
        %1116 = vmatprep.subr.mxu0 0.0
        %1117 = vmatpush1.xpose.msra.mxu0 0.0
        %1118 = vmatprep.subr.mxu0 0.0
        %1119 = vmatpush1.xpose.msra.mxu0 %v1086
        %1120 = vmatprep.subr.mxu0 0.0
        %1121 = vmatpush2.xpose.msra.mxu0 0.0
        %1122 = vmatprep.subr.mxu0 0.0
        %1123 = vmatpush2.xpose.msra.mxu0 0.0
        %1124 = vmatprep.subr.mxu0 0.0
        %1125 = vmatpush2.xpose.msra.mxu0 0.0
        %1126 = vmatprep.subr.mxu0 0.0
        %1127 = vmatpush2.xpose.msra.mxu0 0.0
        %1128 = vmatprep.subr.mxu0 0.0
        %1129 = vmatpush2.xpose.msra.mxu0 0.0
        %1130 = vmatprep.subr.mxu0 0.0
        %1131 = vmatpush2.xpose.msra.mxu0 0.0
        %1132 = vmatprep.subr.mxu0 0.0
        %1133 = vmatpush2.xpose.msra.mxu0 0.0
        %1134 = vmatprep.subr.mxu0 0.0
        %1135 = vmatpush2.xpose.msra.mxu0 0.0
        %1136 = vmatprep.subr.mxu0 0.0
        %1137 = vmatpush2.xpose.msra.mxu0 0.0
        %1138 = vmatprep.subr.mxu0 0.0
        %1139 = vmatpush2.xpose.msra.mxu0 0.0
        %1140 = vmatprep.subr.mxu0 0.0
        %1141 = vmatpush2.xpose.msra.mxu0 0.0
        %1142 = vmatprep.subr.mxu0 0.0
        %1143 = vmatpush2.xpose.msra.mxu0 0.0
        %1144 = vmatprep.subr.mxu0 0.0
        %1145 = vmatpush2.xpose.msra.mxu0 0.0
        %1146 = vmatprep.subr.mxu0 0.0
        %1147 = vmatpush2.xpose.msra.mxu0 0.0
        %1148 = vmatprep.subr.mxu0 0.0
        %1149 = vmatpush2.xpose.msra.mxu0 0.0
        %1150 = vmatprep.subr.mxu0 0.0
        %1151 = vmatpush2.xpose.msra.mxu0 0.0
        %1152 = vmatprep.mubr.f32.mxu0 0.0
        %1153 = vmatmul.mubr.f32.gmra.mxu0 %v1083
        %v1154 = vpop.f32.mrf.mxu0
        %v1155 = vadd.f32 0.0, %v1154
        %v1156 = vpop.f32.mrf.mxu0
        %1157 = vdwg.mxu0
        %v1158 = vsel %vm853, %v927, -inf
        %1159 = vmax.xlane.f32.xlu0 %v1158
        %v1160 = vpop.xlane.xlu0 %1159
        %v1161 = vsel %vm853, %v1003, -inf
        %1162 = vmax.xlane.f32.xlu0 %v1161
        %v1163 = vpop.xlane.xlu0 %1162
        %v1164 = vsel %vm853, %v1079, -inf
        %1165 = vmax.xlane.f32.xlu0 %v1164
        %v1166 = vpop.xlane.xlu0 %1165
        %v1167 = vsel %vm853, %v1155, -inf
        %1168 = vmax.xlane.f32.xlu0 %v1167
        %v1169 = vpop.xlane.xlu0 %1168
        %v1170 = vsub.f32 %v927, %v1160
        %v1171 = vsub.f32 %v1003, %v1163
        %v1172 = vsub.f32 %v1079, %v1166
        %v1173 = vsub.f32 %v1155, %v1169
        %v1174 = vmul.f32 %v1170, 1.442695
        %v1175 = vpow.pop %v1174
        %v1176 = vmul.f32 %v1171, 1.442695
        %v1177 = vpow.pop %v1176
        %v1178 = vmul.f32 %v1172, 1.442695
        %v1179 = vpow.pop %v1178
        %v1180 = vmul.f32 %v1173, 1.442695
        %v1181 = vpow.pop %v1180
        %v1182 = vsel %vm853, %v1175, 0.0
        %1183 = vadd.xlane.f32.xlu0 %v1182
        %v1184 = vpop.xlane.xlu0 %1183
        %v1185 = vsel %vm853, %v1177, 0.0
        %1186 = vadd.xlane.f32.xlu0 %v1185
        %v1187 = vpop.xlane.xlu0 %1186
        %v1188 = vsel %vm853, %v1179, 0.0
        %1189 = vadd.xlane.f32.xlu0 %v1188
        %v1190 = vpop.xlane.xlu0 %1189
        %v1191 = vsel %vm853, %v1181, 0.0
        %1192 = vadd.xlane.f32.xlu0 %v1191
        %v1193 = vpop.xlane.xlu0 %1192
        %v1195 = vsel %vm853, %v1175, 0
        %1197 = vmatprep.subr.mxu0 0.0
        %1198 = vmatpush1.msra.mxu0 0.0
        %1199 = vmatprep.subr.mxu0 0.0
        %1200 = vmatpush1.msra.mxu0 0.0
        %1201 = vmatprep.subr.mxu0 0.0
        %1202 = vmatpush1.msra.mxu0 0.0
        %1203 = vmatprep.subr.mxu0 0.0
        %1204 = vmatpush1.msra.mxu0 0.0
        %1205 = vmatprep.subr.mxu0 0.0
        %1206 = vmatpush1.msra.mxu0 0.0
        %1207 = vmatprep.subr.mxu0 0.0
        %1208 = vmatpush1.msra.mxu0 0.0
        %1209 = vmatprep.subr.mxu0 0.0
        %1210 = vmatpush1.msra.mxu0 0.0
        %1211 = vmatprep.subr.mxu0 0.0
        %1212 = vmatpush1.msra.mxu0 0.0
        %1213 = vmatprep.subr.mxu0 0.0
        %1214 = vmatpush1.msra.mxu0 0.0
        %1215 = vmatprep.subr.mxu0 0.0
        %1216 = vmatpush1.msra.mxu0 0.0
        %1217 = vmatprep.subr.mxu0 0.0
        %1218 = vmatpush1.msra.mxu0 0.0
        %1219 = vmatprep.subr.mxu0 0.0
        %1220 = vmatpush1.msra.mxu0 0.0
        %1221 = vmatprep.subr.mxu0 0.0
        %1222 = vmatpush1.msra.mxu0 0.0
        %1223 = vmatprep.subr.mxu0 0.0
        %1224 = vmatpush1.msra.mxu0 0.0
        %1225 = vmatprep.subr.mxu0 0.0
        %1226 = vmatpush1.msra.mxu0 0.0
        %1227 = vmatprep.subr.mxu0 0.0
        %1228 = vmatpush1.msra.mxu0 %v849
        %1229 = vmatprep.subr.mxu0 0.0
        %1230 = vmatpush2.msra.mxu0 0.0
        %1231 = vmatprep.subr.mxu0 0.0
        %1232 = vmatpush2.msra.mxu0 0.0
        %1233 = vmatprep.subr.mxu0 0.0
        %1234 = vmatpush2.msra.mxu0 0.0
        %1235 = vmatprep.subr.mxu0 0.0
        %1236 = vmatpush2.msra.mxu0 0.0
        %1237 = vmatprep.subr.mxu0 0.0
        %1238 = vmatpush2.msra.mxu0 0.0
        %1239 = vmatprep.subr.mxu0 0.0
        %1240 = vmatpush2.msra.mxu0 0.0
        %1241 = vmatprep.subr.mxu0 0.0
        %1242 = vmatpush2.msra.mxu0 0.0
        %1243 = vmatprep.subr.mxu0 0.0
        %1244 = vmatpush2.msra.mxu0 0.0
        %1245 = vmatprep.subr.mxu0 0.0
        %1246 = vmatpush2.msra.mxu0 0.0
        %1247 = vmatprep.subr.mxu0 0.0
        %1248 = vmatpush2.msra.mxu0 0.0
        %1249 = vmatprep.subr.mxu0 0.0
        %1250 = vmatpush2.msra.mxu0 0.0
        %1251 = vmatprep.subr.mxu0 0.0
        %1252 = vmatpush2.msra.mxu0 0.0
        %1253 = vmatprep.subr.mxu0 0.0
        %1254 = vmatpush2.msra.mxu0 0.0
        %1255 = vmatprep.subr.mxu0 0.0
        %1256 = vmatpush2.msra.mxu0 0.0
        %1257 = vmatprep.subr.mxu0 0.0
        %1258 = vmatpush2.msra.mxu0 0.0
        %1259 = vmatprep.subr.mxu0 0.0
        %1260 = vmatpush2.msra.mxu0 0.0
        %1261 = vmatprep.mubr.f32.mxu0 0.0
        %1262 = vmatmul.mubr.f32.gmra.mxu0 %v1195
        %v1263 = vpop.f32.mrf.mxu0
        %v1264 = vadd.f32 0.0, %v1263
        %v1265 = vpop.f32.mrf.mxu0
        %1266 = vdwg.mxu0
        %v1268 = vsel %vm853, %v1177, 0
        %1270 = vmatprep.subr.mxu0 0.0
        %1271 = vmatpush1.msra.mxu0 0.0
        %1272 = vmatprep.subr.mxu0 0.0
        %1273 = vmatpush1.msra.mxu0 0.0
        %1274 = vmatprep.subr.mxu0 0.0
        %1275 = vmatpush1.msra.mxu0 0.0
        %1276 = vmatprep.subr.mxu0 0.0
        %1277 = vmatpush1.msra.mxu0 0.0
        %1278 = vmatprep.subr.mxu0 0.0
        %1279 = vmatpush1.msra.mxu0 0.0
        %1280 = vmatprep.subr.mxu0 0.0
        %1281 = vmatpush1.msra.mxu0 0.0
        %1282 = vmatprep.subr.mxu0 0.0
        %1283 = vmatpush1.msra.mxu0 0.0
        %1284 = vmatprep.subr.mxu0 0.0
        %1285 = vmatpush1.msra.mxu0 0.0
        %1286 = vmatprep.subr.mxu0 0.0
        %1287 = vmatpush1.msra.mxu0 0.0
        %1288 = vmatprep.subr.mxu0 0.0
        %1289 = vmatpush1.msra.mxu0 0.0
        %1290 = vmatprep.subr.mxu0 0.0
        %1291 = vmatpush1.msra.mxu0 0.0
        %1292 = vmatprep.subr.mxu0 0.0
        %1293 = vmatpush1.msra.mxu0 0.0
        %1294 = vmatprep.subr.mxu0 0.0
        %1295 = vmatpush1.msra.mxu0 0.0
        %1296 = vmatprep.subr.mxu0 0.0
        %1297 = vmatpush1.msra.mxu0 0.0
        %1298 = vmatprep.subr.mxu0 0.0
        %1299 = vmatpush1.msra.mxu0 0.0
        %1300 = vmatprep.subr.mxu0 0.0
        %1301 = vmatpush1.msra.mxu0 %v850
        %1302 = vmatprep.subr.mxu0 0.0
        %1303 = vmatpush2.msra.mxu0 0.0
        %1304 = vmatprep.subr.mxu0 0.0
        %1305 = vmatpush2.msra.mxu0 0.0
        %1306 = vmatprep.subr.mxu0 0.0
        %1307 = vmatpush2.msra.mxu0 0.0
        %1308 = vmatprep.subr.mxu0 0.0
        %1309 = vmatpush2.msra.mxu0 0.0
        %1310 = vmatprep.subr.mxu0 0.0
        %1311 = vmatpush2.msra.mxu0 0.0
        %1312 = vmatprep.subr.mxu0 0.0
        %1313 = vmatpush2.msra.mxu0 0.0
        %1314 = vmatprep.subr.mxu0 0.0
        %1315 = vmatpush2.msra.mxu0 0.0
        %1316 = vmatprep.subr.mxu0 0.0
        %1317 = vmatpush2.msra.mxu0 0.0
        %1318 = vmatprep.subr.mxu0 0.0
        %1319 = vmatpush2.msra.mxu0 0.0
        %1320 = vmatprep.subr.mxu0 0.0
        %1321 = vmatpush2.msra.mxu0 0.0
        %1322 = vmatprep.subr.mxu0 0.0
        %1323 = vmatpush2.msra.mxu0 0.0
        %1324 = vmatprep.subr.mxu0 0.0
        %1325 = vmatpush2.msra.mxu0 0.0
        %1326 = vmatprep.subr.mxu0 0.0
        %1327 = vmatpush2.msra.mxu0 0.0
        %1328 = vmatprep.subr.mxu0 0.0
        %1329 = vmatpush2.msra.mxu0 0.0
        %1330 = vmatprep.subr.mxu0 0.0
        %1331 = vmatpush2.msra.mxu0 0.0
        %1332 = vmatprep.subr.mxu0 0.0
        %1333 = vmatpush2.msra.mxu0 0.0
        %1334 = vmatprep.mubr.f32.mxu0 0.0
        %1335 = vmatmul.mubr.f32.gmra.mxu0 %v1268
        %v1336 = vpop.f32.mrf.mxu0
        %v1337 = vadd.f32 0.0, %v1336
        %v1338 = vpop.f32.mrf.mxu0
        %1339 = vdwg.mxu0
        %v1341 = vsel %vm853, %v1179, 0
        %1343 = vmatprep.subr.mxu0 0.0
        %1344 = vmatpush1.msra.mxu0 0.0
        %1345 = vmatprep.subr.mxu0 0.0
        %1346 = vmatpush1.msra.mxu0 0.0
        %1347 = vmatprep.subr.mxu0 0.0
        %1348 = vmatpush1.msra.mxu0 0.0
        %1349 = vmatprep.subr.mxu0 0.0
        %1350 = vmatpush1.msra.mxu0 0.0
        %1351 = vmatprep.subr.mxu0 0.0
        %1352 = vmatpush1.msra.mxu0 0.0
        %1353 = vmatprep.subr.mxu0 0.0
        %1354 = vmatpush1.msra.mxu0 0.0
        %1355 = vmatprep.subr.mxu0 0.0
        %1356 = vmatpush1.msra.mxu0 0.0
        %1357 = vmatprep.subr.mxu0 0.0
        %1358 = vmatpush1.msra.mxu0 0.0
        %1359 = vmatprep.subr.mxu0 0.0
        %1360 = vmatpush1.msra.mxu0 0.0
        %1361 = vmatprep.subr.mxu0 0.0
        %1362 = vmatpush1.msra.mxu0 0.0
        %1363 = vmatprep.subr.mxu0 0.0
        %1364 = vmatpush1.msra.mxu0 0.0
        %1365 = vmatprep.subr.mxu0 0.0
        %1366 = vmatpush1.msra.mxu0 0.0
        %1367 = vmatprep.subr.mxu0 0.0
        %1368 = vmatpush1.msra.mxu0 0.0
        %1369 = vmatprep.subr.mxu0 0.0
        %1370 = vmatpush1.msra.mxu0 0.0
        %1371 = vmatprep.subr.mxu0 0.0
        %1372 = vmatpush1.msra.mxu0 0.0
        %1373 = vmatprep.subr.mxu0 0.0
        %1374 = vmatpush1.msra.mxu0 %v851
        %1375 = vmatprep.subr.mxu0 0.0
        %1376 = vmatpush2.msra.mxu0 0.0
        %1377 = vmatprep.subr.mxu0 0.0
        %1378 = vmatpush2.msra.mxu0 0.0
        %1379 = vmatprep.subr.mxu0 0.0
        %1380 = vmatpush2.msra.mxu0 0.0
        %1381 = vmatprep.subr.mxu0 0.0
        %1382 = vmatpush2.msra.mxu0 0.0
        %1383 = vmatprep.subr.mxu0 0.0
        %1384 = vmatpush2.msra.mxu0 0.0
        %1385 = vmatprep.subr.mxu0 0.0
        %1386 = vmatpush2.msra.mxu0 0.0
        %1387 = vmatprep.subr.mxu0 0.0
        %1388 = vmatpush2.msra.mxu0 0.0
        %1389 = vmatprep.subr.mxu0 0.0
        %1390 = vmatpush2.msra.mxu0 0.0
        %1391 = vmatprep.subr.mxu0 0.0
        %1392 = vmatpush2.msra.mxu0 0.0
        %1393 = vmatprep.subr.mxu0 0.0
        %1394 = vmatpush2.msra.mxu0 0.0
        %1395 = vmatprep.subr.mxu0 0.0
        %1396 = vmatpush2.msra.mxu0 0.0
        %1397 = vmatprep.subr.mxu0 0.0
        %1398 = vmatpush2.msra.mxu0 0.0
        %1399 = vmatprep.subr.mxu0 0.0
        %1400 = vmatpush2.msra.mxu0 0.0
        %1401 = vmatprep.subr.mxu0 0.0
        %1402 = vmatpush2.msra.mxu0 0.0
        %1403 = vmatprep.subr.mxu0 0.0
        %1404 = vmatpush2.msra.mxu0 0.0
        %1405 = vmatprep.subr.mxu0 0.0
        %1406 = vmatpush2.msra.mxu0 0.0
        %1407 = vmatprep.mubr.f32.mxu0 0.0
        %1408 = vmatmul.mubr.f32.gmra.mxu0 %v1341
        %v1409 = vpop.f32.mrf.mxu0
        %v1410 = vadd.f32 0.0, %v1409
        %v1411 = vpop.f32.mrf.mxu0
        %1412 = vdwg.mxu0
        %v1414 = vsel %vm853, %v1181, 0
        %1416 = vmatprep.subr.mxu0 0.0
        %1417 = vmatpush1.msra.mxu0 0.0
        %1418 = vmatprep.subr.mxu0 0.0
        %1419 = vmatpush1.msra.mxu0 0.0
        %1420 = vmatprep.subr.mxu0 0.0
        %1421 = vmatpush1.msra.mxu0 0.0
        %1422 = vmatprep.subr.mxu0 0.0
        %1423 = vmatpush1.msra.mxu0 0.0
        %1424 = vmatprep.subr.mxu0 0.0
        %1425 = vmatpush1.msra.mxu0 0.0
        %1426 = vmatprep.subr.mxu0 0.0
        %1427 = vmatpush1.msra.mxu0 0.0
        %1428 = vmatprep.subr.mxu0 0.0
        %1429 = vmatpush1.msra.mxu0 0.0
        %1430 = vmatprep.subr.mxu0 0.0
        %1431 = vmatpush1.msra.mxu0 0.0
        %1432 = vmatprep.subr.mxu0 0.0
        %1433 = vmatpush1.msra.mxu0 0.0
        %1434 = vmatprep.subr.mxu0 0.0
        %1435 = vmatpush1.msra.mxu0 0.0
        %1436 = vmatprep.subr.mxu0 0.0
        %1437 = vmatpush1.msra.mxu0 0.0
        %1438 = vmatprep.subr.mxu0 0.0
        %1439 = vmatpush1.msra.mxu0 0.0
        %1440 = vmatprep.subr.mxu0 0.0
        %1441 = vmatpush1.msra.mxu0 0.0
        %1442 = vmatprep.subr.mxu0 0.0
        %1443 = vmatpush1.msra.mxu0 0.0
        %1444 = vmatprep.subr.mxu0 0.0
        %1445 = vmatpush1.msra.mxu0 0.0
        %1446 = vmatprep.subr.mxu0 0.0
        %1447 = vmatpush1.msra.mxu0 %v852
        %1448 = vmatprep.subr.mxu0 0.0
        %1449 = vmatpush2.msra.mxu0 0.0
        %1450 = vmatprep.subr.mxu0 0.0
        %1451 = vmatpush2.msra.mxu0 0.0
        %1452 = vmatprep.subr.mxu0 0.0
        %1453 = vmatpush2.msra.mxu0 0.0
        %1454 = vmatprep.subr.mxu0 0.0
        %1455 = vmatpush2.msra.mxu0 0.0
        %1456 = vmatprep.subr.mxu0 0.0
        %1457 = vmatpush2.msra.mxu0 0.0
        %1458 = vmatprep.subr.mxu0 0.0
        %1459 = vmatpush2.msra.mxu0 0.0
        %1460 = vmatprep.subr.mxu0 0.0
        %1461 = vmatpush2.msra.mxu0 0.0
        %1462 = vmatprep.subr.mxu0 0.0
        %1463 = vmatpush2.msra.mxu0 0.0
        %1464 = vmatprep.subr.mxu0 0.0
        %1465 = vmatpush2.msra.mxu0 0.0
        %1466 = vmatprep.subr.mxu0 0.0
        %1467 = vmatpush2.msra.mxu0 0.0
        %1468 = vmatprep.subr.mxu0 0.0
        %1469 = vmatpush2.msra.mxu0 0.0
        %1470 = vmatprep.subr.mxu0 0.0
        %1471 = vmatpush2.msra.mxu0 0.0
        %1472 = vmatprep.subr.mxu0 0.0
        %1473 = vmatpush2.msra.mxu0 0.0
        %1474 = vmatprep.subr.mxu0 0.0
        %1475 = vmatpush2.msra.mxu0 0.0
        %1476 = vmatprep.subr.mxu0 0.0
        %1477 = vmatpush2.msra.mxu0 0.0
        %1478 = vmatprep.subr.mxu0 0.0
        %1479 = vmatpush2.msra.mxu0 0.0
        %1480 = vmatprep.mubr.f32.mxu0 0.0
        %1481 = vmatmul.mubr.f32.gmra.mxu0 %v1414
        %v1482 = vpop.f32.mrf.mxu0
        %v1483 = vadd.f32 0.0, %v1482
        %v1484 = vpop.f32.mrf.mxu0
        %1485 = vdwg.mxu0
        %v1486 = vrcp.pop %v1184
        %v1487 = vmul.f32 %v1264, %v1486
        %v1488 = vrcp.pop %v1187
        %v1489 = vmul.f32 %v1337, %v1488
        %v1490 = vrcp.pop %v1190
        %v1491 = vmul.f32 %v1410, %v1490
        %v1492 = vrcp.pop %v1193
        %v1493 = vmul.f32 %v1483, %v1492
        %v1494 = vcombine.low %v1487, %v1491
        %v1495 = vcombine.high %v1487, %v1491
        %v1497 = vunpack.c.l.s4 1983009808
        %v1498 = vunpack.c.0.s8 %v1497
        %v1499 = vlaneseq
        %v1500 = vshrl.u32 %v1499, 7
        %v1501 = vsub.s32 %v1498, %v1500
        %v1502 = vrot.slane %v1494, %v1501
        %v1504 = vunpack.c.l.s4 1983009808
        %v1505 = vunpack.c.0.s8 %v1504
        %v1506 = vlaneseq
        %v1507 = vshrl.u32 %v1506, 7
        %v1508 = vsub.s32 %v1505, %v1507
        %v1509 = vrot.slane %v1495, %v1508
        %v1510 = vcombine.low %v1489, %v1493
        %v1511 = vcombine.high %v1489, %v1493
        %v1513 = vunpack.c.l.s4 1983009808
        %v1514 = vunpack.c.0.s8 %v1513
        %v1515 = vlaneseq
        %v1516 = vshrl.u32 %v1515, 7
        %v1517 = vsub.s32 %v1514, %v1516
        %v1518 = vrot.slane %v1510, %v1517
        %v1520 = vunpack.c.l.s4 1983009808
        %v1521 = vunpack.c.0.s8 %v1520
        %v1522 = vlaneseq
        %v1523 = vshrl.u32 %v1522, 7
        %v1524 = vsub.s32 %v1521, %v1523
        %v1525 = vrot.slane %v1511, %v1524
        %v1526 = vcombine.low %v1502, %v1518
        %v1527 = vcombine.high %v1502, %v1518
        %v1529 = vunpack.c.l.s4 1934713408
        %v1530 = vunpack.c.0.s8 %v1529
        %v1531 = vlaneseq
        %v1532 = vshrl.u32 %v1531, 7
        %v1533 = vsub.s32 %v1530, %v1532
        %v1534 = vrot.slane %v1526, %v1533
        %v1536 = vunpack.c.l.s4 1934713408
        %v1537 = vunpack.c.0.s8 %v1536
        %v1538 = vlaneseq
        %v1539 = vshrl.u32 %v1538, 7
        %v1540 = vsub.s32 %v1537, %v1539
        %v1541 = vrot.slane %v1527, %v1540
        %v1542 = vcombine.low %v1509, %v1525
        %v1543 = vcombine.high %v1509, %v1525
        %v1545 = vunpack.c.l.s4 1934713408
        %v1546 = vunpack.c.0.s8 %v1545
        %v1547 = vlaneseq
        %v1548 = vshrl.u32 %v1547, 7
        %v1549 = vsub.s32 %v1546, %v1548
        %v1550 = vrot.slane %v1542, %v1549
        %v1552 = vunpack.c.l.s4 1934713408
        %v1553 = vunpack.c.0.s8 %v1552
        %v1554 = vlaneseq
        %v1555 = vshrl.u32 %v1554, 7
        %v1556 = vsub.s32 %v1553, %v1555
        %v1557 = vrot.slane %v1543, %v1556
        %v1558 = vcombine.high %v1534, 0.0
        %v1559 = vcombine.high %v1541, 0.0
        %v1560 = vcombine.high %v1550, 0.0
        %v1561 = vcombine.high %v1557, 0.0
        %v1562 = vcombine.low %v1534, %v1541
        %v1564 = vunpack.c.l.s4 1983009808
        %v1565 = vunpack.c.0.s8 %v1564
        %v1566 = vlaneseq
        %v1567 = vshrl.u32 %v1566, 7
        %v1568 = vsub.s32 %v1565, %v1567
        %v1569 = vrot.slane %v1562, %v1568
        %v1570 = vcombine.low %v1558, %v1559
        %v1572 = vunpack.c.l.s4 1983009808
        %v1573 = vunpack.c.0.s8 %v1572
        %v1574 = vlaneseq
        %v1575 = vshrl.u32 %v1574, 7
        %v1576 = vsub.s32 %v1573, %v1575
        %v1577 = vrot.slane %v1570, %v1576
        %v1578 = vcombine.low %v1550, %v1557
        %v1580 = vunpack.c.l.s4 1983009808
        %v1581 = vunpack.c.0.s8 %v1580
        %v1582 = vlaneseq
        %v1583 = vshrl.u32 %v1582, 7
        %v1584 = vsub.s32 %v1581, %v1583
        %v1585 = vrot.slane %v1578, %v1584
        %v1586 = vcombine.low %v1560, %v1561
        %v1588 = vunpack.c.l.s4 1983009808
        %v1589 = vunpack.c.0.s8 %v1588
        %v1590 = vlaneseq
        %v1591 = vshrl.u32 %v1590, 7
        %v1592 = vsub.s32 %v1589, %v1591
        %v1593 = vrot.slane %v1586, %v1592
        %v1594 = vcombine.low %v1569, %v1577
        %v1595 = vcombine.high %v1569, %v1577
        %v1597 = vunpack.c.l.s4 1934713408
        %v1598 = vunpack.c.0.s8 %v1597
        %v1599 = vlaneseq
        %v1600 = vshrl.u32 %v1599, 7
        %v1601 = vsub.s32 %v1598, %v1600
        %v1602 = vrot.slane %v1594, %v1601
        %v1604 = vunpack.c.l.s4 1934713408
        %v1605 = vunpack.c.0.s8 %v1604
        %v1606 = vlaneseq
        %v1607 = vshrl.u32 %v1606, 7
        %v1608 = vsub.s32 %v1605, %v1607
        %v1609 = vrot.slane %v1595, %v1608
        %v1610 = vcombine.low %v1585, %v1593
        %v1611 = vcombine.high %v1585, %v1593
        %v1613 = vunpack.c.l.s4 1934713408
        %v1614 = vunpack.c.0.s8 %v1613
        %v1615 = vlaneseq
        %v1616 = vshrl.u32 %v1615, 7
        %v1617 = vsub.s32 %v1614, %v1616
        %v1618 = vrot.slane %v1610, %v1617
        %v1620 = vunpack.c.l.s4 1934713408
        %v1621 = vunpack.c.0.s8 %v1620
        %v1622 = vlaneseq
        %v1623 = vshrl.u32 %v1622, 7
        %v1624 = vsub.s32 %v1621, %v1623
        %v1625 = vrot.slane %v1611, %v1624
        %v1626 = vcombine.low %v1602, %v1618
        %v1627 = vcombine.high %v1602, %v1618
        %v1628 = vcombine.low %v1609, %v1625
        %v1629 = vcombine.high %v1609, %v1625
        %1631 = vrot.lane.b32.xlu0 %v1627, 8
        %v1632 = vpop.permute.xlu0 %1631
        %1635 = vrot.lane.b32.xlu0 %v1628, 16
        %v1636 = vpop.permute.xlu0 %1635
        %1639 = vrot.lane.b32.xlu0 %v1629, 24
        %v1640 = vpop.permute.xlu0 %1639
        %v1642 = vsel %vm853, %v1626, %v1632
        %vm1643 = vcmask 130048
        %v1644 = vsel %vm1643, %v1642, %v1636
        %vm1645 = vcmask 195584
        %v1646 = vsel %vm1645, %v1644, %v1640
        %v1647 = vld [vmem:[%s3] sm:$0xff]
        %v1648 = vld [vmem:[%s3 + $0x8] sm:$0xff]
        %v1649 = vld [vmem:[%s3 + $0x10] sm:$0xff]
        %v1650 = vld [vmem:[%s3 + $0x18] sm:$0xff]
        %v1651 = vlaneseq
        %v1652 = vshrl.u32 %v1651, 7
        %v1653 = vsub.s32 4, %v1652
        %v1654 = vrot.slane %v308, %v1653
        %v1656 = vsel %vm309, %v1646, 0
        %1658 = vmatprep.subr.mxu0 0.0
        %1659 = vmatpush1.msra.mxu0 0.0
        %1660 = vmatprep.subr.mxu0 0.0
        %1661 = vmatpush1.msra.mxu0 0.0
        %1662 = vmatprep.subr.mxu0 0.0
        %1663 = vmatpush1.msra.mxu0 0.0
        %1664 = vmatprep.subr.mxu0 0.0
        %1665 = vmatpush1.msra.mxu0 0.0
        %1666 = vmatprep.subr.mxu0 0.0
        %1667 = vmatpush1.msra.mxu0 0.0
        %1668 = vmatprep.subr.mxu0 0.0
        %1669 = vmatpush1.msra.mxu0 0.0
        %1670 = vmatprep.subr.mxu0 0.0
        %1671 = vmatpush1.msra.mxu0 0.0
        %1672 = vmatprep.subr.mxu0 0.0
        %1673 = vmatpush1.msra.mxu0 0.0
        %1674 = vmatprep.subr.mxu0 0.0
        %1675 = vmatpush1.msra.mxu0 0.0
        %1676 = vmatprep.subr.mxu0 0.0
        %1677 = vmatpush1.msra.mxu0 0.0
        %1678 = vmatprep.subr.mxu0 0.0
        %1679 = vmatpush1.msra.mxu0 0.0
        %1680 = vmatprep.subr.mxu0 0.0
        %1681 = vmatpush1.msra.mxu0 0.0
        %1682 = vmatprep.subr.mxu0 0.0
        %1683 = vmatpush1.msra.mxu0 %v1650
        %1684 = vmatprep.subr.mxu0 0.0
        %1685 = vmatpush1.msra.mxu0 %v1649
        %1686 = vmatprep.subr.mxu0 0.0
        %1687 = vmatpush1.msra.mxu0 %v1648
        %1688 = vmatprep.subr.mxu0 0.0
        %1689 = vmatpush1.msra.mxu0 %v1647
        %1690 = vmatprep.subr.mxu0 0.0
        %1691 = vmatpush2.msra.mxu0 0.0
        %1692 = vmatprep.subr.mxu0 0.0
        %1693 = vmatpush2.msra.mxu0 0.0
        %1694 = vmatprep.subr.mxu0 0.0
        %1695 = vmatpush2.msra.mxu0 0.0
        %1696 = vmatprep.subr.mxu0 0.0
        %1697 = vmatpush2.msra.mxu0 0.0
        %1698 = vmatprep.subr.mxu0 0.0
        %1699 = vmatpush2.msra.mxu0 0.0
        %1700 = vmatprep.subr.mxu0 0.0
        %1701 = vmatpush2.msra.mxu0 0.0
        %1702 = vmatprep.subr.mxu0 0.0
        %1703 = vmatpush2.msra.mxu0 0.0
        %1704 = vmatprep.subr.mxu0 0.0
        %1705 = vmatpush2.msra.mxu0 0.0
        %1706 = vmatprep.subr.mxu0 0.0
        %1707 = vmatpush2.msra.mxu0 0.0
        %1708 = vmatprep.subr.mxu0 0.0
        %1709 = vmatpush2.msra.mxu0 0.0
        %1710 = vmatprep.subr.mxu0 0.0
        %1711 = vmatpush2.msra.mxu0 0.0
        %1712 = vmatprep.subr.mxu0 0.0
        %1713 = vmatpush2.msra.mxu0 0.0
        %1714 = vmatprep.subr.mxu0 0.0
        %1715 = vmatpush2.msra.mxu0 0.0
        %1716 = vmatprep.subr.mxu0 0.0
        %1717 = vmatpush2.msra.mxu0 0.0
        %1718 = vmatprep.subr.mxu0 0.0
        %1719 = vmatpush2.msra.mxu0 0.0
        %1720 = vmatprep.subr.mxu0 0.0
        %1721 = vmatpush2.msra.mxu0 0.0
        %1722 = vmatprep.mubr.f32.mxu0 0.0
        %1723 = vmatmul.mubr.f32.gmra.mxu0 %v1656
        %v1724 = vpop.f32.mrf.mxu0
        %v1725 = vadd.f32 %v1654, %v1724
        %v1726 = vpop.f32.mrf.mxu0
        %1727 = vdwg.mxu0
        %v1728 = vadd.f32 %v307, %v1725
        %v1729 = vsel %vm309, %v1728, 0.0
        %1730 = vadd.xlane.f32.xlu0 %v1729
        %v1731 = vpop.xlane.xlu0 %1730
        %v1732 = vmul.f32 %v1731, %v313
        %v1733 = vsub.f32 %v1728, %v1732
        %v1734 = vmul.f32 %v1733, %v1733
        %v1735 = vsel %vm309, %v1734, 0.0
        %1736 = vadd.xlane.f32.xlu0 %v1735
        %v1737 = vpop.xlane.xlu0 %1736
        %v1738 = vmul.f32 %v1737, %v313
        %v1739 = vadd.f32 %v1738, 1e-05
        %v1740 = vrsqrt.pop %v1739
        %v1741 = vmul.f32 %v1733, %v1740
        %v1742 = vlaneseq
        %v1743 = vshrl.u32 %v1742, 7
        %v1744 = vsub.s32 2, %v1743
        %v1745 = vrot.slane %v308, %v1744
        %v1746 = vmul.f32 %v1741, %v1745
        %v1747 = vlaneseq
        %v1748 = vshrl.u32 %v1747, 7
        %v1749 = vsub.s32 3, %v1748
        %v1750 = vrot.slane %v308, %v1749
        %v1751 = vadd.f32 %v1746, %v1750
        %v1752 = vld [vmem:[%s4] sm:$0xff]
        %v1753 = vld [vmem:[%s4 + $0x8] sm:$0xff]
        %v1754 = vld [vmem:[%s4 + $0x10] sm:$0xff]
        %v1755 = vld [vmem:[%s4 + $0x18] sm:$0xff]
        %v1756 = vld [vmem:[%s5] sm:$0x1]
        %v1758 = vlaneseq
        %v1759 = vshrl.u32 %v1758, 7
        %v1760 = vsub.s32 0, %v1759
        %v1761 = vrot.slane %v1756, %v1760
        %v1764 = vsel %vm309, %v1751, 0
        %1766 = vmatprep.subr.mxu0 0.0
        %1767 = vmatpush1.msra.mxu0 0.0
        %1768 = vmatprep.subr.mxu0 0.0
        %1769 = vmatpush1.msra.mxu0 0.0
        %1770 = vmatprep.subr.mxu0 0.0
        %1771 = vmatpush1.msra.mxu0 0.0
        %1772 = vmatprep.subr.mxu0 0.0
        %1773 = vmatpush1.msra.mxu0 0.0
        %1774 = vmatprep.subr.mxu0 0.0
        %1775 = vmatpush1.msra.mxu0 0.0
        %1776 = vmatprep.subr.mxu0 0.0
        %1777 = vmatpush1.msra.mxu0 0.0
        %1778 = vmatprep.subr.mxu0 0.0
        %1779 = vmatpush1.msra.mxu0 0.0
        %1780 = vmatprep.subr.mxu0 0.0
        %1781 = vmatpush1.msra.mxu0 0.0
        %1782 = vmatprep.subr.mxu0 0.0
        %1783 = vmatpush1.msra.mxu0 0.0
        %1784 = vmatprep.subr.mxu0 0.0
        %1785 = vmatpush1.msra.mxu0 0.0
        %1786 = vmatprep.subr.mxu0 0.0
        %1787 = vmatpush1.msra.mxu0 0.0
        %1788 = vmatprep.subr.mxu0 0.0
        %1789 = vmatpush1.msra.mxu0 0.0
        %1790 = vmatprep.subr.mxu0 0.0
        %1791 = vmatpush1.msra.mxu0 %v1755
        %1792 = vmatprep.subr.mxu0 0.0
        %1793 = vmatpush1.msra.mxu0 %v1754
        %1794 = vmatprep.subr.mxu0 0.0
        %1795 = vmatpush1.msra.mxu0 %v1753
        %1796 = vmatprep.subr.mxu0 0.0
        %1797 = vmatpush1.msra.mxu0 %v1752
        %1798 = vmatprep.subr.mxu0 0.0
        %1799 = vmatpush2.msra.mxu0 0.0
        %1800 = vmatprep.subr.mxu0 0.0
        %1801 = vmatpush2.msra.mxu0 0.0
        %1802 = vmatprep.subr.mxu0 0.0
        %1803 = vmatpush2.msra.mxu0 0.0
        %1804 = vmatprep.subr.mxu0 0.0
        %1805 = vmatpush2.msra.mxu0 0.0
        %1806 = vmatprep.subr.mxu0 0.0
        %1807 = vmatpush2.msra.mxu0 0.0
        %1808 = vmatprep.subr.mxu0 0.0
        %1809 = vmatpush2.msra.mxu0 0.0
        %1810 = vmatprep.subr.mxu0 0.0
        %1811 = vmatpush2.msra.mxu0 0.0
        %1812 = vmatprep.subr.mxu0 0.0
        %1813 = vmatpush2.msra.mxu0 0.0
        %1814 = vmatprep.subr.mxu0 0.0
        %1815 = vmatpush2.msra.mxu0 0.0
        %1816 = vmatprep.subr.mxu0 0.0
        %1817 = vmatpush2.msra.mxu0 0.0
        %1818 = vmatprep.subr.mxu0 0.0
        %1819 = vmatpush2.msra.mxu0 0.0
        %1820 = vmatprep.subr.mxu0 0.0
        %1821 = vmatpush2.msra.mxu0 0.0
        %1822 = vmatprep.subr.mxu0 0.0
        %1823 = vmatpush2.msra.mxu0 0.0
        %1824 = vmatprep.subr.mxu0 0.0
        %1825 = vmatpush2.msra.mxu0 0.0
        %1826 = vmatprep.subr.mxu0 0.0
        %1827 = vmatpush2.msra.mxu0 0.0
        %1828 = vmatprep.subr.mxu0 0.0
        %1829 = vmatpush2.msra.mxu0 0.0
        %1830 = vmatprep.mubr.f32.mxu0 0.0
        %1831 = vmatmul.mubr.f32.gmra.mxu0 %v1764
        %v1832 = vpop.f32.mrf.mxu0
        %v1833 = vadd.f32 %v1761, %v1832
        %v1834 = vpop.f32.mrf.mxu0
        %1835 = vdwg.mxu0
        %v1836 = vmax.f32 %v1833, 0.0
        %v1837 = vld [vmem:[%s6] sm:$0xff]
        %v1838 = vld [vmem:[%s6 + $0x8] sm:$0xff]
        %v1839 = vld [vmem:[%s6 + $0x10] sm:$0xff]
        %v1840 = vld [vmem:[%s6 + $0x18] sm:$0xff]
        %v1841 = vld [vmem:[%s6 + $0x20] sm:$0xff]
        %v1842 = vld [vmem:[%s6 + $0x28] sm:$0xff]
        %v1843 = vld [vmem:[%s6 + $0x30] sm:$0xff]
        %v1844 = vld [vmem:[%s6 + $0x38] sm:$0xff]
        %v1845 = vlaneseq
        %v1846 = vshrl.u32 %v1845, 7
        %v1847 = vsub.s32 5, %v1846
        %v1848 = vrot.slane %v308, %v1847
        %vm1849 = vcmask 523264
        %v1851 = vsel %vm1849, %v1836, 0
        %1853 = vmatprep.subr.mxu0 0.0
        %1854 = vmatpush1.msra.mxu0 0.0
        %1855 = vmatprep.subr.mxu0 0.0
        %1856 = vmatpush1.msra.mxu0 0.0
        %1857 = vmatprep.subr.mxu0 0.0
        %1858 = vmatpush1.msra.mxu0 0.0
        %1859 = vmatprep.subr.mxu0 0.0
        %1860 = vmatpush1.msra.mxu0 0.0
        %1861 = vmatprep.subr.mxu0 0.0
        %1862 = vmatpush1.msra.mxu0 0.0
        %1863 = vmatprep.subr.mxu0 0.0
        %1864 = vmatpush1.msra.mxu0 0.0
        %1865 = vmatprep.subr.mxu0 0.0
        %1866 = vmatpush1.msra.mxu0 0.0
        %1867 = vmatprep.subr.mxu0 0.0
        %1868 = vmatpush1.msra.mxu0 0.0
        %1869 = vmatprep.subr.mxu0 0.0
        %1870 = vmatpush1.msra.mxu0 %v1844
        %1871 = vmatprep.subr.mxu0 0.0
        %1872 = vmatpush1.msra.mxu0 %v1843
        %1873 = vmatprep.subr.mxu0 0.0
        %1874 = vmatpush1.msra.mxu0 %v1842
        %1875 = vmatprep.subr.mxu0 0.0
        %1876 = vmatpush1.msra.mxu0 %v1841
        %1877 = vmatprep.subr.mxu0 0.0
        %1878 = vmatpush1.msra.mxu0 %v1840
        %1879 = vmatprep.subr.mxu0 0.0
        %1880 = vmatpush1.msra.mxu0 %v1839
        %1881 = vmatprep.subr.mxu0 0.0
        %1882 = vmatpush1.msra.mxu0 %v1838
        %1883 = vmatprep.subr.mxu0 0.0
        %1884 = vmatpush1.msra.mxu0 %v1837
        %1885 = vmatprep.subr.mxu0 0.0
        %1886 = vmatpush2.msra.mxu0 0.0
        %1887 = vmatprep.subr.mxu0 0.0
        %1888 = vmatpush2.msra.mxu0 0.0
        %1889 = vmatprep.subr.mxu0 0.0
        %1890 = vmatpush2.msra.mxu0 0.0
        %1891 = vmatprep.subr.mxu0 0.0
        %1892 = vmatpush2.msra.mxu0 0.0
        %1893 = vmatprep.subr.mxu0 0.0
        %1894 = vmatpush2.msra.mxu0 0.0
        %1895 = vmatprep.subr.mxu0 0.0
        %1896 = vmatpush2.msra.mxu0 0.0
        %1897 = vmatprep.subr.mxu0 0.0
        %1898 = vmatpush2.msra.mxu0 0.0
        %1899 = vmatprep.subr.mxu0 0.0
        %1900 = vmatpush2.msra.mxu0 0.0
        %1901 = vmatprep.subr.mxu0 0.0
        %1902 = vmatpush2.msra.mxu0 0.0
        %1903 = vmatprep.subr.mxu0 0.0
        %1904 = vmatpush2.msra.mxu0 0.0
        %1905 = vmatprep.subr.mxu0 0.0
        %1906 = vmatpush2.msra.mxu0 0.0
        %1907 = vmatprep.subr.mxu0 0.0
        %1908 = vmatpush2.msra.mxu0 0.0
        %1909 = vmatprep.subr.mxu0 0.0
        %1910 = vmatpush2.msra.mxu0 0.0
        %1911 = vmatprep.subr.mxu0 0.0
        %1912 = vmatpush2.msra.mxu0 0.0
        %1913 = vmatprep.subr.mxu0 0.0
        %1914 = vmatpush2.msra.mxu0 0.0
        %1915 = vmatprep.subr.mxu0 0.0
        %1916 = vmatpush2.msra.mxu0 0.0
        %1917 = vmatprep.mubr.f32.mxu0 0.0
        %1918 = vmatmul.mubr.f32.gmra.mxu0 %v1851
        %v1919 = vpop.f32.mrf.mxu0
        %v1920 = vadd.f32 %v1848, %v1919
        %v1921 = vpop.f32.mrf.mxu0
        %1922 = vdwg.mxu0
        %v1923 = vadd.f32 %v1728, %v1920
        %1924 = vst.msk [vmem:[%s306] sm:$0xff] %vm309, %v1923
        %s1925 = sand.u32 %s185, 1
        %s1926 = scalar_lea.sflag [#allocation4], %s1925
        %s1927 = sand.u32 %s185, 1
        %s1928 = smul.addr %s1927, 8
        %s1929 = scalar_lea.vmem [#allocation7], %s1928
        // Predicated region
        $region57: #{tpu_custom_call.1} parent=47 // pred_check
          %p1930 = pneg %p195
        $region58: #{tpu_custom_call.1} parent=47 // pred_check_branch
          %1932 = sbr.rel (%p1930) target = $region60
        $region59: #{tpu_custom_call.1} parent=47 // pred_region
          %s1934 = ssub.s32 128, 128
          %1935 = vsyncadd %s1926, %s1934
          %s1936 = smul.addr %s25, 128
          %s1937 = scalar_lea.hbm %s7, %s1936
          %s1939 = sshll.u32 %s1929, 4
          %s1940 = int_to_ptr.vmem [resolvable:$true] %s1939
          %1942 = dma.vmem_to_hbm [thread:$0]  %s1940, 128, %s1937, %s1926
        $region60: #{tpu_custom_call.1} parent=47 // pred_fallthru
          _
      $region48: #{tpu_custom_call.1} parent=5 // pred_fallthru
        _
      %p1943 = scmp.le.s32.totalorder 2, %s20
      // Predicated region
      $region61: #{tpu_custom_call.1} parent=5 // pred_check
        %p1944 = pneg %p1943
      $region62: #{tpu_custom_call.1} parent=5 // pred_check_branch
        %1946 = sbr.rel (%p1944) target = $region64
      $region63: #{tpu_custom_call.1} parent=5 // pred_region
        %s1947 = ssub.s32 %s20, 2
        // Predicated region
        $region65: #{tpu_custom_call.1} parent=63 // pred_check
          %p1948 = pneg %p201
        $region66: #{tpu_custom_call.1} parent=63 // pred_check_branch
          %1950 = sbr.rel (%p1948) target = $region68
        $region67: #{tpu_custom_call.1} parent=63 // pred_region
          %s1951 = sand.u32 %s186, 1
          %s1952 = scalar_lea.sflag [#allocation4], %s1951
          %s1953 = sand.u32 %s186, 1
          %s1954 = smul.addr %s1953, 8
          %s1955 = scalar_lea.vmem [#allocation7], %s1954
          %1956 = dma.done %s1952, 128
        $region68: #{tpu_custom_call.1} parent=63 // pred_fallthru
          _
      $region64: #{tpu_custom_call.1} parent=5 // pred_fallthru
        _
    $region6: #{tpu_custom_call.1} parent=1 // loop_footer
      %s24 = sadd.s32 1, %s20
    $region7: #{tpu_custom_call.1} parent=1 // loop_footer_branch
      %19 = sbr.rel target = $region3
    $region8: #{tpu_custom_call.1} parent=1 // loop_exit
      _
    %1957 = vsyncpa [#allocation3], 1
    %s1958 = scalar_lea.sflag [#allocation3], 1
    %1959 = vsyncpa %s1958, 1
    %1960 = vsyncpa [#allocation6], 1
    %1961 = vsyncpa [#allocation4], 1
    %s1962 = scalar_lea.sflag [#allocation4], 1
    %1963 = vsyncpa %s1962, 1

</llo_original>
